<compile_context>
chip_gen: v6e
topology: v6e:2x2x1
jax: 0.10.0
libtpu: 0.0.40
codegen_flags: <defaults>
</compile_context>

<pallas_src>
import math

import jax
import jax.numpy as jnp
import numpy as np
from jax.experimental import pallas as pl
from jax.experimental.pallas import tpu as pltpu

# ---------------- TRANSLATE config (small, deterministic) --------------------
ORIG_D_L = 24            # hyp_params.orig_d_l
ORIG_D_A = 16            # hyp_params.orig_d_a
L_LEN = 8                # hyp_params.l_len
A_LEN = 8                # hyp_params.a_len
EMBED_DIM = 32           # hyp_params.embed_dim
NUM_HEADS = 4            # hyp_params.num_heads
HEAD_DIM = EMBED_DIM // NUM_HEADS
FFN_DIM = 4 * EMBED_DIM
TRANS_LAYERS = 2         # hyp_params.trans_layers
TOTAL_LEN = L_LEN + A_LEN
LN_EPS = 1e-5
EMBED_SCALE = math.sqrt(EMBED_DIM)
NEG_INF = -1e9


# ---------------- math helpers (usable inside kernels) -----------------------
def _layer_norm(x, g, b):
    mu = jnp.mean(x, axis=-1, keepdims=True)
    var = jnp.mean((x - mu) ** 2, axis=-1, keepdims=True)
    return (x - mu) * jax.lax.rsqrt(var + LN_EPS) * g + b


def _build_mask():
    # Known (L) block fully visible to everyone; missing (A) block is causal.
    idx = jnp.arange(TOTAL_LEN)
    allowed = (idx[None, :] < L_LEN) | (idx[None, :] <= idx[:, None])
    return jnp.where(allowed, 0.0, NEG_INF).astype(jnp.float32)


# ---------------- fused Pallas kernel (whole forward, one batch elem) ---------
def _translate_kernel(src_ref, tgt_ref,
                      wpl_ref, bpl_ref, wpa_ref, bpa_ref,
                      multi_ref, emb_ref, mask_ref,
                      wqkv_ref, bqkv_ref, wo_ref, bo_ref,
                      ln1g_ref, ln1b_ref,
                      w1_ref, b1_ref, w2_ref, b2_ref,
                      ln2g_ref, ln2b_ref,
                      lnfg_ref, lnfb_ref,
                      wout_ref, bout_ref,
                      out_ref):
    E = EMBED_DIM
    dH = HEAD_DIM

    # ---- modality input projections + ReLU (dropout is an inference no-op) --
    x_l = jnp.maximum(
        jnp.dot(src_ref[0], wpl_ref[...], preferred_element_type=jnp.float32)
        + bpl_ref[...], 0.0)                                        # (L_LEN, E)
    h_a = jnp.maximum(
        jnp.dot(tgt_ref[0], wpa_ref[...], preferred_element_type=jnp.float32)
        + bpa_ref[...], 0.0)                                        # (A_LEN, E)

    # ---- teacher-forcing shift of the missing modality: [multi ; h_a[:-1]] --
    shifted = pltpu.roll(h_a, shift=1, axis=0)                      # row i <- h_a[i-1]
    row = jax.lax.broadcasted_iota(jnp.int32, (A_LEN, E), 0)
    x_a = jnp.where(row == 0, multi_ref[...], shifted)              # (A_LEN, E)

    # ---- concat modalities, add (pos + modal-type) embeddings, embed scale --
    x = jnp.concatenate([x_l, x_a], axis=0) + emb_ref[...]          # (T, E)
    x = x * EMBED_SCALE
    mask_add = mask_ref[...]                                        # (T, T)

    # ---- transformer encoder layers (pre-LN), hidden state stays on-chip ----
    for l in range(TRANS_LAYERS):
        # self-attention block
        res = x
        xn = _layer_norm(x, ln1g_ref[l], ln1b_ref[l])
        qkv = (jnp.dot(xn, wqkv_ref[l], preferred_element_type=jnp.float32)
               + bqkv_ref[l])                                       # (T, 3E), Q pre-scaled
        wo_l = wo_ref[l]
        attn = jnp.zeros((TOTAL_LEN, E), jnp.float32)
        for h in range(NUM_HEADS):
            qh = qkv[:, h * dH:(h + 1) * dH]
            kh = qkv[:, E + h * dH:E + (h + 1) * dH]
            vh = qkv[:, 2 * E + h * dH:2 * E + (h + 1) * dH]
            s = jax.lax.dot_general(qh, kh, (((1,), (1,)), ((), ())),
                                    preferred_element_type=jnp.float32)  # (T, T)
            s = s + mask_add
            m = jnp.max(s, axis=-1, keepdims=True)
            p = jnp.exp(s - m)
            p = p * pl.reciprocal(jnp.sum(p, axis=-1, keepdims=True), approx=True)
            ctx = jnp.dot(p, vh, preferred_element_type=jnp.float32)     # (T, dH)
            # head-block of the output projection (== concat(ctx_h) @ Wo)
            attn = attn + jnp.dot(ctx, wo_l[h * dH:(h + 1) * dH, :],
                                  preferred_element_type=jnp.float32)
        x = res + attn + bo_ref[l]

        # position-wise FFN block
        res = x
        xn = _layer_norm(x, ln2g_ref[l], ln2b_ref[l])
        hf = jnp.maximum(
            jnp.dot(xn, w1_ref[l], preferred_element_type=jnp.float32) + b1_ref[l], 0.0)
        hf = jnp.dot(hf, w2_ref[l], preferred_element_type=jnp.float32) + b2_ref[l]
        x = res + hf

    x = _layer_norm(x, lnfg_ref[...], lnfb_ref[...])

    # ---- take the translated (missing) block and project to target features -
    y = x[L_LEN:, :]                                                # (A_LEN, E)
    out_ref[0] = (jnp.dot(y, wout_ref[...], preferred_element_type=jnp.float32)
                  + bout_ref[...])


# ---------------- pallas_call wrapper -----------------------------------------
def _rep(shape):
    n = len(shape)
    return pl.BlockSpec(shape, lambda b, n=n: (0,) * n)


def _pack_kernel_params(params):
    """Stack per-layer weights, fold the 1/sqrt(dH) score scale into Q, and
    pre-combine position + modal-type embeddings into one (T, E) table."""
    qscale = 1.0 / math.sqrt(HEAD_DIM)
    layers = params["layers"]
    stack = lambda name: jnp.stack([lp[name] for lp in layers], axis=0)
    wqkv = jnp.stack(
        [jnp.concatenate([lp["wq"] * qscale, lp["wk"], lp["wv"]], axis=1)
         for lp in layers], axis=0)                                  # (L, E, 3E)
    bqkv = jnp.stack(
        [jnp.concatenate([lp["bq"] * qscale, lp["bk"], lp["bv"]], axis=1)
         for lp in layers], axis=0)                                  # (L, 1, 3E)
    l_emb = params["pos_emb"][:L_LEN] + params["type_emb"][0]
    a_emb = params["pos_emb"][:A_LEN] + params["type_emb"][1]
    emb = jnp.concatenate([l_emb, a_emb], axis=0)                    # (T, E)
    return {
        "wpl": params["proj_l_w"], "bpl": params["proj_l_b"],
        "wpa": params["proj_a_w"], "bpa": params["proj_a_b"],
        "multi": params["multi"], "emb": emb, "mask": _build_mask(),
        "wqkv": wqkv, "bqkv": bqkv,
        "wo": stack("wo"), "bo": stack("bo"),
        "ln1g": stack("ln1_g"), "ln1b": stack("ln1_b"),
        "w1": stack("w1"), "b1": stack("b1"),
        "w2": stack("w2"), "b2": stack("b2"),
        "ln2g": stack("ln2_g"), "ln2b": stack("ln2_b"),
        "lnfg": params["lnf_g"], "lnfb": params["lnf_b"],
        "wout": params["out_w"], "bout": params["out_b"],
    }


@jax.jit
def translate_forward(src, tgt, params):
    """Mirrors TRANSLATEModel.forward (modalities='L', missing='A', phase='train')."""
    B = src.shape[0]
    kp = _pack_kernel_params(params)
    L, E, I = TRANS_LAYERS, EMBED_DIM, FFN_DIM

    src_spec = pl.BlockSpec((1, L_LEN, ORIG_D_L), lambda b: (b, 0, 0))
    tgt_spec = pl.BlockSpec((1, A_LEN, ORIG_D_A), lambda b: (b, 0, 0))
    out_spec = pl.BlockSpec((1, A_LEN, ORIG_D_A), lambda b: (b, 0, 0))

    in_specs = [
        src_spec, tgt_spec,
        _rep((ORIG_D_L, E)), _rep((1, E)),
        _rep((ORIG_D_A, E)), _rep((1, E)),
        _rep((1, E)),
        _rep((TOTAL_LEN, E)),
        _rep((TOTAL_LEN, TOTAL_LEN)),
        _rep((L, E, 3 * E)), _rep((L, 1, 3 * E)),
        _rep((L, E, E)), _rep((L, 1, E)),
        _rep((L, 1, E)), _rep((L, 1, E)),
        _rep((L, E, I)), _rep((L, 1, I)),
        _rep((L, I, E)), _rep((L, 1, E)),
        _rep((L, 1, E)), _rep((L, 1, E)),
        _rep((1, E)), _rep((1, E)),
        _rep((E, ORIG_D_A)), _rep((1, ORIG_D_A)),
    ]

    return pl.pallas_call(
        _translate_kernel,
        out_shape=jax.ShapeDtypeStruct((B, A_LEN, ORIG_D_A), jnp.float32),
        grid=(B,),
        in_specs=in_specs,
        out_specs=out_spec,
        compiler_params=pltpu.CompilerParams(dimension_semantics=("parallel",)),
    )(src, tgt,
      kp["wpl"], kp["bpl"], kp["wpa"], kp["bpa"],
      kp["multi"], kp["emb"], kp["mask"],
      kp["wqkv"], kp["bqkv"], kp["wo"], kp["bo"],
      kp["ln1g"], kp["ln1b"],
      kp["w1"], kp["b1"], kp["w2"], kp["b2"],
      kp["ln2g"], kp["ln2b"],
      kp["lnfg"], kp["lnfb"],
      kp["wout"], kp["bout"])


# ---------------- deterministic parameter init --------------------------------
def init_params(key):
    ks = jax.random.split(key, 9 + TRANS_LAYERS)

    def nrm(k, shape, scale=0.05):
        return jax.random.normal(k, shape, jnp.float32) * scale

    params = {
        "proj_l_w": nrm(ks[0], (ORIG_D_L, EMBED_DIM)),
        "proj_l_b": nrm(ks[1], (1, EMBED_DIM)),
        "proj_a_w": nrm(ks[2], (ORIG_D_A, EMBED_DIM)),
        "proj_a_b": nrm(ks[3], (1, EMBED_DIM)),
        "multi": nrm(ks[4], (1, EMBED_DIM), 0.1),
        "pos_emb": nrm(ks[5], (max(L_LEN, A_LEN), EMBED_DIM)),
        "type_emb": nrm(ks[6], (4, EMBED_DIM)),
        "out_w": nrm(ks[7], (EMBED_DIM, ORIG_D_A)),
        "out_b": nrm(ks[8], (1, ORIG_D_A)),
        "lnf_g": jnp.ones((1, EMBED_DIM), jnp.float32),
        "lnf_b": jnp.zeros((1, EMBED_DIM), jnp.float32),
        "layers": [],
    }
    for l in range(TRANS_LAYERS):
        lk = jax.random.split(ks[9 + l], 12)
        lp = {
            "wq": nrm(lk[0], (EMBED_DIM, EMBED_DIM)),
            "bq": nrm(lk[1], (1, EMBED_DIM)),
            "wk": nrm(lk[2], (EMBED_DIM, EMBED_DIM)),
            "bk": nrm(lk[3], (1, EMBED_DIM)),
            "wv": nrm(lk[4], (EMBED_DIM, EMBED_DIM)),
            "bv": nrm(lk[5], (1, EMBED_DIM)),
            "wo": nrm(lk[6], (EMBED_DIM, EMBED_DIM)),
            "bo": nrm(lk[7], (1, EMBED_DIM)),
            "ln1_g": jnp.ones((1, EMBED_DIM), jnp.float32),
            "ln1_b": jnp.zeros((1, EMBED_DIM), jnp.float32),
            "w1": nrm(lk[8], (EMBED_DIM, FFN_DIM)),
            "b1": nrm(lk[9], (1, FFN_DIM)),
            "w2": nrm(lk[10], (FFN_DIM, EMBED_DIM)),
            "b2": nrm(lk[11], (1, EMBED_DIM)),
            "ln2_g": jnp.ones((1, EMBED_DIM), jnp.float32),
            "ln2_b": jnp.zeros((1, EMBED_DIM), jnp.float32),
        }
        params["layers"].append(lp)
    return params


# ---------------- pure-JAX reference (same math, for correctness) -------------
def reference_forward(src, tgt, params):
    B = src.shape[0]
    x_l = jax.nn.relu(src @ params["proj_l_w"] + params["proj_l_b"])
    h_a = jax.nn.relu(tgt @ params["proj_a_w"] + params["proj_a_b"])
    multi = jnp.broadcast_to(params["multi"][None, :, :], (B, 1, EMBED_DIM))
    x_a = jnp.concatenate([multi, h_a[:, :A_LEN - 1]], axis=1)
    l_emb = params["pos_emb"][:L_LEN] + params["type_emb"][0]
    a_emb = params["pos_emb"][:A_LEN] + params["type_emb"][1]
    x = jnp.concatenate([x_l + l_emb[None], x_a + a_emb[None]], axis=1)  # (B,T,E)
    x = x * EMBED_SCALE
    mask = _build_mask()
    for lp in params["layers"]:
        res = x
        xn = _layer_norm(x, lp["ln1_g"], lp["ln1_b"])
        q = xn @ lp["wq"] + lp["bq"]
        k = xn @ lp["wk"] + lp["bk"]
        v = xn @ lp["wv"] + lp["bv"]

        def heads(t):
            return t.reshape(B, TOTAL_LEN, NUM_HEADS, HEAD_DIM).transpose(0, 2, 1, 3)

        qh, kh, vh = heads(q), heads(k), heads(v)
        s = jnp.einsum("bhqd,bhkd->bhqk", qh, kh) / math.sqrt(HEAD_DIM)
        s = s + mask[None, None]
        p = jax.nn.softmax(s, axis=-1)
        ctx = jnp.einsum("bhqk,bhkd->bhqd", p, vh)
        ctx = ctx.transpose(0, 2, 1, 3).reshape(B, TOTAL_LEN, EMBED_DIM)
        x = res + ctx @ lp["wo"] + lp["bo"]

        res = x
        xn = _layer_norm(x, lp["ln2_g"], lp["ln2_b"])
        hf = jax.nn.relu(xn @ lp["w1"] + lp["b1"])
        hf = hf @ lp["w2"] + lp["b2"]
        x = res + hf
    x = _layer_norm(x, params["lnf_g"], params["lnf_b"])
    y = x[:, L_LEN:]
    return y @ params["out_w"] + params["out_b"]


# ---------------- main ---------------------------------------------------------
if __name__ == "__main__":
    B = 2
    key = jax.random.PRNGKey(0)
    k_src, k_tgt, k_par = jax.random.split(key, 3)

    src = jax.random.normal(k_src, (B, L_LEN, ORIG_D_L), jnp.float32)
    tgt = jax.random.normal(k_tgt, (B, A_LEN, ORIG_D_A), jnp.float32)
    params = init_params(k_par)

    out = jax.block_until_ready(translate_forward(src, tgt, params))
    ref = jax.block_until_ready(reference_forward(src, tgt, params))

    np.testing.assert_allclose(np.asarray(out), np.asarray(ref), rtol=2e-2, atol=2e-3)
    assert out.shape == (B, A_LEN, ORIG_D_A)

    print("KERNEL_OK")
</pallas_src>

<mosaic_0001>
module attributes {stable_mosaic.version = 11 : i64} {
  func.func @_translate_kernel(%arg0: i32, %arg1: memref<1x8x24xf32, #tpu.memory_space<vmem>>, %arg2: memref<1x8x16xf32, #tpu.memory_space<vmem>>, %arg3: memref<24x32xf32, #tpu.memory_space<vmem>>, %arg4: memref<1x32xf32, #tpu.memory_space<vmem>>, %arg5: memref<16x32xf32, #tpu.memory_space<vmem>>, %arg6: memref<1x32xf32, #tpu.memory_space<vmem>>, %arg7: memref<1x32xf32, #tpu.memory_space<vmem>>, %arg8: memref<16x32xf32, #tpu.memory_space<vmem>>, %arg9: memref<16x16xf32, #tpu.memory_space<vmem>>, %arg10: memref<2x32x96xf32, #tpu.memory_space<vmem>>, %arg11: memref<2x1x96xf32, #tpu.memory_space<vmem>>, %arg12: memref<2x32x32xf32, #tpu.memory_space<vmem>>, %arg13: memref<2x1x32xf32, #tpu.memory_space<vmem>>, %arg14: memref<2x1x32xf32, #tpu.memory_space<vmem>>, %arg15: memref<2x1x32xf32, #tpu.memory_space<vmem>>, %arg16: memref<2x32x128xf32, #tpu.memory_space<vmem>>, %arg17: memref<2x1x128xf32, #tpu.memory_space<vmem>>, %arg18: memref<2x128x32xf32, #tpu.memory_space<vmem>>, %arg19: memref<2x1x32xf32, #tpu.memory_space<vmem>>, %arg20: memref<2x1x32xf32, #tpu.memory_space<vmem>>, %arg21: memref<2x1x32xf32, #tpu.memory_space<vmem>>, %arg22: memref<1x32xf32, #tpu.memory_space<vmem>>, %arg23: memref<1x32xf32, #tpu.memory_space<vmem>>, %arg24: memref<32x16xf32, #tpu.memory_space<vmem>>, %arg25: memref<1x16xf32, #tpu.memory_space<vmem>>, %arg26: memref<1x8x16xf32, #tpu.memory_space<vmem>>) attributes {dimension_semantics = [#tpu.dimension_semantics<parallel>], iteration_bounds = array<i64: 2>, scalar_prefetch = 0 : i64, scratch_operands = 0 : i64, tpu.core_type = #tpu.core_type<tc>, window_params = [{transform_indices = @transform_0, window_bounds = array<i64: 1, 8, 24>}, {transform_indices = @transform_1, window_bounds = array<i64: 1, 8, 16>}, {pipeline_mode = #tpu.pipeline_mode<synchronous>, transform_indices = @transform_2, window_bounds = array<i64: 24, 32>}, {pipeline_mode = #tpu.pipeline_mode<synchronous>, transform_indices = @transform_3, window_bounds = array<i64: 1, 32>}, {pipeline_mode = #tpu.pipeline_mode<synchronous>, transform_indices = @transform_4, window_bounds = array<i64: 16, 32>}, {pipeline_mode = #tpu.pipeline_mode<synchronous>, transform_indices = @transform_5, window_bounds = array<i64: 1, 32>}, {pipeline_mode = #tpu.pipeline_mode<synchronous>, transform_indices = @transform_6, window_bounds = array<i64: 1, 32>}, {pipeline_mode = #tpu.pipeline_mode<synchronous>, transform_indices = @transform_7, window_bounds = array<i64: 16, 32>}, {pipeline_mode = #tpu.pipeline_mode<synchronous>, transform_indices = @transform_8, window_bounds = array<i64: 16, 16>}, {pipeline_mode = #tpu.pipeline_mode<synchronous>, transform_indices = @transform_9, window_bounds = array<i64: 2, 32, 96>}, {pipeline_mode = #tpu.pipeline_mode<synchronous>, transform_indices = @transform_10, window_bounds = array<i64: 2, 1, 96>}, {pipeline_mode = #tpu.pipeline_mode<synchronous>, transform_indices = @transform_11, window_bounds = array<i64: 2, 32, 32>}, {pipeline_mode = #tpu.pipeline_mode<synchronous>, transform_indices = @transform_12, window_bounds = array<i64: 2, 1, 32>}, {pipeline_mode = #tpu.pipeline_mode<synchronous>, transform_indices = @transform_13, window_bounds = array<i64: 2, 1, 32>}, {pipeline_mode = #tpu.pipeline_mode<synchronous>, transform_indices = @transform_14, window_bounds = array<i64: 2, 1, 32>}, {pipeline_mode = #tpu.pipeline_mode<synchronous>, transform_indices = @transform_15, window_bounds = array<i64: 2, 32, 128>}, {pipeline_mode = #tpu.pipeline_mode<synchronous>, transform_indices = @transform_16, window_bounds = array<i64: 2, 1, 128>}, {pipeline_mode = #tpu.pipeline_mode<synchronous>, transform_indices = @transform_17, window_bounds = array<i64: 2, 128, 32>}, {pipeline_mode = #tpu.pipeline_mode<synchronous>, transform_indices = @transform_18, window_bounds = array<i64: 2, 1, 32>}, {pipeline_mode = #tpu.pipeline_mode<synchronous>, transform_indices = @transform_19, window_bounds = array<i64: 2, 1, 32>}, {pipeline_mode = #tpu.pipeline_mode<synchronous>, transform_indices = @transform_20, window_bounds = array<i64: 2, 1, 32>}, {pipeline_mode = #tpu.pipeline_mode<synchronous>, transform_indices = @transform_21, window_bounds = array<i64: 1, 32>}, {pipeline_mode = #tpu.pipeline_mode<synchronous>, transform_indices = @transform_22, window_bounds = array<i64: 1, 32>}, {pipeline_mode = #tpu.pipeline_mode<synchronous>, transform_indices = @transform_23, window_bounds = array<i64: 32, 16>}, {pipeline_mode = #tpu.pipeline_mode<synchronous>, transform_indices = @transform_24, window_bounds = array<i64: 1, 16>}, {transform_indices = @transform_25, window_bounds = array<i64: 1, 8, 16>}]} {
    %c0 = arith.constant 0 : index
    %c0_0 = arith.constant 0 : index
    %c0_1 = arith.constant 0 : index
    %0 = vector.load %arg1[%c0, %c0_0, %c0_1] : memref<1x8x24xf32, #tpu.memory_space<vmem>>, vector<1x8x24xf32>
    %1 = vector.shape_cast %0 : vector<1x8x24xf32> to vector<8x24xf32>
    %c0_2 = arith.constant 0 : index
    %c0_3 = arith.constant 0 : index
    %2 = vector.load %arg3[%c0_2, %c0_3] : memref<24x32xf32, #tpu.memory_space<vmem>>, vector<24x32xf32>
    %cst = arith.constant dense<0.000000e+00> : vector<8x32xf32>
    %3 = tpu.matmul %1, %2, %cst {dimension_numbers = #tpu.dot_dimension_numbers<[1], [0], [0], [1], [0, 0, 1, 1], [], []>} : vector<8x24xf32>, vector<24x32xf32>, vector<8x32xf32> -> vector<8x32xf32>
    %c0_4 = arith.constant 0 : index
    %c0_5 = arith.constant 0 : index
    %4 = vector.load %arg4[%c0_4, %c0_5] : memref<1x32xf32, #tpu.memory_space<vmem>>, vector<1x32xf32>
    %5 = vector.broadcast %4 : vector<1x32xf32> to vector<8x32xf32>
    %6 = arith.addf %3, %5 : vector<8x32xf32>
    %cst_6 = arith.constant 0.000000e+00 : f32
    %7 = vector.broadcast %cst_6 : f32 to vector<8x32xf32>
    %8 = arith.maximumf %6, %7 : vector<8x32xf32>
    %c0_7 = arith.constant 0 : index
    %c0_8 = arith.constant 0 : index
    %c0_9 = arith.constant 0 : index
    %9 = vector.load %arg2[%c0_7, %c0_8, %c0_9] : memref<1x8x16xf32, #tpu.memory_space<vmem>>, vector<1x8x16xf32>
    %10 = vector.shape_cast %9 : vector<1x8x16xf32> to vector<8x16xf32>
    %c0_10 = arith.constant 0 : index
    %c0_11 = arith.constant 0 : index
    %11 = vector.load %arg5[%c0_10, %c0_11] : memref<16x32xf32, #tpu.memory_space<vmem>>, vector<16x32xf32>
    %cst_12 = arith.constant dense<0.000000e+00> : vector<8x32xf32>
    %12 = tpu.matmul %10, %11, %cst_12 {dimension_numbers = #tpu.dot_dimension_numbers<[1], [0], [0], [1], [0, 0, 1, 1], [], []>} : vector<8x16xf32>, vector<16x32xf32>, vector<8x32xf32> -> vector<8x32xf32>
    %c0_13 = arith.constant 0 : index
    %c0_14 = arith.constant 0 : index
    %13 = vector.load %arg6[%c0_13, %c0_14] : memref<1x32xf32, #tpu.memory_space<vmem>>, vector<1x32xf32>
    %14 = vector.broadcast %13 : vector<1x32xf32> to vector<8x32xf32>
    %15 = arith.addf %12, %14 : vector<8x32xf32>
    %cst_15 = arith.constant 0.000000e+00 : f32
    %16 = vector.broadcast %cst_15 : f32 to vector<8x32xf32>
    %17 = arith.maximumf %15, %16 : vector<8x32xf32>
    %c1_i32 = arith.constant 1 : i32
    %18 = tpu.dynamic_rotate %17 by %c1_i32 dim 0 : vector<8x32xf32>, i32 -> vector<8x32xf32>
    %19 = tpu.iota {dimensions = array<i32: 0>} : vector<8x32xi32>
    %c0_i32 = arith.constant 0 : i32
    %20 = vector.broadcast %c0_i32 : i32 to vector<8x32xi32>
    %21 = arith.cmpi eq, %19, %20 : vector<8x32xi32>
    %c0_16 = arith.constant 0 : index
    %c0_17 = arith.constant 0 : index
    %22 = vector.load %arg7[%c0_16, %c0_17] : memref<1x32xf32, #tpu.memory_space<vmem>>, vector<1x32xf32>
    %23 = vector.shape_cast %22 : vector<1x32xf32> to vector<1x32xf32>
    %24 = vector.broadcast %23 : vector<1x32xf32> to vector<8x32xf32>
    %25 = arith.select %21, %24, %18 : vector<8x32xi1>, vector<8x32xf32>
    %26 = tpu.concatenate %8, %25 in 0 : vector<8x32xf32>, vector<8x32xf32> -> vector<16x32xf32>
    %c0_18 = arith.constant 0 : index
    %c0_19 = arith.constant 0 : index
    %27 = vector.load %arg8[%c0_18, %c0_19] : memref<16x32xf32, #tpu.memory_space<vmem>>, vector<16x32xf32>
    %28 = arith.addf %26, %27 : vector<16x32xf32>
    %cst_20 = arith.constant 5.65685415 : f32
    %29 = vector.broadcast %cst_20 : f32 to vector<16x32xf32>
    %30 = arith.mulf %28, %29 : vector<16x32xf32>
    %c0_21 = arith.constant 0 : index
    %c0_22 = arith.constant 0 : index
    %31 = vector.load %arg9[%c0_21, %c0_22] : memref<16x16xf32, #tpu.memory_space<vmem>>, vector<16x16xf32>
    %c0_23 = arith.constant 0 : index
    %c0_24 = arith.constant 0 : index
    %c0_25 = arith.constant 0 : index
    %32 = vector.load %arg14[%c0_23, %c0_24, %c0_25] : memref<2x1x32xf32, #tpu.memory_space<vmem>>, vector<1x1x32xf32>
    %33 = vector.shape_cast %32 : vector<1x1x32xf32> to vector<1x32xf32>
    %c0_26 = arith.constant 0 : index
    %c0_27 = arith.constant 0 : index
    %c0_28 = arith.constant 0 : index
    %34 = vector.load %arg15[%c0_26, %c0_27, %c0_28] : memref<2x1x32xf32, #tpu.memory_space<vmem>>, vector<1x1x32xf32>
    %35 = vector.shape_cast %34 : vector<1x1x32xf32> to vector<1x32xf32>
    %cst_29 = arith.constant dense<0.000000e+00> : vector<16xf32>
    %36 = vector.multi_reduction <add>, %30, %cst_29 [1] : vector<16x32xf32> to vector<16xf32>
    %37 = vector.shape_cast %36 : vector<16xf32> to vector<16x1xf32>
    %cst_30 = arith.constant 3.200000e+01 : f32
    %38 = vector.broadcast %cst_30 : f32 to vector<16x1xf32>
    %39 = arith.divf %37, %38 : vector<16x1xf32>
    %40 = vector.broadcast %39 : vector<16x1xf32> to vector<16x32xf32>
    %41 = arith.subf %30, %40 : vector<16x32xf32>
    %42 = arith.mulf %41, %41 : vector<16x32xf32>
    %cst_31 = arith.constant dense<0.000000e+00> : vector<16xf32>
    %43 = vector.multi_reduction <add>, %42, %cst_31 [1] : vector<16x32xf32> to vector<16xf32>
    %44 = vector.shape_cast %43 : vector<16xf32> to vector<16x1xf32>
    %cst_32 = arith.constant 3.200000e+01 : f32
    %45 = vector.broadcast %cst_32 : f32 to vector<16x1xf32>
    %46 = arith.divf %44, %45 : vector<16x1xf32>
    %47 = vector.broadcast %39 : vector<16x1xf32> to vector<16x32xf32>
    %48 = arith.subf %30, %47 : vector<16x32xf32>
    %cst_33 = arith.constant 9.99999974E-6 : f32
    %49 = vector.broadcast %cst_33 : f32 to vector<16x1xf32>
    %50 = arith.addf %46, %49 : vector<16x1xf32>
    %51 = math.rsqrt %50 : vector<16x1xf32>
    %52 = vector.broadcast %51 : vector<16x1xf32> to vector<16x32xf32>
    %53 = arith.mulf %48, %52 : vector<16x32xf32>
    %54 = vector.broadcast %33 : vector<1x32xf32> to vector<16x32xf32>
    %55 = arith.mulf %53, %54 : vector<16x32xf32>
    %56 = vector.broadcast %35 : vector<1x32xf32> to vector<16x32xf32>
    %57 = arith.addf %55, %56 : vector<16x32xf32>
    %c0_34 = arith.constant 0 : index
    %c0_35 = arith.constant 0 : index
    %c0_36 = arith.constant 0 : index
    %58 = vector.load %arg10[%c0_34, %c0_35, %c0_36] : memref<2x32x96xf32, #tpu.memory_space<vmem>>, vector<1x32x96xf32>
    %59 = vector.shape_cast %58 : vector<1x32x96xf32> to vector<32x96xf32>
    %cst_37 = arith.constant dense<0.000000e+00> : vector<16x96xf32>
    %60 = tpu.matmul %57, %59, %cst_37 {dimension_numbers = #tpu.dot_dimension_numbers<[1], [0], [0], [1], [0, 0, 1, 1], [], []>} : vector<16x32xf32>, vector<32x96xf32>, vector<16x96xf32> -> vector<16x96xf32>
    %c0_38 = arith.constant 0 : index
    %c0_39 = arith.constant 0 : index
    %c0_40 = arith.constant 0 : index
    %61 = vector.load %arg11[%c0_38, %c0_39, %c0_40] : memref<2x1x96xf32, #tpu.memory_space<vmem>>, vector<1x1x96xf32>
    %62 = vector.shape_cast %61 : vector<1x1x96xf32> to vector<1x96xf32>
    %63 = vector.broadcast %62 : vector<1x96xf32> to vector<16x96xf32>
    %64 = arith.addf %60, %63 : vector<16x96xf32>
    %c0_41 = arith.constant 0 : index
    %c0_42 = arith.constant 0 : index
    %c0_43 = arith.constant 0 : index
    %65 = vector.load %arg12[%c0_41, %c0_42, %c0_43] : memref<2x32x32xf32, #tpu.memory_space<vmem>>, vector<1x32x32xf32>
    %66 = vector.shape_cast %65 : vector<1x32x32xf32> to vector<32x32xf32>
    %cst_44 = arith.constant 0.000000e+00 : f32
    %67 = vector.broadcast %cst_44 : f32 to vector<16x32xf32>
    %68 = vector.extract_strided_slice %64 {offsets = [0, 0], sizes = [16, 8], strides = [1, 1]} : vector<16x96xf32> to vector<16x8xf32>
    %69 = vector.extract_strided_slice %64 {offsets = [0, 32], sizes = [16, 8], strides = [1, 1]} : vector<16x96xf32> to vector<16x8xf32>
    %70 = vector.extract_strided_slice %64 {offsets = [0, 64], sizes = [16, 8], strides = [1, 1]} : vector<16x96xf32> to vector<16x8xf32>
    %cst_45 = arith.constant dense<0.000000e+00> : vector<16x16xf32>
    %71 = tpu.matmul %68, %69, %cst_45 {dimension_numbers = #tpu.dot_dimension_numbers<[1], [1], [0], [0], [0, 0, 1, 0], [], []>} : vector<16x8xf32>, vector<16x8xf32>, vector<16x16xf32> -> vector<16x16xf32>
    %72 = arith.addf %71, %31 : vector<16x16xf32>
    %cst_46 = arith.constant dense<0xFF800000> : vector<16xf32>
    %73 = vector.multi_reduction <maximumf>, %72, %cst_46 [1] : vector<16x16xf32> to vector<16xf32>
    %74 = vector.shape_cast %73 : vector<16xf32> to vector<16x1xf32>
    %75 = vector.broadcast %74 : vector<16x1xf32> to vector<16x16xf32>
    %76 = arith.subf %72, %75 : vector<16x16xf32>
    %77 = math.exp %76 : vector<16x16xf32>
    %cst_47 = arith.constant dense<0.000000e+00> : vector<16xf32>
    %78 = vector.multi_reduction <add>, %77, %cst_47 [1] : vector<16x16xf32> to vector<16xf32>
    %79 = vector.shape_cast %78 : vector<16xf32> to vector<16x1xf32>
    %80 = tpu.reciprocal %79 {approx = true} : vector<16x1xf32> -> vector<16x1xf32>
    %81 = vector.broadcast %80 : vector<16x1xf32> to vector<16x16xf32>
    %82 = arith.mulf %77, %81 : vector<16x16xf32>
    %cst_48 = arith.constant dense<0.000000e+00> : vector<16x8xf32>
    %83 = tpu.matmul %82, %70, %cst_48 {dimension_numbers = #tpu.dot_dimension_numbers<[1], [0], [0], [1], [0, 0, 1, 1], [], []>} : vector<16x16xf32>, vector<16x8xf32>, vector<16x8xf32> -> vector<16x8xf32>
    %84 = vector.extract_strided_slice %66 {offsets = [0, 0], sizes = [8, 32], strides = [1, 1]} : vector<32x32xf32> to vector<8x32xf32>
    %cst_49 = arith.constant dense<0.000000e+00> : vector<16x32xf32>
    %85 = tpu.matmul %83, %84, %cst_49 {dimension_numbers = #tpu.dot_dimension_numbers<[1], [0], [0], [1], [0, 0, 1, 1], [], []>} : vector<16x8xf32>, vector<8x32xf32>, vector<16x32xf32> -> vector<16x32xf32>
    %86 = arith.addf %67, %85 : vector<16x32xf32>
    %87 = vector.extract_strided_slice %64 {offsets = [0, 8], sizes = [16, 8], strides = [1, 1]} : vector<16x96xf32> to vector<16x8xf32>
    %88 = vector.extract_strided_slice %64 {offsets = [0, 40], sizes = [16, 8], strides = [1, 1]} : vector<16x96xf32> to vector<16x8xf32>
    %89 = vector.extract_strided_slice %64 {offsets = [0, 72], sizes = [16, 8], strides = [1, 1]} : vector<16x96xf32> to vector<16x8xf32>
    %cst_50 = arith.constant dense<0.000000e+00> : vector<16x16xf32>
    %90 = tpu.matmul %87, %88, %cst_50 {dimension_numbers = #tpu.dot_dimension_numbers<[1], [1], [0], [0], [0, 0, 1, 0], [], []>} : vector<16x8xf32>, vector<16x8xf32>, vector<16x16xf32> -> vector<16x16xf32>
    %91 = arith.addf %90, %31 : vector<16x16xf32>
    %cst_51 = arith.constant dense<0xFF800000> : vector<16xf32>
    %92 = vector.multi_reduction <maximumf>, %91, %cst_51 [1] : vector<16x16xf32> to vector<16xf32>
    %93 = vector.shape_cast %92 : vector<16xf32> to vector<16x1xf32>
    %94 = vector.broadcast %93 : vector<16x1xf32> to vector<16x16xf32>
    %95 = arith.subf %91, %94 : vector<16x16xf32>
    %96 = math.exp %95 : vector<16x16xf32>
    %cst_52 = arith.constant dense<0.000000e+00> : vector<16xf32>
    %97 = vector.multi_reduction <add>, %96, %cst_52 [1] : vector<16x16xf32> to vector<16xf32>
    %98 = vector.shape_cast %97 : vector<16xf32> to vector<16x1xf32>
    %99 = tpu.reciprocal %98 {approx = true} : vector<16x1xf32> -> vector<16x1xf32>
    %100 = vector.broadcast %99 : vector<16x1xf32> to vector<16x16xf32>
    %101 = arith.mulf %96, %100 : vector<16x16xf32>
    %cst_53 = arith.constant dense<0.000000e+00> : vector<16x8xf32>
    %102 = tpu.matmul %101, %89, %cst_53 {dimension_numbers = #tpu.dot_dimension_numbers<[1], [0], [0], [1], [0, 0, 1, 1], [], []>} : vector<16x16xf32>, vector<16x8xf32>, vector<16x8xf32> -> vector<16x8xf32>
    %103 = vector.extract_strided_slice %66 {offsets = [8, 0], sizes = [8, 32], strides = [1, 1]} : vector<32x32xf32> to vector<8x32xf32>
    %cst_54 = arith.constant dense<0.000000e+00> : vector<16x32xf32>
    %104 = tpu.matmul %102, %103, %cst_54 {dimension_numbers = #tpu.dot_dimension_numbers<[1], [0], [0], [1], [0, 0, 1, 1], [], []>} : vector<16x8xf32>, vector<8x32xf32>, vector<16x32xf32> -> vector<16x32xf32>
    %105 = arith.addf %86, %104 : vector<16x32xf32>
    %106 = vector.extract_strided_slice %64 {offsets = [0, 16], sizes = [16, 8], strides = [1, 1]} : vector<16x96xf32> to vector<16x8xf32>
    %107 = vector.extract_strided_slice %64 {offsets = [0, 48], sizes = [16, 8], strides = [1, 1]} : vector<16x96xf32> to vector<16x8xf32>
    %108 = vector.extract_strided_slice %64 {offsets = [0, 80], sizes = [16, 8], strides = [1, 1]} : vector<16x96xf32> to vector<16x8xf32>
    %cst_55 = arith.constant dense<0.000000e+00> : vector<16x16xf32>
    %109 = tpu.matmul %106, %107, %cst_55 {dimension_numbers = #tpu.dot_dimension_numbers<[1], [1], [0], [0], [0, 0, 1, 0], [], []>} : vector<16x8xf32>, vector<16x8xf32>, vector<16x16xf32> -> vector<16x16xf32>
    %110 = arith.addf %109, %31 : vector<16x16xf32>
    %cst_56 = arith.constant dense<0xFF800000> : vector<16xf32>
    %111 = vector.multi_reduction <maximumf>, %110, %cst_56 [1] : vector<16x16xf32> to vector<16xf32>
    %112 = vector.shape_cast %111 : vector<16xf32> to vector<16x1xf32>
    %113 = vector.broadcast %112 : vector<16x1xf32> to vector<16x16xf32>
    %114 = arith.subf %110, %113 : vector<16x16xf32>
    %115 = math.exp %114 : vector<16x16xf32>
    %cst_57 = arith.constant dense<0.000000e+00> : vector<16xf32>
    %116 = vector.multi_reduction <add>, %115, %cst_57 [1] : vector<16x16xf32> to vector<16xf32>
    %117 = vector.shape_cast %116 : vector<16xf32> to vector<16x1xf32>
    %118 = tpu.reciprocal %117 {approx = true} : vector<16x1xf32> -> vector<16x1xf32>
    %119 = vector.broadcast %118 : vector<16x1xf32> to vector<16x16xf32>
    %120 = arith.mulf %115, %119 : vector<16x16xf32>
    %cst_58 = arith.constant dense<0.000000e+00> : vector<16x8xf32>
    %121 = tpu.matmul %120, %108, %cst_58 {dimension_numbers = #tpu.dot_dimension_numbers<[1], [0], [0], [1], [0, 0, 1, 1], [], []>} : vector<16x16xf32>, vector<16x8xf32>, vector<16x8xf32> -> vector<16x8xf32>
    %122 = vector.extract_strided_slice %66 {offsets = [16, 0], sizes = [8, 32], strides = [1, 1]} : vector<32x32xf32> to vector<8x32xf32>
    %cst_59 = arith.constant dense<0.000000e+00> : vector<16x32xf32>
    %123 = tpu.matmul %121, %122, %cst_59 {dimension_numbers = #tpu.dot_dimension_numbers<[1], [0], [0], [1], [0, 0, 1, 1], [], []>} : vector<16x8xf32>, vector<8x32xf32>, vector<16x32xf32> -> vector<16x32xf32>
    %124 = arith.addf %105, %123 : vector<16x32xf32>
    %125 = vector.extract_strided_slice %64 {offsets = [0, 24], sizes = [16, 8], strides = [1, 1]} : vector<16x96xf32> to vector<16x8xf32>
    %126 = vector.extract_strided_slice %64 {offsets = [0, 56], sizes = [16, 8], strides = [1, 1]} : vector<16x96xf32> to vector<16x8xf32>
    %127 = vector.extract_strided_slice %64 {offsets = [0, 88], sizes = [16, 8], strides = [1, 1]} : vector<16x96xf32> to vector<16x8xf32>
    %cst_60 = arith.constant dense<0.000000e+00> : vector<16x16xf32>
    %128 = tpu.matmul %125, %126, %cst_60 {dimension_numbers = #tpu.dot_dimension_numbers<[1], [1], [0], [0], [0, 0, 1, 0], [], []>} : vector<16x8xf32>, vector<16x8xf32>, vector<16x16xf32> -> vector<16x16xf32>
    %129 = arith.addf %128, %31 : vector<16x16xf32>
    %cst_61 = arith.constant dense<0xFF800000> : vector<16xf32>
    %130 = vector.multi_reduction <maximumf>, %129, %cst_61 [1] : vector<16x16xf32> to vector<16xf32>
    %131 = vector.shape_cast %130 : vector<16xf32> to vector<16x1xf32>
    %132 = vector.broadcast %131 : vector<16x1xf32> to vector<16x16xf32>
    %133 = arith.subf %129, %132 : vector<16x16xf32>
    %134 = math.exp %133 : vector<16x16xf32>
    %cst_62 = arith.constant dense<0.000000e+00> : vector<16xf32>
    %135 = vector.multi_reduction <add>, %134, %cst_62 [1] : vector<16x16xf32> to vector<16xf32>
    %136 = vector.shape_cast %135 : vector<16xf32> to vector<16x1xf32>
    %137 = tpu.reciprocal %136 {approx = true} : vector<16x1xf32> -> vector<16x1xf32>
    %138 = vector.broadcast %137 : vector<16x1xf32> to vector<16x16xf32>
    %139 = arith.mulf %134, %138 : vector<16x16xf32>
    %cst_63 = arith.constant dense<0.000000e+00> : vector<16x8xf32>
    %140 = tpu.matmul %139, %127, %cst_63 {dimension_numbers = #tpu.dot_dimension_numbers<[1], [0], [0], [1], [0, 0, 1, 1], [], []>} : vector<16x16xf32>, vector<16x8xf32>, vector<16x8xf32> -> vector<16x8xf32>
    %141 = vector.extract_strided_slice %66 {offsets = [24, 0], sizes = [8, 32], strides = [1, 1]} : vector<32x32xf32> to vector<8x32xf32>
    %cst_64 = arith.constant dense<0.000000e+00> : vector<16x32xf32>
    %142 = tpu.matmul %140, %141, %cst_64 {dimension_numbers = #tpu.dot_dimension_numbers<[1], [0], [0], [1], [0, 0, 1, 1], [], []>} : vector<16x8xf32>, vector<8x32xf32>, vector<16x32xf32> -> vector<16x32xf32>
    %143 = arith.addf %124, %142 : vector<16x32xf32>
    %144 = arith.addf %30, %143 : vector<16x32xf32>
    %c0_65 = arith.constant 0 : index
    %c0_66 = arith.constant 0 : index
    %c0_67 = arith.constant 0 : index
    %145 = vector.load %arg13[%c0_65, %c0_66, %c0_67] : memref<2x1x32xf32, #tpu.memory_space<vmem>>, vector<1x1x32xf32>
    %146 = vector.shape_cast %145 : vector<1x1x32xf32> to vector<1x32xf32>
    %147 = vector.broadcast %146 : vector<1x32xf32> to vector<16x32xf32>
    %148 = arith.addf %144, %147 : vector<16x32xf32>
    %c0_68 = arith.constant 0 : index
    %c0_69 = arith.constant 0 : index
    %c0_70 = arith.constant 0 : index
    %149 = vector.load %arg20[%c0_68, %c0_69, %c0_70] : memref<2x1x32xf32, #tpu.memory_space<vmem>>, vector<1x1x32xf32>
    %150 = vector.shape_cast %149 : vector<1x1x32xf32> to vector<1x32xf32>
    %c0_71 = arith.constant 0 : index
    %c0_72 = arith.constant 0 : index
    %c0_73 = arith.constant 0 : index
    %151 = vector.load %arg21[%c0_71, %c0_72, %c0_73] : memref<2x1x32xf32, #tpu.memory_space<vmem>>, vector<1x1x32xf32>
    %152 = vector.shape_cast %151 : vector<1x1x32xf32> to vector<1x32xf32>
    %cst_74 = arith.constant dense<0.000000e+00> : vector<16xf32>
    %153 = vector.multi_reduction <add>, %148, %cst_74 [1] : vector<16x32xf32> to vector<16xf32>
    %154 = vector.shape_cast %153 : vector<16xf32> to vector<16x1xf32>
    %cst_75 = arith.constant 3.200000e+01 : f32
    %155 = vector.broadcast %cst_75 : f32 to vector<16x1xf32>
    %156 = arith.divf %154, %155 : vector<16x1xf32>
    %157 = vector.broadcast %156 : vector<16x1xf32> to vector<16x32xf32>
    %158 = arith.subf %148, %157 : vector<16x32xf32>
    %159 = arith.mulf %158, %158 : vector<16x32xf32>
    %cst_76 = arith.constant dense<0.000000e+00> : vector<16xf32>
    %160 = vector.multi_reduction <add>, %159, %cst_76 [1] : vector<16x32xf32> to vector<16xf32>
    %161 = vector.shape_cast %160 : vector<16xf32> to vector<16x1xf32>
    %cst_77 = arith.constant 3.200000e+01 : f32
    %162 = vector.broadcast %cst_77 : f32 to vector<16x1xf32>
    %163 = arith.divf %161, %162 : vector<16x1xf32>
    %164 = vector.broadcast %156 : vector<16x1xf32> to vector<16x32xf32>
    %165 = arith.subf %148, %164 : vector<16x32xf32>
    %cst_78 = arith.constant 9.99999974E-6 : f32
    %166 = vector.broadcast %cst_78 : f32 to vector<16x1xf32>
    %167 = arith.addf %163, %166 : vector<16x1xf32>
    %168 = math.rsqrt %167 : vector<16x1xf32>
    %169 = vector.broadcast %168 : vector<16x1xf32> to vector<16x32xf32>
    %170 = arith.mulf %165, %169 : vector<16x32xf32>
    %171 = vector.broadcast %150 : vector<1x32xf32> to vector<16x32xf32>
    %172 = arith.mulf %170, %171 : vector<16x32xf32>
    %173 = vector.broadcast %152 : vector<1x32xf32> to vector<16x32xf32>
    %174 = arith.addf %172, %173 : vector<16x32xf32>
    %c0_79 = arith.constant 0 : index
    %c0_80 = arith.constant 0 : index
    %c0_81 = arith.constant 0 : index
    %175 = vector.load %arg16[%c0_79, %c0_80, %c0_81] : memref<2x32x128xf32, #tpu.memory_space<vmem>>, vector<1x32x128xf32>
    %176 = vector.shape_cast %175 : vector<1x32x128xf32> to vector<32x128xf32>
    %cst_82 = arith.constant dense<0.000000e+00> : vector<16x128xf32>
    %177 = tpu.matmul %174, %176, %cst_82 {dimension_numbers = #tpu.dot_dimension_numbers<[1], [0], [0], [1], [0, 0, 1, 1], [], []>} : vector<16x32xf32>, vector<32x128xf32>, vector<16x128xf32> -> vector<16x128xf32>
    %c0_83 = arith.constant 0 : index
    %c0_84 = arith.constant 0 : index
    %c0_85 = arith.constant 0 : index
    %178 = vector.load %arg17[%c0_83, %c0_84, %c0_85] : memref<2x1x128xf32, #tpu.memory_space<vmem>>, vector<1x1x128xf32>
    %179 = vector.shape_cast %178 : vector<1x1x128xf32> to vector<1x128xf32>
    %180 = vector.broadcast %179 : vector<1x128xf32> to vector<16x128xf32>
    %181 = arith.addf %177, %180 : vector<16x128xf32>
    %cst_86 = arith.constant 0.000000e+00 : f32
    %182 = vector.broadcast %cst_86 : f32 to vector<16x128xf32>
    %183 = arith.maximumf %181, %182 : vector<16x128xf32>
    %c0_87 = arith.constant 0 : index
    %c0_88 = arith.constant 0 : index
    %c0_89 = arith.constant 0 : index
    %184 = vector.load %arg18[%c0_87, %c0_88, %c0_89] : memref<2x128x32xf32, #tpu.memory_space<vmem>>, vector<1x128x32xf32>
    %185 = vector.shape_cast %184 : vector<1x128x32xf32> to vector<128x32xf32>
    %cst_90 = arith.constant dense<0.000000e+00> : vector<16x32xf32>
    %186 = tpu.matmul %183, %185, %cst_90 {dimension_numbers = #tpu.dot_dimension_numbers<[1], [0], [0], [1], [0, 0, 1, 1], [], []>} : vector<16x128xf32>, vector<128x32xf32>, vector<16x32xf32> -> vector<16x32xf32>
    %c0_91 = arith.constant 0 : index
    %c0_92 = arith.constant 0 : index
    %c0_93 = arith.constant 0 : index
    %187 = vector.load %arg19[%c0_91, %c0_92, %c0_93] : memref<2x1x32xf32, #tpu.memory_space<vmem>>, vector<1x1x32xf32>
    %188 = vector.shape_cast %187 : vector<1x1x32xf32> to vector<1x32xf32>
    %189 = vector.broadcast %188 : vector<1x32xf32> to vector<16x32xf32>
    %190 = arith.addf %186, %189 : vector<16x32xf32>
    %191 = arith.addf %148, %190 : vector<16x32xf32>
    %c1 = arith.constant 1 : index
    %c0_94 = arith.constant 0 : index
    %c0_95 = arith.constant 0 : index
    %192 = vector.load %arg14[%c1, %c0_94, %c0_95] : memref<2x1x32xf32, #tpu.memory_space<vmem>>, vector<1x1x32xf32>
    %193 = vector.shape_cast %192 : vector<1x1x32xf32> to vector<1x32xf32>
    %c1_96 = arith.constant 1 : index
    %c0_97 = arith.constant 0 : index
    %c0_98 = arith.constant 0 : index
    %194 = vector.load %arg15[%c1_96, %c0_97, %c0_98] : memref<2x1x32xf32, #tpu.memory_space<vmem>>, vector<1x1x32xf32>
    %195 = vector.shape_cast %194 : vector<1x1x32xf32> to vector<1x32xf32>
    %cst_99 = arith.constant dense<0.000000e+00> : vector<16xf32>
    %196 = vector.multi_reduction <add>, %191, %cst_99 [1] : vector<16x32xf32> to vector<16xf32>
    %197 = vector.shape_cast %196 : vector<16xf32> to vector<16x1xf32>
    %cst_100 = arith.constant 3.200000e+01 : f32
    %198 = vector.broadcast %cst_100 : f32 to vector<16x1xf32>
    %199 = arith.divf %197, %198 : vector<16x1xf32>
    %200 = vector.broadcast %199 : vector<16x1xf32> to vector<16x32xf32>
    %201 = arith.subf %191, %200 : vector<16x32xf32>
    %202 = arith.mulf %201, %201 : vector<16x32xf32>
    %cst_101 = arith.constant dense<0.000000e+00> : vector<16xf32>
    %203 = vector.multi_reduction <add>, %202, %cst_101 [1] : vector<16x32xf32> to vector<16xf32>
    %204 = vector.shape_cast %203 : vector<16xf32> to vector<16x1xf32>
    %cst_102 = arith.constant 3.200000e+01 : f32
    %205 = vector.broadcast %cst_102 : f32 to vector<16x1xf32>
    %206 = arith.divf %204, %205 : vector<16x1xf32>
    %207 = vector.broadcast %199 : vector<16x1xf32> to vector<16x32xf32>
    %208 = arith.subf %191, %207 : vector<16x32xf32>
    %cst_103 = arith.constant 9.99999974E-6 : f32
    %209 = vector.broadcast %cst_103 : f32 to vector<16x1xf32>
    %210 = arith.addf %206, %209 : vector<16x1xf32>
    %211 = math.rsqrt %210 : vector<16x1xf32>
    %212 = vector.broadcast %211 : vector<16x1xf32> to vector<16x32xf32>
    %213 = arith.mulf %208, %212 : vector<16x32xf32>
    %214 = vector.broadcast %193 : vector<1x32xf32> to vector<16x32xf32>
    %215 = arith.mulf %213, %214 : vector<16x32xf32>
    %216 = vector.broadcast %195 : vector<1x32xf32> to vector<16x32xf32>
    %217 = arith.addf %215, %216 : vector<16x32xf32>
    %c1_104 = arith.constant 1 : index
    %c0_105 = arith.constant 0 : index
    %c0_106 = arith.constant 0 : index
    %218 = vector.load %arg10[%c1_104, %c0_105, %c0_106] : memref<2x32x96xf32, #tpu.memory_space<vmem>>, vector<1x32x96xf32>
    %219 = vector.shape_cast %218 : vector<1x32x96xf32> to vector<32x96xf32>
    %cst_107 = arith.constant dense<0.000000e+00> : vector<16x96xf32>
    %220 = tpu.matmul %217, %219, %cst_107 {dimension_numbers = #tpu.dot_dimension_numbers<[1], [0], [0], [1], [0, 0, 1, 1], [], []>} : vector<16x32xf32>, vector<32x96xf32>, vector<16x96xf32> -> vector<16x96xf32>
    %c1_108 = arith.constant 1 : index
    %c0_109 = arith.constant 0 : index
    %c0_110 = arith.constant 0 : index
    %221 = vector.load %arg11[%c1_108, %c0_109, %c0_110] : memref<2x1x96xf32, #tpu.memory_space<vmem>>, vector<1x1x96xf32>
    %222 = vector.shape_cast %221 : vector<1x1x96xf32> to vector<1x96xf32>
    %223 = vector.broadcast %222 : vector<1x96xf32> to vector<16x96xf32>
    %224 = arith.addf %220, %223 : vector<16x96xf32>
    %c1_111 = arith.constant 1 : index
    %c0_112 = arith.constant 0 : index
    %c0_113 = arith.constant 0 : index
    %225 = vector.load %arg12[%c1_111, %c0_112, %c0_113] : memref<2x32x32xf32, #tpu.memory_space<vmem>>, vector<1x32x32xf32>
    %226 = vector.shape_cast %225 : vector<1x32x32xf32> to vector<32x32xf32>
    %cst_114 = arith.constant 0.000000e+00 : f32
    %227 = vector.broadcast %cst_114 : f32 to vector<16x32xf32>
    %228 = vector.extract_strided_slice %224 {offsets = [0, 0], sizes = [16, 8], strides = [1, 1]} : vector<16x96xf32> to vector<16x8xf32>
    %229 = vector.extract_strided_slice %224 {offsets = [0, 32], sizes = [16, 8], strides = [1, 1]} : vector<16x96xf32> to vector<16x8xf32>
    %230 = vector.extract_strided_slice %224 {offsets = [0, 64], sizes = [16, 8], strides = [1, 1]} : vector<16x96xf32> to vector<16x8xf32>
    %cst_115 = arith.constant dense<0.000000e+00> : vector<16x16xf32>
    %231 = tpu.matmul %228, %229, %cst_115 {dimension_numbers = #tpu.dot_dimension_numbers<[1], [1], [0], [0], [0, 0, 1, 0], [], []>} : vector<16x8xf32>, vector<16x8xf32>, vector<16x16xf32> -> vector<16x16xf32>
    %232 = arith.addf %231, %31 : vector<16x16xf32>
    %cst_116 = arith.constant dense<0xFF800000> : vector<16xf32>
    %233 = vector.multi_reduction <maximumf>, %232, %cst_116 [1] : vector<16x16xf32> to vector<16xf32>
    %234 = vector.shape_cast %233 : vector<16xf32> to vector<16x1xf32>
    %235 = vector.broadcast %234 : vector<16x1xf32> to vector<16x16xf32>
    %236 = arith.subf %232, %235 : vector<16x16xf32>
    %237 = math.exp %236 : vector<16x16xf32>
    %cst_117 = arith.constant dense<0.000000e+00> : vector<16xf32>
    %238 = vector.multi_reduction <add>, %237, %cst_117 [1] : vector<16x16xf32> to vector<16xf32>
    %239 = vector.shape_cast %238 : vector<16xf32> to vector<16x1xf32>
    %240 = tpu.reciprocal %239 {approx = true} : vector<16x1xf32> -> vector<16x1xf32>
    %241 = vector.broadcast %240 : vector<16x1xf32> to vector<16x16xf32>
    %242 = arith.mulf %237, %241 : vector<16x16xf32>
    %cst_118 = arith.constant dense<0.000000e+00> : vector<16x8xf32>
    %243 = tpu.matmul %242, %230, %cst_118 {dimension_numbers = #tpu.dot_dimension_numbers<[1], [0], [0], [1], [0, 0, 1, 1], [], []>} : vector<16x16xf32>, vector<16x8xf32>, vector<16x8xf32> -> vector<16x8xf32>
    %244 = vector.extract_strided_slice %226 {offsets = [0, 0], sizes = [8, 32], strides = [1, 1]} : vector<32x32xf32> to vector<8x32xf32>
    %cst_119 = arith.constant dense<0.000000e+00> : vector<16x32xf32>
    %245 = tpu.matmul %243, %244, %cst_119 {dimension_numbers = #tpu.dot_dimension_numbers<[1], [0], [0], [1], [0, 0, 1, 1], [], []>} : vector<16x8xf32>, vector<8x32xf32>, vector<16x32xf32> -> vector<16x32xf32>
    %246 = arith.addf %227, %245 : vector<16x32xf32>
    %247 = vector.extract_strided_slice %224 {offsets = [0, 8], sizes = [16, 8], strides = [1, 1]} : vector<16x96xf32> to vector<16x8xf32>
    %248 = vector.extract_strided_slice %224 {offsets = [0, 40], sizes = [16, 8], strides = [1, 1]} : vector<16x96xf32> to vector<16x8xf32>
    %249 = vector.extract_strided_slice %224 {offsets = [0, 72], sizes = [16, 8], strides = [1, 1]} : vector<16x96xf32> to vector<16x8xf32>
    %cst_120 = arith.constant dense<0.000000e+00> : vector<16x16xf32>
    %250 = tpu.matmul %247, %248, %cst_120 {dimension_numbers = #tpu.dot_dimension_numbers<[1], [1], [0], [0], [0, 0, 1, 0], [], []>} : vector<16x8xf32>, vector<16x8xf32>, vector<16x16xf32> -> vector<16x16xf32>
    %251 = arith.addf %250, %31 : vector<16x16xf32>
    %cst_121 = arith.constant dense<0xFF800000> : vector<16xf32>
    %252 = vector.multi_reduction <maximumf>, %251, %cst_121 [1] : vector<16x16xf32> to vector<16xf32>
    %253 = vector.shape_cast %252 : vector<16xf32> to vector<16x1xf32>
    %254 = vector.broadcast %253 : vector<16x1xf32> to vector<16x16xf32>
    %255 = arith.subf %251, %254 : vector<16x16xf32>
    %256 = math.exp %255 : vector<16x16xf32>
    %cst_122 = arith.constant dense<0.000000e+00> : vector<16xf32>
    %257 = vector.multi_reduction <add>, %256, %cst_122 [1] : vector<16x16xf32> to vector<16xf32>
    %258 = vector.shape_cast %257 : vector<16xf32> to vector<16x1xf32>
    %259 = tpu.reciprocal %258 {approx = true} : vector<16x1xf32> -> vector<16x1xf32>
    %260 = vector.broadcast %259 : vector<16x1xf32> to vector<16x16xf32>
    %261 = arith.mulf %256, %260 : vector<16x16xf32>
    %cst_123 = arith.constant dense<0.000000e+00> : vector<16x8xf32>
    %262 = tpu.matmul %261, %249, %cst_123 {dimension_numbers = #tpu.dot_dimension_numbers<[1], [0], [0], [1], [0, 0, 1, 1], [], []>} : vector<16x16xf32>, vector<16x8xf32>, vector<16x8xf32> -> vector<16x8xf32>
    %263 = vector.extract_strided_slice %226 {offsets = [8, 0], sizes = [8, 32], strides = [1, 1]} : vector<32x32xf32> to vector<8x32xf32>
    %cst_124 = arith.constant dense<0.000000e+00> : vector<16x32xf32>
    %264 = tpu.matmul %262, %263, %cst_124 {dimension_numbers = #tpu.dot_dimension_numbers<[1], [0], [0], [1], [0, 0, 1, 1], [], []>} : vector<16x8xf32>, vector<8x32xf32>, vector<16x32xf32> -> vector<16x32xf32>
    %265 = arith.addf %246, %264 : vector<16x32xf32>
    %266 = vector.extract_strided_slice %224 {offsets = [0, 16], sizes = [16, 8], strides = [1, 1]} : vector<16x96xf32> to vector<16x8xf32>
    %267 = vector.extract_strided_slice %224 {offsets = [0, 48], sizes = [16, 8], strides = [1, 1]} : vector<16x96xf32> to vector<16x8xf32>
    %268 = vector.extract_strided_slice %224 {offsets = [0, 80], sizes = [16, 8], strides = [1, 1]} : vector<16x96xf32> to vector<16x8xf32>
    %cst_125 = arith.constant dense<0.000000e+00> : vector<16x16xf32>
    %269 = tpu.matmul %266, %267, %cst_125 {dimension_numbers = #tpu.dot_dimension_numbers<[1], [1], [0], [0], [0, 0, 1, 0], [], []>} : vector<16x8xf32>, vector<16x8xf32>, vector<16x16xf32> -> vector<16x16xf32>
    %270 = arith.addf %269, %31 : vector<16x16xf32>
    %cst_126 = arith.constant dense<0xFF800000> : vector<16xf32>
    %271 = vector.multi_reduction <maximumf>, %270, %cst_126 [1] : vector<16x16xf32> to vector<16xf32>
    %272 = vector.shape_cast %271 : vector<16xf32> to vector<16x1xf32>
    %273 = vector.broadcast %272 : vector<16x1xf32> to vector<16x16xf32>
    %274 = arith.subf %270, %273 : vector<16x16xf32>
    %275 = math.exp %274 : vector<16x16xf32>
    %cst_127 = arith.constant dense<0.000000e+00> : vector<16xf32>
    %276 = vector.multi_reduction <add>, %275, %cst_127 [1] : vector<16x16xf32> to vector<16xf32>
    %277 = vector.shape_cast %276 : vector<16xf32> to vector<16x1xf32>
    %278 = tpu.reciprocal %277 {approx = true} : vector<16x1xf32> -> vector<16x1xf32>
    %279 = vector.broadcast %278 : vector<16x1xf32> to vector<16x16xf32>
    %280 = arith.mulf %275, %279 : vector<16x16xf32>
    %cst_128 = arith.constant dense<0.000000e+00> : vector<16x8xf32>
    %281 = tpu.matmul %280, %268, %cst_128 {dimension_numbers = #tpu.dot_dimension_numbers<[1], [0], [0], [1], [0, 0, 1, 1], [], []>} : vector<16x16xf32>, vector<16x8xf32>, vector<16x8xf32> -> vector<16x8xf32>
    %282 = vector.extract_strided_slice %226 {offsets = [16, 0], sizes = [8, 32], strides = [1, 1]} : vector<32x32xf32> to vector<8x32xf32>
    %cst_129 = arith.constant dense<0.000000e+00> : vector<16x32xf32>
    %283 = tpu.matmul %281, %282, %cst_129 {dimension_numbers = #tpu.dot_dimension_numbers<[1], [0], [0], [1], [0, 0, 1, 1], [], []>} : vector<16x8xf32>, vector<8x32xf32>, vector<16x32xf32> -> vector<16x32xf32>
    %284 = arith.addf %265, %283 : vector<16x32xf32>
    %285 = vector.extract_strided_slice %224 {offsets = [0, 24], sizes = [16, 8], strides = [1, 1]} : vector<16x96xf32> to vector<16x8xf32>
    %286 = vector.extract_strided_slice %224 {offsets = [0, 56], sizes = [16, 8], strides = [1, 1]} : vector<16x96xf32> to vector<16x8xf32>
    %287 = vector.extract_strided_slice %224 {offsets = [0, 88], sizes = [16, 8], strides = [1, 1]} : vector<16x96xf32> to vector<16x8xf32>
    %cst_130 = arith.constant dense<0.000000e+00> : vector<16x16xf32>
    %288 = tpu.matmul %285, %286, %cst_130 {dimension_numbers = #tpu.dot_dimension_numbers<[1], [1], [0], [0], [0, 0, 1, 0], [], []>} : vector<16x8xf32>, vector<16x8xf32>, vector<16x16xf32> -> vector<16x16xf32>
    %289 = arith.addf %288, %31 : vector<16x16xf32>
    %cst_131 = arith.constant dense<0xFF800000> : vector<16xf32>
    %290 = vector.multi_reduction <maximumf>, %289, %cst_131 [1] : vector<16x16xf32> to vector<16xf32>
    %291 = vector.shape_cast %290 : vector<16xf32> to vector<16x1xf32>
    %292 = vector.broadcast %291 : vector<16x1xf32> to vector<16x16xf32>
    %293 = arith.subf %289, %292 : vector<16x16xf32>
    %294 = math.exp %293 : vector<16x16xf32>
    %cst_132 = arith.constant dense<0.000000e+00> : vector<16xf32>
    %295 = vector.multi_reduction <add>, %294, %cst_132 [1] : vector<16x16xf32> to vector<16xf32>
    %296 = vector.shape_cast %295 : vector<16xf32> to vector<16x1xf32>
    %297 = tpu.reciprocal %296 {approx = true} : vector<16x1xf32> -> vector<16x1xf32>
    %298 = vector.broadcast %297 : vector<16x1xf32> to vector<16x16xf32>
    %299 = arith.mulf %294, %298 : vector<16x16xf32>
    %cst_133 = arith.constant dense<0.000000e+00> : vector<16x8xf32>
    %300 = tpu.matmul %299, %287, %cst_133 {dimension_numbers = #tpu.dot_dimension_numbers<[1], [0], [0], [1], [0, 0, 1, 1], [], []>} : vector<16x16xf32>, vector<16x8xf32>, vector<16x8xf32> -> vector<16x8xf32>
    %301 = vector.extract_strided_slice %226 {offsets = [24, 0], sizes = [8, 32], strides = [1, 1]} : vector<32x32xf32> to vector<8x32xf32>
    %cst_134 = arith.constant dense<0.000000e+00> : vector<16x32xf32>
    %302 = tpu.matmul %300, %301, %cst_134 {dimension_numbers = #tpu.dot_dimension_numbers<[1], [0], [0], [1], [0, 0, 1, 1], [], []>} : vector<16x8xf32>, vector<8x32xf32>, vector<16x32xf32> -> vector<16x32xf32>
    %303 = arith.addf %284, %302 : vector<16x32xf32>
    %304 = arith.addf %191, %303 : vector<16x32xf32>
    %c1_135 = arith.constant 1 : index
    %c0_136 = arith.constant 0 : index
    %c0_137 = arith.constant 0 : index
    %305 = vector.load %arg13[%c1_135, %c0_136, %c0_137] : memref<2x1x32xf32, #tpu.memory_space<vmem>>, vector<1x1x32xf32>
    %306 = vector.shape_cast %305 : vector<1x1x32xf32> to vector<1x32xf32>
    %307 = vector.broadcast %306 : vector<1x32xf32> to vector<16x32xf32>
    %308 = arith.addf %304, %307 : vector<16x32xf32>
    %c1_138 = arith.constant 1 : index
    %c0_139 = arith.constant 0 : index
    %c0_140 = arith.constant 0 : index
    %309 = vector.load %arg20[%c1_138, %c0_139, %c0_140] : memref<2x1x32xf32, #tpu.memory_space<vmem>>, vector<1x1x32xf32>
    %310 = vector.shape_cast %309 : vector<1x1x32xf32> to vector<1x32xf32>
    %c1_141 = arith.constant 1 : index
    %c0_142 = arith.constant 0 : index
    %c0_143 = arith.constant 0 : index
    %311 = vector.load %arg21[%c1_141, %c0_142, %c0_143] : memref<2x1x32xf32, #tpu.memory_space<vmem>>, vector<1x1x32xf32>
    %312 = vector.shape_cast %311 : vector<1x1x32xf32> to vector<1x32xf32>
    %cst_144 = arith.constant dense<0.000000e+00> : vector<16xf32>
    %313 = vector.multi_reduction <add>, %308, %cst_144 [1] : vector<16x32xf32> to vector<16xf32>
    %314 = vector.shape_cast %313 : vector<16xf32> to vector<16x1xf32>
    %cst_145 = arith.constant 3.200000e+01 : f32
    %315 = vector.broadcast %cst_145 : f32 to vector<16x1xf32>
    %316 = arith.divf %314, %315 : vector<16x1xf32>
    %317 = vector.broadcast %316 : vector<16x1xf32> to vector<16x32xf32>
    %318 = arith.subf %308, %317 : vector<16x32xf32>
    %319 = arith.mulf %318, %318 : vector<16x32xf32>
    %cst_146 = arith.constant dense<0.000000e+00> : vector<16xf32>
    %320 = vector.multi_reduction <add>, %319, %cst_146 [1] : vector<16x32xf32> to vector<16xf32>
    %321 = vector.shape_cast %320 : vector<16xf32> to vector<16x1xf32>
    %cst_147 = arith.constant 3.200000e+01 : f32
    %322 = vector.broadcast %cst_147 : f32 to vector<16x1xf32>
    %323 = arith.divf %321, %322 : vector<16x1xf32>
    %324 = vector.broadcast %316 : vector<16x1xf32> to vector<16x32xf32>
    %325 = arith.subf %308, %324 : vector<16x32xf32>
    %cst_148 = arith.constant 9.99999974E-6 : f32
    %326 = vector.broadcast %cst_148 : f32 to vector<16x1xf32>
    %327 = arith.addf %323, %326 : vector<16x1xf32>
    %328 = math.rsqrt %327 : vector<16x1xf32>
    %329 = vector.broadcast %328 : vector<16x1xf32> to vector<16x32xf32>
    %330 = arith.mulf %325, %329 : vector<16x32xf32>
    %331 = vector.broadcast %310 : vector<1x32xf32> to vector<16x32xf32>
    %332 = arith.mulf %330, %331 : vector<16x32xf32>
    %333 = vector.broadcast %312 : vector<1x32xf32> to vector<16x32xf32>
    %334 = arith.addf %332, %333 : vector<16x32xf32>
    %c1_149 = arith.constant 1 : index
    %c0_150 = arith.constant 0 : index
    %c0_151 = arith.constant 0 : index
    %335 = vector.load %arg16[%c1_149, %c0_150, %c0_151] : memref<2x32x128xf32, #tpu.memory_space<vmem>>, vector<1x32x128xf32>
    %336 = vector.shape_cast %335 : vector<1x32x128xf32> to vector<32x128xf32>
    %cst_152 = arith.constant dense<0.000000e+00> : vector<16x128xf32>
    %337 = tpu.matmul %334, %336, %cst_152 {dimension_numbers = #tpu.dot_dimension_numbers<[1], [0], [0], [1], [0, 0, 1, 1], [], []>} : vector<16x32xf32>, vector<32x128xf32>, vector<16x128xf32> -> vector<16x128xf32>
    %c1_153 = arith.constant 1 : index
    %c0_154 = arith.constant 0 : index
    %c0_155 = arith.constant 0 : index
    %338 = vector.load %arg17[%c1_153, %c0_154, %c0_155] : memref<2x1x128xf32, #tpu.memory_space<vmem>>, vector<1x1x128xf32>
    %339 = vector.shape_cast %338 : vector<1x1x128xf32> to vector<1x128xf32>
    %340 = vector.broadcast %339 : vector<1x128xf32> to vector<16x128xf32>
    %341 = arith.addf %337, %340 : vector<16x128xf32>
    %cst_156 = arith.constant 0.000000e+00 : f32
    %342 = vector.broadcast %cst_156 : f32 to vector<16x128xf32>
    %343 = arith.maximumf %341, %342 : vector<16x128xf32>
    %c1_157 = arith.constant 1 : index
    %c0_158 = arith.constant 0 : index
    %c0_159 = arith.constant 0 : index
    %344 = vector.load %arg18[%c1_157, %c0_158, %c0_159] : memref<2x128x32xf32, #tpu.memory_space<vmem>>, vector<1x128x32xf32>
    %345 = vector.shape_cast %344 : vector<1x128x32xf32> to vector<128x32xf32>
    %cst_160 = arith.constant dense<0.000000e+00> : vector<16x32xf32>
    %346 = tpu.matmul %343, %345, %cst_160 {dimension_numbers = #tpu.dot_dimension_numbers<[1], [0], [0], [1], [0, 0, 1, 1], [], []>} : vector<16x128xf32>, vector<128x32xf32>, vector<16x32xf32> -> vector<16x32xf32>
    %c1_161 = arith.constant 1 : index
    %c0_162 = arith.constant 0 : index
    %c0_163 = arith.constant 0 : index
    %347 = vector.load %arg19[%c1_161, %c0_162, %c0_163] : memref<2x1x32xf32, #tpu.memory_space<vmem>>, vector<1x1x32xf32>
    %348 = vector.shape_cast %347 : vector<1x1x32xf32> to vector<1x32xf32>
    %349 = vector.broadcast %348 : vector<1x32xf32> to vector<16x32xf32>
    %350 = arith.addf %346, %349 : vector<16x32xf32>
    %351 = arith.addf %308, %350 : vector<16x32xf32>
    %c0_164 = arith.constant 0 : index
    %c0_165 = arith.constant 0 : index
    %352 = vector.load %arg22[%c0_164, %c0_165] : memref<1x32xf32, #tpu.memory_space<vmem>>, vector<1x32xf32>
    %c0_166 = arith.constant 0 : index
    %c0_167 = arith.constant 0 : index
    %353 = vector.load %arg23[%c0_166, %c0_167] : memref<1x32xf32, #tpu.memory_space<vmem>>, vector<1x32xf32>
    %cst_168 = arith.constant dense<0.000000e+00> : vector<16xf32>
    %354 = vector.multi_reduction <add>, %351, %cst_168 [1] : vector<16x32xf32> to vector<16xf32>
    %355 = vector.shape_cast %354 : vector<16xf32> to vector<16x1xf32>
    %cst_169 = arith.constant 3.200000e+01 : f32
    %356 = vector.broadcast %cst_169 : f32 to vector<16x1xf32>
    %357 = arith.divf %355, %356 : vector<16x1xf32>
    %358 = vector.broadcast %357 : vector<16x1xf32> to vector<16x32xf32>
    %359 = arith.subf %351, %358 : vector<16x32xf32>
    %360 = arith.mulf %359, %359 : vector<16x32xf32>
    %cst_170 = arith.constant dense<0.000000e+00> : vector<16xf32>
    %361 = vector.multi_reduction <add>, %360, %cst_170 [1] : vector<16x32xf32> to vector<16xf32>
    %362 = vector.shape_cast %361 : vector<16xf32> to vector<16x1xf32>
    %cst_171 = arith.constant 3.200000e+01 : f32
    %363 = vector.broadcast %cst_171 : f32 to vector<16x1xf32>
    %364 = arith.divf %362, %363 : vector<16x1xf32>
    %365 = vector.broadcast %357 : vector<16x1xf32> to vector<16x32xf32>
    %366 = arith.subf %351, %365 : vector<16x32xf32>
    %cst_172 = arith.constant 9.99999974E-6 : f32
    %367 = vector.broadcast %cst_172 : f32 to vector<16x1xf32>
    %368 = arith.addf %364, %367 : vector<16x1xf32>
    %369 = math.rsqrt %368 : vector<16x1xf32>
    %370 = vector.broadcast %369 : vector<16x1xf32> to vector<16x32xf32>
    %371 = arith.mulf %366, %370 : vector<16x32xf32>
    %372 = vector.broadcast %352 : vector<1x32xf32> to vector<16x32xf32>
    %373 = arith.mulf %371, %372 : vector<16x32xf32>
    %374 = vector.broadcast %353 : vector<1x32xf32> to vector<16x32xf32>
    %375 = arith.addf %373, %374 : vector<16x32xf32>
    %376 = vector.extract_strided_slice %375 {offsets = [8, 0], sizes = [8, 32], strides = [1, 1]} : vector<16x32xf32> to vector<8x32xf32>
    %c0_173 = arith.constant 0 : index
    %c0_174 = arith.constant 0 : index
    %377 = vector.load %arg24[%c0_173, %c0_174] : memref<32x16xf32, #tpu.memory_space<vmem>>, vector<32x16xf32>
    %cst_175 = arith.constant dense<0.000000e+00> : vector<8x16xf32>
    %378 = tpu.matmul %376, %377, %cst_175 {dimension_numbers = #tpu.dot_dimension_numbers<[1], [0], [0], [1], [0, 0, 1, 1], [], []>} : vector<8x32xf32>, vector<32x16xf32>, vector<8x16xf32> -> vector<8x16xf32>
    %c0_176 = arith.constant 0 : index
    %c0_177 = arith.constant 0 : index
    %379 = vector.load %arg25[%c0_176, %c0_177] : memref<1x16xf32, #tpu.memory_space<vmem>>, vector<1x16xf32>
    %380 = vector.broadcast %379 : vector<1x16xf32> to vector<8x16xf32>
    %381 = arith.addf %378, %380 : vector<8x16xf32>
    %c0_178 = arith.constant 0 : index
    %c0_179 = arith.constant 0 : index
    %c0_180 = arith.constant 0 : index
    %382 = vector.load %arg26[%c0_178, %c0_179, %c0_180] : memref<1x8x16xf32, #tpu.memory_space<vmem>>, vector<1x8x16xf32>
    %383 = vector.shape_cast %382 : vector<1x8x16xf32> to vector<8x16xf32>
    %384 = vector.shape_cast %381 : vector<8x16xf32> to vector<1x8x16xf32>
    tpu.vector_store %arg26[%c0_178, %c0_179, %c0_180], %384 {strides = array<i32>} : memref<1x8x16xf32, #tpu.memory_space<vmem>>, vector<1x8x16xf32>,
    return
  }
  func.func @transform_0(%arg0: i32) -> (i32, i32, i32) {
    %c0_i32 = arith.constant 0 : i32
    %c0_i32_0 = arith.constant 0 : i32
    %c0_i32_1 = arith.constant 0 : i32
    return %arg0, %c0_i32, %c0_i32_0 : i32, i32, i32
  }
  func.func @transform_1(%arg0: i32) -> (i32, i32, i32) {
    %c0_i32 = arith.constant 0 : i32
    %c0_i32_0 = arith.constant 0 : i32
    %c0_i32_1 = arith.constant 0 : i32
    return %arg0, %c0_i32, %c0_i32_0 : i32, i32, i32
  }
  func.func @transform_2(%arg0: i32) -> (i32, i32) {
    %c0_i32 = arith.constant 0 : i32
    %c0_i32_0 = arith.constant 0 : i32
    %c0_i32_1 = arith.constant 0 : i32
    return %c0_i32, %c0_i32_0 : i32, i32
  }
  func.func @transform_3(%arg0: i32) -> (i32, i32) {
    %c0_i32 = arith.constant 0 : i32
    %c0_i32_0 = arith.constant 0 : i32
    %c0_i32_1 = arith.constant 0 : i32
    return %c0_i32, %c0_i32_0 : i32, i32
  }
  func.func @transform_4(%arg0: i32) -> (i32, i32) {
    %c0_i32 = arith.constant 0 : i32
    %c0_i32_0 = arith.constant 0 : i32
    %c0_i32_1 = arith.constant 0 : i32
    return %c0_i32, %c0_i32_0 : i32, i32
  }
  func.func @transform_5(%arg0: i32) -> (i32, i32) {
    %c0_i32 = arith.constant 0 : i32
    %c0_i32_0 = arith.constant 0 : i32
    %c0_i32_1 = arith.constant 0 : i32
    return %c0_i32, %c0_i32_0 : i32, i32
  }
  func.func @transform_6(%arg0: i32) -> (i32, i32) {
    %c0_i32 = arith.constant 0 : i32
    %c0_i32_0 = arith.constant 0 : i32
    %c0_i32_1 = arith.constant 0 : i32
    return %c0_i32, %c0_i32_0 : i32, i32
  }
  func.func @transform_7(%arg0: i32) -> (i32, i32) {
    %c0_i32 = arith.constant 0 : i32
    %c0_i32_0 = arith.constant 0 : i32
    %c0_i32_1 = arith.constant 0 : i32
    return %c0_i32, %c0_i32_0 : i32, i32
  }
  func.func @transform_8(%arg0: i32) -> (i32, i32) {
    %c0_i32 = arith.constant 0 : i32
    %c0_i32_0 = arith.constant 0 : i32
    %c0_i32_1 = arith.constant 0 : i32
    return %c0_i32, %c0_i32_0 : i32, i32
  }
  func.func @transform_9(%arg0: i32) -> (i32, i32, i32) {
    %c0_i32 = arith.constant 0 : i32
    %c0_i32_0 = arith.constant 0 : i32
    %c0_i32_1 = arith.constant 0 : i32
    %c0_i32_2 = arith.constant 0 : i32
    return %c0_i32, %c0_i32_0, %c0_i32_1 : i32, i32, i32
  }
  func.func @transform_10(%arg0: i32) -> (i32, i32, i32) {
    %c0_i32 = arith.constant 0 : i32
    %c0_i32_0 = arith.constant 0 : i32
    %c0_i32_1 = arith.constant 0 : i32
    %c0_i32_2 = arith.constant 0 : i32
    return %c0_i32, %c0_i32_0, %c0_i32_1 : i32, i32, i32
  }
  func.func @transform_11(%arg0: i32) -> (i32, i32, i32) {
    %c0_i32 = arith.constant 0 : i32
    %c0_i32_0 = arith.constant 0 : i32
    %c0_i32_1 = arith.constant 0 : i32
    %c0_i32_2 = arith.constant 0 : i32
    return %c0_i32, %c0_i32_0, %c0_i32_1 : i32, i32, i32
  }
  func.func @transform_12(%arg0: i32) -> (i32, i32, i32) {
    %c0_i32 = arith.constant 0 : i32
    %c0_i32_0 = arith.constant 0 : i32
    %c0_i32_1 = arith.constant 0 : i32
    %c0_i32_2 = arith.constant 0 : i32
    return %c0_i32, %c0_i32_0, %c0_i32_1 : i32, i32, i32
  }
  func.func @transform_13(%arg0: i32) -> (i32, i32, i32) {
    %c0_i32 = arith.constant 0 : i32
    %c0_i32_0 = arith.constant 0 : i32
    %c0_i32_1 = arith.constant 0 : i32
    %c0_i32_2 = arith.constant 0 : i32
    return %c0_i32, %c0_i32_0, %c0_i32_1 : i32, i32, i32
  }
  func.func @transform_14(%arg0: i32) -> (i32, i32, i32) {
    %c0_i32 = arith.constant 0 : i32
    %c0_i32_0 = arith.constant 0 : i32
    %c0_i32_1 = arith.constant 0 : i32
    %c0_i32_2 = arith.constant 0 : i32
    return %c0_i32, %c0_i32_0, %c0_i32_1 : i32, i32, i32
  }
  func.func @transform_15(%arg0: i32) -> (i32, i32, i32) {
    %c0_i32 = arith.constant 0 : i32
    %c0_i32_0 = arith.constant 0 : i32
    %c0_i32_1 = arith.constant 0 : i32
    %c0_i32_2 = arith.constant 0 : i32
    return %c0_i32, %c0_i32_0, %c0_i32_1 : i32, i32, i32
  }
  func.func @transform_16(%arg0: i32) -> (i32, i32, i32) {
    %c0_i32 = arith.constant 0 : i32
    %c0_i32_0 = arith.constant 0 : i32
    %c0_i32_1 = arith.constant 0 : i32
    %c0_i32_2 = arith.constant 0 : i32
    return %c0_i32, %c0_i32_0, %c0_i32_1 : i32, i32, i32
  }
  func.func @transform_17(%arg0: i32) -> (i32, i32, i32) {
    %c0_i32 = arith.constant 0 : i32
    %c0_i32_0 = arith.constant 0 : i32
    %c0_i32_1 = arith.constant 0 : i32
    %c0_i32_2 = arith.constant 0 : i32
    return %c0_i32, %c0_i32_0, %c0_i32_1 : i32, i32, i32
  }
  func.func @transform_18(%arg0: i32) -> (i32, i32, i32) {
    %c0_i32 = arith.constant 0 : i32
    %c0_i32_0 = arith.constant 0 : i32
    %c0_i32_1 = arith.constant 0 : i32
    %c0_i32_2 = arith.constant 0 : i32
    return %c0_i32, %c0_i32_0, %c0_i32_1 : i32, i32, i32
  }
  func.func @transform_19(%arg0: i32) -> (i32, i32, i32) {
    %c0_i32 = arith.constant 0 : i32
    %c0_i32_0 = arith.constant 0 : i32
    %c0_i32_1 = arith.constant 0 : i32
    %c0_i32_2 = arith.constant 0 : i32
    return %c0_i32, %c0_i32_0, %c0_i32_1 : i32, i32, i32
  }
  func.func @transform_20(%arg0: i32) -> (i32, i32, i32) {
    %c0_i32 = arith.constant 0 : i32
    %c0_i32_0 = arith.constant 0 : i32
    %c0_i32_1 = arith.constant 0 : i32
    %c0_i32_2 = arith.constant 0 : i32
    return %c0_i32, %c0_i32_0, %c0_i32_1 : i32, i32, i32
  }
  func.func @transform_21(%arg0: i32) -> (i32, i32) {
    %c0_i32 = arith.constant 0 : i32
    %c0_i32_0 = arith.constant 0 : i32
    %c0_i32_1 = arith.constant 0 : i32
    return %c0_i32, %c0_i32_0 : i32, i32
  }
  func.func @transform_22(%arg0: i32) -> (i32, i32) {
    %c0_i32 = arith.constant 0 : i32
    %c0_i32_0 = arith.constant 0 : i32
    %c0_i32_1 = arith.constant 0 : i32
    return %c0_i32, %c0_i32_0 : i32, i32
  }
  func.func @transform_23(%arg0: i32) -> (i32, i32) {
    %c0_i32 = arith.constant 0 : i32
    %c0_i32_0 = arith.constant 0 : i32
    %c0_i32_1 = arith.constant 0 : i32
    return %c0_i32, %c0_i32_0 : i32, i32
  }
  func.func @transform_24(%arg0: i32) -> (i32, i32) {
    %c0_i32 = arith.constant 0 : i32
    %c0_i32_0 = arith.constant 0 : i32
    %c0_i32_1 = arith.constant 0 : i32
    return %c0_i32, %c0_i32_0 : i32, i32
  }
  func.func @transform_25(%arg0: i32) -> (i32, i32, i32) {
    %c0_i32 = arith.constant 0 : i32
    %c0_i32_0 = arith.constant 0 : i32
    %c0_i32_1 = arith.constant 0 : i32
    return %arg0, %c0_i32, %c0_i32_0 : i32, i32, i32
  }
}

</mosaic_0001>

<llo_original>
// kernel: translate_forward.1
$region0: #{translate_forward.1}
  #allocation0 [shape = 'u32[]', space=smem, size = 0x4, offset = 0x4, fixed_abs, tag = 'smem constant byte address 0x4 - core index']
  #allocation1 [shape = 'u32[144,128]{1,0:T(1,128)}', space=vmem, size = 0x12000, scoped, tag = 'internal scratch']
  %s0 = inlined_call_operand.vmem [shape: f32[2,8,24], index: 0, kind: input, shape index: {}]
  %s1 = inlined_call_operand.vmem [shape: f32[2,8,16], index: 1, kind: input, shape index: {}]
  %s2 = inlined_call_operand.vmem [shape: f32[24,32], index: 2, kind: input, shape index: {}]
  %s3 = inlined_call_operand.vmem [shape: f32[1,32], index: 3, kind: input, shape index: {}]
  %s4 = inlined_call_operand.vmem [shape: f32[16,32], index: 4, kind: input, shape index: {}]
  %s5 = inlined_call_operand.vmem [shape: f32[1,32], index: 5, kind: input, shape index: {}]
  %s6 = inlined_call_operand.vmem [shape: f32[1,32], index: 6, kind: input, shape index: {}]
  %s7 = inlined_call_operand.vmem [shape: f32[16,32], index: 7, kind: input, shape index: {}]
  %s8 = inlined_call_operand.vmem [shape: f32[16,16], index: 8, kind: input, shape index: {}]
  %s9 = inlined_call_operand.vmem [shape: f32[2,32,96], index: 9, kind: input, shape index: {}]
  %s10 = inlined_call_operand.vmem [shape: f32[2,1,96], index: 10, kind: input, shape index: {}]
  %s11 = inlined_call_operand.vmem [shape: f32[2,32,32], index: 11, kind: input, shape index: {}]
  %s12 = inlined_call_operand.vmem [shape: f32[2,1,32], index: 12, kind: input, shape index: {}]
  %s13 = inlined_call_operand.vmem [shape: f32[2,1,32], index: 13, kind: input, shape index: {}]
  %s14 = inlined_call_operand.vmem [shape: f32[2,1,32], index: 14, kind: input, shape index: {}]
  %s15 = inlined_call_operand.vmem [shape: f32[2,32,128], index: 15, kind: input, shape index: {}]
  %s16 = inlined_call_operand.vmem [shape: f32[2,1,128], index: 16, kind: input, shape index: {}]
  %s17 = inlined_call_operand.vmem [shape: f32[2,128,32], index: 17, kind: input, shape index: {}]
  %s18 = inlined_call_operand.vmem [shape: f32[2,1,32], index: 18, kind: input, shape index: {}]
  %s19 = inlined_call_operand.vmem [shape: f32[2,1,32], index: 19, kind: input, shape index: {}]
  %s20 = inlined_call_operand.vmem [shape: f32[2,1,32], index: 20, kind: input, shape index: {}]
  %s21 = inlined_call_operand.vmem [shape: f32[1,32], index: 21, kind: input, shape index: {}]
  %s22 = inlined_call_operand.vmem [shape: f32[1,32], index: 22, kind: input, shape index: {}]
  %s23 = inlined_call_operand.vmem [shape: f32[32,16], index: 23, kind: input, shape index: {}]
  %s24 = inlined_call_operand.vmem [shape: f32[1,16], index: 24, kind: input, shape index: {}]
  %s25 = inlined_call_operand.hbm [shape: f32[2,8,16], index: 25, kind: output, shape index: {}]
  %s26 = sld [smem:[#allocation0]]
  $region133: #{translate_forward.1} parent=0
    _
  %s28 = ssub.s32 1, %s26
  %s29 = scalar_select 0, %s28, %s26
  $region1: #{translate_forward.1} parent=0
    #allocation2 [shape = 'u8[8192]{0}', space=vmem, size = 0x2000, scoped, tag = 'output window, operand 0']
    #allocation3 [shape = 's32[2]{0}', space=sflag, size = 0x8, scoped, tag = 'scoped memory for translate_forward.1']
    %30 = vsyncpa [#allocation3], 0
    %s31 = scalar_lea.sflag [#allocation3], 1
    %32 = vsyncpa %s31, 0
    loop: start=0, step=1, limit=4
    $region2: #{translate_forward.1} parent=1 // loop_pre_header
      _
    $region3: #{translate_forward.1} parent=1 // loop_header
      %s34 = sphi 0, %s38
      %p35 = scmp.ge.s32.totalorder %s34, 4
      %s44 = sphi 0, %s46
      %s47 = sphi 0, %s44
      %s48 = sphi 0, %s47
      %s64 = sphi 0, %s48
      %s70 = sphi 0, %s72
      %s73 = sphi 0, %s70
      %s74 = sphi 0, %s73
      %s90 = sphi 0, %s74
      %s94 = sphi 0, %s94
      %s96 = sphi 0, %s94
      %s97 = sphi 0, %s96
      %s111 = sphi 0, %s97
      %s115 = sphi 0, %s115
      %s117 = sphi 0, %s115
      %s118 = sphi 0, %s117
      %s132 = sphi 0, %s118
      %s136 = sphi 0, %s136
      %s138 = sphi 0, %s136
      %s139 = sphi 0, %s138
      %s153 = sphi 0, %s139
      %s157 = sphi 0, %s157
      %s159 = sphi 0, %s157
      %s160 = sphi 0, %s159
      %s174 = sphi 0, %s160
      %s178 = sphi 0, %s178
      %s180 = sphi 0, %s178
      %s181 = sphi 0, %s180
      %s195 = sphi 0, %s181
      %s199 = sphi 0, %s199
      %s201 = sphi 0, %s199
      %s202 = sphi 0, %s201
      %s216 = sphi 0, %s202
      %s220 = sphi 0, %s220
      %s222 = sphi 0, %s220
      %s223 = sphi 0, %s222
      %s237 = sphi 0, %s223
      %s241 = sphi 0, %s241
      %s243 = sphi 0, %s241
      %s244 = sphi 0, %s243
      %s258 = sphi 0, %s244
      %s262 = sphi 0, %s262
      %s264 = sphi 0, %s262
      %s265 = sphi 0, %s264
      %s279 = sphi 0, %s265
      %s283 = sphi 0, %s283
      %s285 = sphi 0, %s283
      %s286 = sphi 0, %s285
      %s300 = sphi 0, %s286
      %s304 = sphi 0, %s304
      %s306 = sphi 0, %s304
      %s307 = sphi 0, %s306
      %s321 = sphi 0, %s307
      %s325 = sphi 0, %s325
      %s327 = sphi 0, %s325
      %s328 = sphi 0, %s327
      %s342 = sphi 0, %s328
      %s346 = sphi 0, %s346
      %s348 = sphi 0, %s346
      %s349 = sphi 0, %s348
      %s363 = sphi 0, %s349
      %s367 = sphi 0, %s367
      %s369 = sphi 0, %s367
      %s370 = sphi 0, %s369
      %s384 = sphi 0, %s370
      %s388 = sphi 0, %s388
      %s390 = sphi 0, %s388
      %s391 = sphi 0, %s390
      %s405 = sphi 0, %s391
      %s409 = sphi 0, %s409
      %s411 = sphi 0, %s409
      %s412 = sphi 0, %s411
      %s426 = sphi 0, %s412
      %s430 = sphi 0, %s430
      %s432 = sphi 0, %s430
      %s433 = sphi 0, %s432
      %s447 = sphi 0, %s433
      %s451 = sphi 0, %s451
      %s453 = sphi 0, %s451
      %s454 = sphi 0, %s453
      %s468 = sphi 0, %s454
      %s472 = sphi 0, %s472
      %s474 = sphi 0, %s472
      %s475 = sphi 0, %s474
      %s489 = sphi 0, %s475
      %s493 = sphi 0, %s493
      %s495 = sphi 0, %s493
      %s496 = sphi 0, %s495
      %s510 = sphi 0, %s496
      %s514 = sphi 0, %s514
      %s516 = sphi 0, %s514
      %s517 = sphi 0, %s516
      %s531 = sphi 0, %s517
      %s535 = sphi 0, %s535
      %s537 = sphi 0, %s535
      %s538 = sphi 0, %s537
      %s552 = sphi 0, %s538
      %s556 = sphi 0, %s556
      %s558 = sphi 0, %s556
      %s559 = sphi 0, %s558
      %s573 = sphi 0, %s559
      %s579 = sphi 0, %s581
      %s582 = sphi 0, %s579
      %s583 = sphi 0, %s582
      %s599 = sphi 0, %s583
    $region4: #{translate_forward.1} parent=1 // loop_header_branch
      %37 = sbr.rel (%p35) target = $region8
    $region5: #{translate_forward.1} parent=1 // loop_body
      %s39 = ssub.s32 %s34, 1
      %s40 = ssub.s32 %s34, 2
      %s41 = sadd.s32 %s34, 1
      %s42 = ssub.s32 %s34, %s41
      %p43 = scmp.eq.s32.totalorder %s42, 0
      %s45 = sadd.s32 %s44, 1
      %s46 = scalar_select %p43, %s44, %s45
      %p49 = pneg %p43
      %p50 = scmp.eq.s32.totalorder %s34, 1
      %p51 = por %p49, %p50
      %p52 = scmp.ne.s32.totalorder %s44, %s47
      %p53 = scmp.eq.s32.totalorder %s34, 0
      %p54 = por %p52, %p53
      %p55 = scmp.ne.s32.totalorder %s44, %s47
      %p56 = scmp.eq.s32.totalorder %s39, 1
      %p57 = por %p55, %p56
      %p58 = scmp.ne.s32.totalorder %s47, %s48
      %p59 = scmp.eq.s32.totalorder %s39, 0
      %p60 = por %p58, %p59
      %p61 = scmp.ne.s32.totalorder %s47, %s48
      %p62 = scmp.eq.s32.totalorder %s40, 1
      %p63 = por %p61, %p62
      %p65 = scmp.ne.s32.totalorder %s48, %s64
      %p66 = scmp.eq.s32.totalorder %s40, 0
      %p67 = por %p65, %p66
      %s68 = ssub.s32 %s34, %s41
      %p69 = scmp.eq.s32.totalorder %s68, 0
      %s71 = sadd.s32 %s70, 1
      %s72 = scalar_select %p69, %s70, %s71
      %p75 = pneg %p69
      %p76 = scmp.eq.s32.totalorder %s34, 1
      %p77 = por %p75, %p76
      %p78 = scmp.ne.s32.totalorder %s70, %s73
      %p79 = scmp.eq.s32.totalorder %s34, 0
      %p80 = por %p78, %p79
      %p81 = scmp.ne.s32.totalorder %s70, %s73
      %p82 = scmp.eq.s32.totalorder %s39, 1
      %p83 = por %p81, %p82
      %p84 = scmp.ne.s32.totalorder %s73, %s74
      %p85 = scmp.eq.s32.totalorder %s39, 0
      %p86 = por %p84, %p85
      %p87 = scmp.ne.s32.totalorder %s73, %s74
      %p88 = scmp.eq.s32.totalorder %s40, 1
      %p89 = por %p87, %p88
      %p91 = scmp.ne.s32.totalorder %s74, %s90
      %p92 = scmp.eq.s32.totalorder %s40, 0
      %p93 = por %p91, %p92
      %s95 = sadd.s32 %s94, 1
      %p98 = scmp.eq.s32.totalorder %s34, 1
      %p99 = scmp.ne.s32.totalorder %s94, %s96
      %p100 = scmp.eq.s32.totalorder %s34, 0
      %p101 = por %p99, %p100
      %p102 = scmp.ne.s32.totalorder %s94, %s96
      %p103 = scmp.eq.s32.totalorder %s39, 1
      %p104 = por %p102, %p103
      %p105 = scmp.ne.s32.totalorder %s96, %s97
      %p106 = scmp.eq.s32.totalorder %s39, 0
      %p107 = por %p105, %p106
      %p108 = scmp.ne.s32.totalorder %s96, %s97
      %p109 = scmp.eq.s32.totalorder %s40, 1
      %p110 = por %p108, %p109
      %p112 = scmp.ne.s32.totalorder %s97, %s111
      %p113 = scmp.eq.s32.totalorder %s40, 0
      %p114 = por %p112, %p113
      %s116 = sadd.s32 %s115, 1
      %p119 = scmp.eq.s32.totalorder %s34, 1
      %p120 = scmp.ne.s32.totalorder %s115, %s117
      %p121 = scmp.eq.s32.totalorder %s34, 0
      %p122 = por %p120, %p121
      %p123 = scmp.ne.s32.totalorder %s115, %s117
      %p124 = scmp.eq.s32.totalorder %s39, 1
      %p125 = por %p123, %p124
      %p126 = scmp.ne.s32.totalorder %s117, %s118
      %p127 = scmp.eq.s32.totalorder %s39, 0
      %p128 = por %p126, %p127
      %p129 = scmp.ne.s32.totalorder %s117, %s118
      %p130 = scmp.eq.s32.totalorder %s40, 1
      %p131 = por %p129, %p130
      %p133 = scmp.ne.s32.totalorder %s118, %s132
      %p134 = scmp.eq.s32.totalorder %s40, 0
      %p135 = por %p133, %p134
      %s137 = sadd.s32 %s136, 1
      %p140 = scmp.eq.s32.totalorder %s34, 1
      %p141 = scmp.ne.s32.totalorder %s136, %s138
      %p142 = scmp.eq.s32.totalorder %s34, 0
      %p143 = por %p141, %p142
      %p144 = scmp.ne.s32.totalorder %s136, %s138
      %p145 = scmp.eq.s32.totalorder %s39, 1
      %p146 = por %p144, %p145
      %p147 = scmp.ne.s32.totalorder %s138, %s139
      %p148 = scmp.eq.s32.totalorder %s39, 0
      %p149 = por %p147, %p148
      %p150 = scmp.ne.s32.totalorder %s138, %s139
      %p151 = scmp.eq.s32.totalorder %s40, 1
      %p152 = por %p150, %p151
      %p154 = scmp.ne.s32.totalorder %s139, %s153
      %p155 = scmp.eq.s32.totalorder %s40, 0
      %p156 = por %p154, %p155
      %s158 = sadd.s32 %s157, 1
      %p161 = scmp.eq.s32.totalorder %s34, 1
      %p162 = scmp.ne.s32.totalorder %s157, %s159
      %p163 = scmp.eq.s32.totalorder %s34, 0
      %p164 = por %p162, %p163
      %p165 = scmp.ne.s32.totalorder %s157, %s159
      %p166 = scmp.eq.s32.totalorder %s39, 1
      %p167 = por %p165, %p166
      %p168 = scmp.ne.s32.totalorder %s159, %s160
      %p169 = scmp.eq.s32.totalorder %s39, 0
      %p170 = por %p168, %p169
      %p171 = scmp.ne.s32.totalorder %s159, %s160
      %p172 = scmp.eq.s32.totalorder %s40, 1
      %p173 = por %p171, %p172
      %p175 = scmp.ne.s32.totalorder %s160, %s174
      %p176 = scmp.eq.s32.totalorder %s40, 0
      %p177 = por %p175, %p176
      %s179 = sadd.s32 %s178, 1
      %p182 = scmp.eq.s32.totalorder %s34, 1
      %p183 = scmp.ne.s32.totalorder %s178, %s180
      %p184 = scmp.eq.s32.totalorder %s34, 0
      %p185 = por %p183, %p184
      %p186 = scmp.ne.s32.totalorder %s178, %s180
      %p187 = scmp.eq.s32.totalorder %s39, 1
      %p188 = por %p186, %p187
      %p189 = scmp.ne.s32.totalorder %s180, %s181
      %p190 = scmp.eq.s32.totalorder %s39, 0
      %p191 = por %p189, %p190
      %p192 = scmp.ne.s32.totalorder %s180, %s181
      %p193 = scmp.eq.s32.totalorder %s40, 1
      %p194 = por %p192, %p193
      %p196 = scmp.ne.s32.totalorder %s181, %s195
      %p197 = scmp.eq.s32.totalorder %s40, 0
      %p198 = por %p196, %p197
      %s200 = sadd.s32 %s199, 1
      %p203 = scmp.eq.s32.totalorder %s34, 1
      %p204 = scmp.ne.s32.totalorder %s199, %s201
      %p205 = scmp.eq.s32.totalorder %s34, 0
      %p206 = por %p204, %p205
      %p207 = scmp.ne.s32.totalorder %s199, %s201
      %p208 = scmp.eq.s32.totalorder %s39, 1
      %p209 = por %p207, %p208
      %p210 = scmp.ne.s32.totalorder %s201, %s202
      %p211 = scmp.eq.s32.totalorder %s39, 0
      %p212 = por %p210, %p211
      %p213 = scmp.ne.s32.totalorder %s201, %s202
      %p214 = scmp.eq.s32.totalorder %s40, 1
      %p215 = por %p213, %p214
      %p217 = scmp.ne.s32.totalorder %s202, %s216
      %p218 = scmp.eq.s32.totalorder %s40, 0
      %p219 = por %p217, %p218
      %s221 = sadd.s32 %s220, 1
      %p224 = scmp.eq.s32.totalorder %s34, 1
      %p225 = scmp.ne.s32.totalorder %s220, %s222
      %p226 = scmp.eq.s32.totalorder %s34, 0
      %p227 = por %p225, %p226
      %p228 = scmp.ne.s32.totalorder %s220, %s222
      %p229 = scmp.eq.s32.totalorder %s39, 1
      %p230 = por %p228, %p229
      %p231 = scmp.ne.s32.totalorder %s222, %s223
      %p232 = scmp.eq.s32.totalorder %s39, 0
      %p233 = por %p231, %p232
      %p234 = scmp.ne.s32.totalorder %s222, %s223
      %p235 = scmp.eq.s32.totalorder %s40, 1
      %p236 = por %p234, %p235
      %p238 = scmp.ne.s32.totalorder %s223, %s237
      %p239 = scmp.eq.s32.totalorder %s40, 0
      %p240 = por %p238, %p239
      %s242 = sadd.s32 %s241, 1
      %p245 = scmp.eq.s32.totalorder %s34, 1
      %p246 = scmp.ne.s32.totalorder %s241, %s243
      %p247 = scmp.eq.s32.totalorder %s34, 0
      %p248 = por %p246, %p247
      %p249 = scmp.ne.s32.totalorder %s241, %s243
      %p250 = scmp.eq.s32.totalorder %s39, 1
      %p251 = por %p249, %p250
      %p252 = scmp.ne.s32.totalorder %s243, %s244
      %p253 = scmp.eq.s32.totalorder %s39, 0
      %p254 = por %p252, %p253
      %p255 = scmp.ne.s32.totalorder %s243, %s244
      %p256 = scmp.eq.s32.totalorder %s40, 1
      %p257 = por %p255, %p256
      %p259 = scmp.ne.s32.totalorder %s244, %s258
      %p260 = scmp.eq.s32.totalorder %s40, 0
      %p261 = por %p259, %p260
      %s263 = sadd.s32 %s262, 1
      %p266 = scmp.eq.s32.totalorder %s34, 1
      %p267 = scmp.ne.s32.totalorder %s262, %s264
      %p268 = scmp.eq.s32.totalorder %s34, 0
      %p269 = por %p267, %p268
      %p270 = scmp.ne.s32.totalorder %s262, %s264
      %p271 = scmp.eq.s32.totalorder %s39, 1
      %p272 = por %p270, %p271
      %p273 = scmp.ne.s32.totalorder %s264, %s265
      %p274 = scmp.eq.s32.totalorder %s39, 0
      %p275 = por %p273, %p274
      %p276 = scmp.ne.s32.totalorder %s264, %s265
      %p277 = scmp.eq.s32.totalorder %s40, 1
      %p278 = por %p276, %p277
      %p280 = scmp.ne.s32.totalorder %s265, %s279
      %p281 = scmp.eq.s32.totalorder %s40, 0
      %p282 = por %p280, %p281
      %s284 = sadd.s32 %s283, 1
      %p287 = scmp.eq.s32.totalorder %s34, 1
      %p288 = scmp.ne.s32.totalorder %s283, %s285
      %p289 = scmp.eq.s32.totalorder %s34, 0
      %p290 = por %p288, %p289
      %p291 = scmp.ne.s32.totalorder %s283, %s285
      %p292 = scmp.eq.s32.totalorder %s39, 1
      %p293 = por %p291, %p292
      %p294 = scmp.ne.s32.totalorder %s285, %s286
      %p295 = scmp.eq.s32.totalorder %s39, 0
      %p296 = por %p294, %p295
      %p297 = scmp.ne.s32.totalorder %s285, %s286
      %p298 = scmp.eq.s32.totalorder %s40, 1
      %p299 = por %p297, %p298
      %p301 = scmp.ne.s32.totalorder %s286, %s300
      %p302 = scmp.eq.s32.totalorder %s40, 0
      %p303 = por %p301, %p302
      %s305 = sadd.s32 %s304, 1
      %p308 = scmp.eq.s32.totalorder %s34, 1
      %p309 = scmp.ne.s32.totalorder %s304, %s306
      %p310 = scmp.eq.s32.totalorder %s34, 0
      %p311 = por %p309, %p310
      %p312 = scmp.ne.s32.totalorder %s304, %s306
      %p313 = scmp.eq.s32.totalorder %s39, 1
      %p314 = por %p312, %p313
      %p315 = scmp.ne.s32.totalorder %s306, %s307
      %p316 = scmp.eq.s32.totalorder %s39, 0
      %p317 = por %p315, %p316
      %p318 = scmp.ne.s32.totalorder %s306, %s307
      %p319 = scmp.eq.s32.totalorder %s40, 1
      %p320 = por %p318, %p319
      %p322 = scmp.ne.s32.totalorder %s307, %s321
      %p323 = scmp.eq.s32.totalorder %s40, 0
      %p324 = por %p322, %p323
      %s326 = sadd.s32 %s325, 1
      %p329 = scmp.eq.s32.totalorder %s34, 1
      %p330 = scmp.ne.s32.totalorder %s325, %s327
      %p331 = scmp.eq.s32.totalorder %s34, 0
      %p332 = por %p330, %p331
      %p333 = scmp.ne.s32.totalorder %s325, %s327
      %p334 = scmp.eq.s32.totalorder %s39, 1
      %p335 = por %p333, %p334
      %p336 = scmp.ne.s32.totalorder %s327, %s328
      %p337 = scmp.eq.s32.totalorder %s39, 0
      %p338 = por %p336, %p337
      %p339 = scmp.ne.s32.totalorder %s327, %s328
      %p340 = scmp.eq.s32.totalorder %s40, 1
      %p341 = por %p339, %p340
      %p343 = scmp.ne.s32.totalorder %s328, %s342
      %p344 = scmp.eq.s32.totalorder %s40, 0
      %p345 = por %p343, %p344
      %s347 = sadd.s32 %s346, 1
      %p350 = scmp.eq.s32.totalorder %s34, 1
      %p351 = scmp.ne.s32.totalorder %s346, %s348
      %p352 = scmp.eq.s32.totalorder %s34, 0
      %p353 = por %p351, %p352
      %p354 = scmp.ne.s32.totalorder %s346, %s348
      %p355 = scmp.eq.s32.totalorder %s39, 1
      %p356 = por %p354, %p355
      %p357 = scmp.ne.s32.totalorder %s348, %s349
      %p358 = scmp.eq.s32.totalorder %s39, 0
      %p359 = por %p357, %p358
      %p360 = scmp.ne.s32.totalorder %s348, %s349
      %p361 = scmp.eq.s32.totalorder %s40, 1
      %p362 = por %p360, %p361
      %p364 = scmp.ne.s32.totalorder %s349, %s363
      %p365 = scmp.eq.s32.totalorder %s40, 0
      %p366 = por %p364, %p365
      %s368 = sadd.s32 %s367, 1
      %p371 = scmp.eq.s32.totalorder %s34, 1
      %p372 = scmp.ne.s32.totalorder %s367, %s369
      %p373 = scmp.eq.s32.totalorder %s34, 0
      %p374 = por %p372, %p373
      %p375 = scmp.ne.s32.totalorder %s367, %s369
      %p376 = scmp.eq.s32.totalorder %s39, 1
      %p377 = por %p375, %p376
      %p378 = scmp.ne.s32.totalorder %s369, %s370
      %p379 = scmp.eq.s32.totalorder %s39, 0
      %p380 = por %p378, %p379
      %p381 = scmp.ne.s32.totalorder %s369, %s370
      %p382 = scmp.eq.s32.totalorder %s40, 1
      %p383 = por %p381, %p382
      %p385 = scmp.ne.s32.totalorder %s370, %s384
      %p386 = scmp.eq.s32.totalorder %s40, 0
      %p387 = por %p385, %p386
      %s389 = sadd.s32 %s388, 1
      %p392 = scmp.eq.s32.totalorder %s34, 1
      %p393 = scmp.ne.s32.totalorder %s388, %s390
      %p394 = scmp.eq.s32.totalorder %s34, 0
      %p395 = por %p393, %p394
      %p396 = scmp.ne.s32.totalorder %s388, %s390
      %p397 = scmp.eq.s32.totalorder %s39, 1
      %p398 = por %p396, %p397
      %p399 = scmp.ne.s32.totalorder %s390, %s391
      %p400 = scmp.eq.s32.totalorder %s39, 0
      %p401 = por %p399, %p400
      %p402 = scmp.ne.s32.totalorder %s390, %s391
      %p403 = scmp.eq.s32.totalorder %s40, 1
      %p404 = por %p402, %p403
      %p406 = scmp.ne.s32.totalorder %s391, %s405
      %p407 = scmp.eq.s32.totalorder %s40, 0
      %p408 = por %p406, %p407
      %s410 = sadd.s32 %s409, 1
      %p413 = scmp.eq.s32.totalorder %s34, 1
      %p414 = scmp.ne.s32.totalorder %s409, %s411
      %p415 = scmp.eq.s32.totalorder %s34, 0
      %p416 = por %p414, %p415
      %p417 = scmp.ne.s32.totalorder %s409, %s411
      %p418 = scmp.eq.s32.totalorder %s39, 1
      %p419 = por %p417, %p418
      %p420 = scmp.ne.s32.totalorder %s411, %s412
      %p421 = scmp.eq.s32.totalorder %s39, 0
      %p422 = por %p420, %p421
      %p423 = scmp.ne.s32.totalorder %s411, %s412
      %p424 = scmp.eq.s32.totalorder %s40, 1
      %p425 = por %p423, %p424
      %p427 = scmp.ne.s32.totalorder %s412, %s426
      %p428 = scmp.eq.s32.totalorder %s40, 0
      %p429 = por %p427, %p428
      %s431 = sadd.s32 %s430, 1
      %p434 = scmp.eq.s32.totalorder %s34, 1
      %p435 = scmp.ne.s32.totalorder %s430, %s432
      %p436 = scmp.eq.s32.totalorder %s34, 0
      %p437 = por %p435, %p436
      %p438 = scmp.ne.s32.totalorder %s430, %s432
      %p439 = scmp.eq.s32.totalorder %s39, 1
      %p440 = por %p438, %p439
      %p441 = scmp.ne.s32.totalorder %s432, %s433
      %p442 = scmp.eq.s32.totalorder %s39, 0
      %p443 = por %p441, %p442
      %p444 = scmp.ne.s32.totalorder %s432, %s433
      %p445 = scmp.eq.s32.totalorder %s40, 1
      %p446 = por %p444, %p445
      %p448 = scmp.ne.s32.totalorder %s433, %s447
      %p449 = scmp.eq.s32.totalorder %s40, 0
      %p450 = por %p448, %p449
      %s452 = sadd.s32 %s451, 1
      %p455 = scmp.eq.s32.totalorder %s34, 1
      %p456 = scmp.ne.s32.totalorder %s451, %s453
      %p457 = scmp.eq.s32.totalorder %s34, 0
      %p458 = por %p456, %p457
      %p459 = scmp.ne.s32.totalorder %s451, %s453
      %p460 = scmp.eq.s32.totalorder %s39, 1
      %p461 = por %p459, %p460
      %p462 = scmp.ne.s32.totalorder %s453, %s454
      %p463 = scmp.eq.s32.totalorder %s39, 0
      %p464 = por %p462, %p463
      %p465 = scmp.ne.s32.totalorder %s453, %s454
      %p466 = scmp.eq.s32.totalorder %s40, 1
      %p467 = por %p465, %p466
      %p469 = scmp.ne.s32.totalorder %s454, %s468
      %p470 = scmp.eq.s32.totalorder %s40, 0
      %p471 = por %p469, %p470
      %s473 = sadd.s32 %s472, 1
      %p476 = scmp.eq.s32.totalorder %s34, 1
      %p477 = scmp.ne.s32.totalorder %s472, %s474
      %p478 = scmp.eq.s32.totalorder %s34, 0
      %p479 = por %p477, %p478
      %p480 = scmp.ne.s32.totalorder %s472, %s474
      %p481 = scmp.eq.s32.totalorder %s39, 1
      %p482 = por %p480, %p481
      %p483 = scmp.ne.s32.totalorder %s474, %s475
      %p484 = scmp.eq.s32.totalorder %s39, 0
      %p485 = por %p483, %p484
      %p486 = scmp.ne.s32.totalorder %s474, %s475
      %p487 = scmp.eq.s32.totalorder %s40, 1
      %p488 = por %p486, %p487
      %p490 = scmp.ne.s32.totalorder %s475, %s489
      %p491 = scmp.eq.s32.totalorder %s40, 0
      %p492 = por %p490, %p491
      %s494 = sadd.s32 %s493, 1
      %p497 = scmp.eq.s32.totalorder %s34, 1
      %p498 = scmp.ne.s32.totalorder %s493, %s495
      %p499 = scmp.eq.s32.totalorder %s34, 0
      %p500 = por %p498, %p499
      %p501 = scmp.ne.s32.totalorder %s493, %s495
      %p502 = scmp.eq.s32.totalorder %s39, 1
      %p503 = por %p501, %p502
      %p504 = scmp.ne.s32.totalorder %s495, %s496
      %p505 = scmp.eq.s32.totalorder %s39, 0
      %p506 = por %p504, %p505
      %p507 = scmp.ne.s32.totalorder %s495, %s496
      %p508 = scmp.eq.s32.totalorder %s40, 1
      %p509 = por %p507, %p508
      %p511 = scmp.ne.s32.totalorder %s496, %s510
      %p512 = scmp.eq.s32.totalorder %s40, 0
      %p513 = por %p511, %p512
      %s515 = sadd.s32 %s514, 1
      %p518 = scmp.eq.s32.totalorder %s34, 1
      %p519 = scmp.ne.s32.totalorder %s514, %s516
      %p520 = scmp.eq.s32.totalorder %s34, 0
      %p521 = por %p519, %p520
      %p522 = scmp.ne.s32.totalorder %s514, %s516
      %p523 = scmp.eq.s32.totalorder %s39, 1
      %p524 = por %p522, %p523
      %p525 = scmp.ne.s32.totalorder %s516, %s517
      %p526 = scmp.eq.s32.totalorder %s39, 0
      %p527 = por %p525, %p526
      %p528 = scmp.ne.s32.totalorder %s516, %s517
      %p529 = scmp.eq.s32.totalorder %s40, 1
      %p530 = por %p528, %p529
      %p532 = scmp.ne.s32.totalorder %s517, %s531
      %p533 = scmp.eq.s32.totalorder %s40, 0
      %p534 = por %p532, %p533
      %s536 = sadd.s32 %s535, 1
      %p539 = scmp.eq.s32.totalorder %s34, 1
      %p540 = scmp.ne.s32.totalorder %s535, %s537
      %p541 = scmp.eq.s32.totalorder %s34, 0
      %p542 = por %p540, %p541
      %p543 = scmp.ne.s32.totalorder %s535, %s537
      %p544 = scmp.eq.s32.totalorder %s39, 1
      %p545 = por %p543, %p544
      %p546 = scmp.ne.s32.totalorder %s537, %s538
      %p547 = scmp.eq.s32.totalorder %s39, 0
      %p548 = por %p546, %p547
      %p549 = scmp.ne.s32.totalorder %s537, %s538
      %p550 = scmp.eq.s32.totalorder %s40, 1
      %p551 = por %p549, %p550
      %p553 = scmp.ne.s32.totalorder %s538, %s552
      %p554 = scmp.eq.s32.totalorder %s40, 0
      %p555 = por %p553, %p554
      %s557 = sadd.s32 %s556, 1
      %p560 = scmp.eq.s32.totalorder %s34, 1
      %p561 = scmp.ne.s32.totalorder %s556, %s558
      %p562 = scmp.eq.s32.totalorder %s34, 0
      %p563 = por %p561, %p562
      %p564 = scmp.ne.s32.totalorder %s556, %s558
      %p565 = scmp.eq.s32.totalorder %s39, 1
      %p566 = por %p564, %p565
      %p567 = scmp.ne.s32.totalorder %s558, %s559
      %p568 = scmp.eq.s32.totalorder %s39, 0
      %p569 = por %p567, %p568
      %p570 = scmp.ne.s32.totalorder %s558, %s559
      %p571 = scmp.eq.s32.totalorder %s40, 1
      %p572 = por %p570, %p571
      %p574 = scmp.ne.s32.totalorder %s559, %s573
      %p575 = scmp.eq.s32.totalorder %s40, 0
      %p576 = por %p574, %p575
      %s577 = ssub.s32 %s34, %s41
      %p578 = scmp.eq.s32.totalorder %s577, 0
      %s580 = sadd.s32 %s579, 1
      %s581 = scalar_select %p578, %s579, %s580
      %p584 = pneg %p578
      %p585 = scmp.eq.s32.totalorder %s34, 1
      %p586 = por %p584, %p585
      %p587 = scmp.ne.s32.totalorder %s579, %s582
      %p588 = scmp.eq.s32.totalorder %s34, 0
      %p589 = por %p587, %p588
      %p590 = scmp.ne.s32.totalorder %s579, %s582
      %p591 = scmp.eq.s32.totalorder %s39, 1
      %p592 = por %p590, %p591
      %p593 = scmp.ne.s32.totalorder %s582, %s583
      %p594 = scmp.eq.s32.totalorder %s39, 0
      %p595 = por %p593, %p594
      %p596 = scmp.ne.s32.totalorder %s582, %s583
      %p597 = scmp.eq.s32.totalorder %s40, 1
      %p598 = por %p596, %p597
      %p600 = scmp.ne.s32.totalorder %s583, %s599
      %p601 = scmp.eq.s32.totalorder %s40, 0
      %p602 = por %p600, %p601
      %p603 = scmp.le.s32.totalorder 1, %s34
      %p604 = scmp.lt.s32.totalorder %s34, 3
      %p605 = pnand %p603, %p604
      %p606 = pneg %p605
      // Predicated region
      $region9: #{translate_forward.1} parent=5 // pred_check
        _
      $region10: #{translate_forward.1} parent=5 // pred_check_branch
        %608 = sbr.rel (%p605) target = $region12
      $region11: #{translate_forward.1} parent=5 // pred_region
        %s609 = ssub.s32 %s34, 1
        // Predicated region
        $region13: #{translate_forward.1} parent=11 // pred_check
          %p610 = pneg %p107
        $region14: #{translate_forward.1} parent=11 // pred_check_branch
          %612 = sbr.rel (%p610) target = $region16
        $region15: #{translate_forward.1} parent=11 // pred_region
          _
        $region16: #{translate_forward.1} parent=11 // pred_fallthru
          _
        // Predicated region
        $region17: #{translate_forward.1} parent=11 // pred_check
          %p613 = pneg %p128
        $region18: #{translate_forward.1} parent=11 // pred_check_branch
          %615 = sbr.rel (%p613) target = $region20
        $region19: #{translate_forward.1} parent=11 // pred_region
          _
        $region20: #{translate_forward.1} parent=11 // pred_fallthru
          _
        // Predicated region
        $region21: #{translate_forward.1} parent=11 // pred_check
          %p616 = pneg %p149
        $region22: #{translate_forward.1} parent=11 // pred_check_branch
          %618 = sbr.rel (%p616) target = $region24
        $region23: #{translate_forward.1} parent=11 // pred_region
          _
        $region24: #{translate_forward.1} parent=11 // pred_fallthru
          _
        // Predicated region
        $region25: #{translate_forward.1} parent=11 // pred_check
          %p619 = pneg %p170
        $region26: #{translate_forward.1} parent=11 // pred_check_branch
          %621 = sbr.rel (%p619) target = $region28
        $region27: #{translate_forward.1} parent=11 // pred_region
          _
        $region28: #{translate_forward.1} parent=11 // pred_fallthru
          _
        // Predicated region
        $region29: #{translate_forward.1} parent=11 // pred_check
          %p622 = pneg %p191
        $region30: #{translate_forward.1} parent=11 // pred_check_branch
          %624 = sbr.rel (%p622) target = $region32
        $region31: #{translate_forward.1} parent=11 // pred_region
          _
        $region32: #{translate_forward.1} parent=11 // pred_fallthru
          _
        // Predicated region
        $region33: #{translate_forward.1} parent=11 // pred_check
          %p625 = pneg %p212
        $region34: #{translate_forward.1} parent=11 // pred_check_branch
          %627 = sbr.rel (%p625) target = $region36
        $region35: #{translate_forward.1} parent=11 // pred_region
          _
        $region36: #{translate_forward.1} parent=11 // pred_fallthru
          _
        // Predicated region
        $region37: #{translate_forward.1} parent=11 // pred_check
          %p628 = pneg %p233
        $region38: #{translate_forward.1} parent=11 // pred_check_branch
          %630 = sbr.rel (%p628) target = $region40
        $region39: #{translate_forward.1} parent=11 // pred_region
          _
        $region40: #{translate_forward.1} parent=11 // pred_fallthru
          _
        // Predicated region
        $region41: #{translate_forward.1} parent=11 // pred_check
          %p631 = pneg %p254
        $region42: #{translate_forward.1} parent=11 // pred_check_branch
          %633 = sbr.rel (%p631) target = $region44
        $region43: #{translate_forward.1} parent=11 // pred_region
          _
        $region44: #{translate_forward.1} parent=11 // pred_fallthru
          _
        // Predicated region
        $region45: #{translate_forward.1} parent=11 // pred_check
          %p634 = pneg %p275
        $region46: #{translate_forward.1} parent=11 // pred_check_branch
          %636 = sbr.rel (%p634) target = $region48
        $region47: #{translate_forward.1} parent=11 // pred_region
          _
        $region48: #{translate_forward.1} parent=11 // pred_fallthru
          _
        // Predicated region
        $region49: #{translate_forward.1} parent=11 // pred_check
          %p637 = pneg %p296
        $region50: #{translate_forward.1} parent=11 // pred_check_branch
          %639 = sbr.rel (%p637) target = $region52
        $region51: #{translate_forward.1} parent=11 // pred_region
          _
        $region52: #{translate_forward.1} parent=11 // pred_fallthru
          _
        // Predicated region
        $region53: #{translate_forward.1} parent=11 // pred_check
          %p640 = pneg %p317
        $region54: #{translate_forward.1} parent=11 // pred_check_branch
          %642 = sbr.rel (%p640) target = $region56
        $region55: #{translate_forward.1} parent=11 // pred_region
          _
        $region56: #{translate_forward.1} parent=11 // pred_fallthru
          _
        // Predicated region
        $region57: #{translate_forward.1} parent=11 // pred_check
          %p643 = pneg %p338
        $region58: #{translate_forward.1} parent=11 // pred_check_branch
          %645 = sbr.rel (%p643) target = $region60
        $region59: #{translate_forward.1} parent=11 // pred_region
          _
        $region60: #{translate_forward.1} parent=11 // pred_fallthru
          _
        // Predicated region
        $region61: #{translate_forward.1} parent=11 // pred_check
          %p646 = pneg %p359
        $region62: #{translate_forward.1} parent=11 // pred_check_branch
          %648 = sbr.rel (%p646) target = $region64
        $region63: #{translate_forward.1} parent=11 // pred_region
          _
        $region64: #{translate_forward.1} parent=11 // pred_fallthru
          _
        // Predicated region
        $region65: #{translate_forward.1} parent=11 // pred_check
          %p649 = pneg %p380
        $region66: #{translate_forward.1} parent=11 // pred_check_branch
          %651 = sbr.rel (%p649) target = $region68
        $region67: #{translate_forward.1} parent=11 // pred_region
          _
        $region68: #{translate_forward.1} parent=11 // pred_fallthru
          _
        // Predicated region
        $region69: #{translate_forward.1} parent=11 // pred_check
          %p652 = pneg %p401
        $region70: #{translate_forward.1} parent=11 // pred_check_branch
          %654 = sbr.rel (%p652) target = $region72
        $region71: #{translate_forward.1} parent=11 // pred_region
          _
        $region72: #{translate_forward.1} parent=11 // pred_fallthru
          _
        // Predicated region
        $region73: #{translate_forward.1} parent=11 // pred_check
          %p655 = pneg %p422
        $region74: #{translate_forward.1} parent=11 // pred_check_branch
          %657 = sbr.rel (%p655) target = $region76
        $region75: #{translate_forward.1} parent=11 // pred_region
          _
        $region76: #{translate_forward.1} parent=11 // pred_fallthru
          _
        // Predicated region
        $region77: #{translate_forward.1} parent=11 // pred_check
          %p658 = pneg %p443
        $region78: #{translate_forward.1} parent=11 // pred_check_branch
          %660 = sbr.rel (%p658) target = $region80
        $region79: #{translate_forward.1} parent=11 // pred_region
          _
        $region80: #{translate_forward.1} parent=11 // pred_fallthru
          _
        // Predicated region
        $region81: #{translate_forward.1} parent=11 // pred_check
          %p661 = pneg %p464
        $region82: #{translate_forward.1} parent=11 // pred_check_branch
          %663 = sbr.rel (%p661) target = $region84
        $region83: #{translate_forward.1} parent=11 // pred_region
          _
        $region84: #{translate_forward.1} parent=11 // pred_fallthru
          _
        // Predicated region
        $region85: #{translate_forward.1} parent=11 // pred_check
          %p664 = pneg %p485
        $region86: #{translate_forward.1} parent=11 // pred_check_branch
          %666 = sbr.rel (%p664) target = $region88
        $region87: #{translate_forward.1} parent=11 // pred_region
          _
        $region88: #{translate_forward.1} parent=11 // pred_fallthru
          _
        // Predicated region
        $region89: #{translate_forward.1} parent=11 // pred_check
          %p667 = pneg %p506
        $region90: #{translate_forward.1} parent=11 // pred_check_branch
          %669 = sbr.rel (%p667) target = $region92
        $region91: #{translate_forward.1} parent=11 // pred_region
          _
        $region92: #{translate_forward.1} parent=11 // pred_fallthru
          _
        // Predicated region
        $region93: #{translate_forward.1} parent=11 // pred_check
          %p670 = pneg %p527
        $region94: #{translate_forward.1} parent=11 // pred_check_branch
          %672 = sbr.rel (%p670) target = $region96
        $region95: #{translate_forward.1} parent=11 // pred_region
          _
        $region96: #{translate_forward.1} parent=11 // pred_fallthru
          _
        // Predicated region
        $region97: #{translate_forward.1} parent=11 // pred_check
          %p673 = pneg %p548
        $region98: #{translate_forward.1} parent=11 // pred_check_branch
          %675 = sbr.rel (%p673) target = $region100
        $region99: #{translate_forward.1} parent=11 // pred_region
          _
        $region100: #{translate_forward.1} parent=11 // pred_fallthru
          _
        // Predicated region
        $region101: #{translate_forward.1} parent=11 // pred_check
          %p676 = pneg %p569
        $region102: #{translate_forward.1} parent=11 // pred_check_branch
          %678 = sbr.rel (%p676) target = $region104
        $region103: #{translate_forward.1} parent=11 // pred_region
          _
        $region104: #{translate_forward.1} parent=11 // pred_fallthru
          _
      $region12: #{translate_forward.1} parent=5 // pred_fallthru
        _
      %p679 = scmp.lt.s32.totalorder %s34, 2
      // Predicated region
      $region105: #{translate_forward.1} parent=5 // pred_check
        %p680 = pneg %p679
      $region106: #{translate_forward.1} parent=5 // pred_check_branch
        %682 = sbr.rel (%p680) target = $region108
      $region107: #{translate_forward.1} parent=5 // pred_region
        // Predicated region
        $region109: #{translate_forward.1} parent=107 // pred_check
          %p683 = pneg %p54
        $region110: #{translate_forward.1} parent=107 // pred_check_branch
          %685 = sbr.rel (%p683) target = $region112
        $region111: #{translate_forward.1} parent=107 // pred_region
          %p686 = scmp.lt.s32.totalorder %s34, 1
          %s687 = scalar_select %p686, %s34, 1
          %s688 = smul.addr %s687, 8
          %s689 = scalar_lea.vmem %s0, %s688
        $region112: #{translate_forward.1} parent=107 // pred_fallthru
          _
        // Predicated region
        $region113: #{translate_forward.1} parent=107 // pred_check
          %p690 = pneg %p80
        $region114: #{translate_forward.1} parent=107 // pred_check_branch
          %692 = sbr.rel (%p690) target = $region116
        $region115: #{translate_forward.1} parent=107 // pred_region
          %p693 = scmp.lt.s32.totalorder %s34, 1
          %s694 = scalar_select %p693, %s34, 1
          %s695 = smul.addr %s694, 8
          %s696 = scalar_lea.vmem %s1, %s695
        $region116: #{translate_forward.1} parent=107 // pred_fallthru
          _
      $region108: #{translate_forward.1} parent=5 // pred_fallthru
        _
      %p697 = scmp.le.s32.totalorder 1, %s34
      %p698 = scmp.lt.s32.totalorder %s34, 3
      %p699 = pnand %p697, %p698
      %p700 = pneg %p699
      // Predicated region
      $region117: #{translate_forward.1} parent=5 // pred_check
        _
      $region118: #{translate_forward.1} parent=5 // pred_check_branch
        %702 = sbr.rel (%p699) target = $region120
      $region119: #{translate_forward.1} parent=5 // pred_region
        %s703 = ssub.s32 %s34, 1
        %p704 = scmp.lt.s32.totalorder %s39, 1
        %s705 = scalar_select %p704, %s39, 1
        %s706 = smul.addr %s705, 8
        %s707 = scalar_lea.vmem %s0, %s706
        %p708 = pneg %p60
        %p709 = pneg %p57
        %p710 = scmp.lt.s32.totalorder %s39, 1
        %s711 = scalar_select %p710, %s39, 1
        %s712 = smul.addr %s711, 8
        %s713 = scalar_lea.vmem %s1, %s712
        %p714 = pneg %p86
        %p715 = pneg %p83
        %p716 = pneg %p107
        %p717 = pneg %p104
        %p718 = pneg %p128
        %p719 = pneg %p125
        %p720 = pneg %p149
        %p721 = pneg %p146
        %p722 = pneg %p170
        %p723 = pneg %p167
        %p724 = pneg %p191
        %p725 = pneg %p188
        %p726 = pneg %p212
        %p727 = pneg %p209
        %p728 = pneg %p233
        %p729 = pneg %p230
        %p730 = pneg %p254
        %p731 = pneg %p251
        %p732 = pneg %p275
        %p733 = pneg %p272
        %p734 = pneg %p296
        %p735 = pneg %p293
        %p736 = pneg %p317
        %p737 = pneg %p314
        %p738 = pneg %p338
        %p739 = pneg %p335
        %p740 = pneg %p359
        %p741 = pneg %p356
        %p742 = pneg %p380
        %p743 = pneg %p377
        %p744 = pneg %p401
        %p745 = pneg %p398
        %p746 = pneg %p422
        %p747 = pneg %p419
        %p748 = pneg %p443
        %p749 = pneg %p440
        %p750 = pneg %p464
        %p751 = pneg %p461
        %p752 = pneg %p485
        %p753 = pneg %p482
        %p754 = pneg %p506
        %p755 = pneg %p503
        %p756 = pneg %p527
        %p757 = pneg %p524
        %p758 = pneg %p548
        %p759 = pneg %p545
        %p760 = pneg %p569
        %p761 = pneg %p566
        %p762 = pneg %p595
        %p763 = pneg %p592
        %s764 = sand.u32 %s582, 1
        %s765 = scalar_lea.sflag [#allocation3], %s764
        %s766 = sand.u32 %s582, 1
        %s767 = smul.addr %s766, 8
        %s768 = scalar_lea.vmem [#allocation2], %s767
        %p769 = scmp.lt.s32.totalorder %s39, 1
        %s770 = scalar_select %p769, %s39, 1
        %s771 = smul.addr %s770, 8
        %s772 = scalar_lea.vmem %s0, %s771
        %p773 = scmp.lt.s32.totalorder %s39, 1
        %s774 = scalar_select %p773, %s39, 1
        %s775 = smul.addr %s774, 8
        %s776 = scalar_lea.vmem %s1, %s775
        %v777 = vld [vmem:[%s772] sm:$0xff]
        %v778 = vld [vmem:[%s2] sm:$0xff]
        %v779 = vld [vmem:[%s2 + $0x8] sm:$0xff]
        %v780 = vld [vmem:[%s2 + $0x10] sm:$0xff]
        %v781 = vld [vmem:[%s3] sm:$0x1]
        %v783 = vlaneseq
        %v784 = vshrl.u32 %v783, 7
        %v785 = vsub.s32 0, %v784
        %v786 = vrot.slane %v781, %v785
        %vm788 = vcmask 195584
        %v790 = vsel %vm788, %v777, 0
        %792 = vmatprep.subr.mxu0 0.0
        %793 = vmatpush1.msra.mxu0 0.0
        %794 = vmatprep.subr.mxu0 0.0
        %795 = vmatpush1.msra.mxu0 0.0
        %796 = vmatprep.subr.mxu0 0.0
        %797 = vmatpush1.msra.mxu0 0.0
        %798 = vmatprep.subr.mxu0 0.0
        %799 = vmatpush1.msra.mxu0 0.0
        %800 = vmatprep.subr.mxu0 0.0
        %801 = vmatpush1.msra.mxu0 0.0
        %802 = vmatprep.subr.mxu0 0.0
        %803 = vmatpush1.msra.mxu0 0.0
        %804 = vmatprep.subr.mxu0 0.0
        %805 = vmatpush1.msra.mxu0 0.0
        %806 = vmatprep.subr.mxu0 0.0
        %807 = vmatpush1.msra.mxu0 0.0
        %808 = vmatprep.subr.mxu0 0.0
        %809 = vmatpush1.msra.mxu0 0.0
        %810 = vmatprep.subr.mxu0 0.0
        %811 = vmatpush1.msra.mxu0 0.0
        %812 = vmatprep.subr.mxu0 0.0
        %813 = vmatpush1.msra.mxu0 0.0
        %814 = vmatprep.subr.mxu0 0.0
        %815 = vmatpush1.msra.mxu0 0.0
        %816 = vmatprep.subr.mxu0 0.0
        %817 = vmatpush1.msra.mxu0 0.0
        %818 = vmatprep.subr.mxu0 0.0
        %819 = vmatpush1.msra.mxu0 %v780
        %820 = vmatprep.subr.mxu0 0.0
        %821 = vmatpush1.msra.mxu0 %v779
        %822 = vmatprep.subr.mxu0 0.0
        %823 = vmatpush1.msra.mxu0 %v778
        %824 = vmatprep.subr.mxu0 0.0
        %825 = vmatpush2.msra.mxu0 0.0
        %826 = vmatprep.subr.mxu0 0.0
        %827 = vmatpush2.msra.mxu0 0.0
        %828 = vmatprep.subr.mxu0 0.0
        %829 = vmatpush2.msra.mxu0 0.0
        %830 = vmatprep.subr.mxu0 0.0
        %831 = vmatpush2.msra.mxu0 0.0
        %832 = vmatprep.subr.mxu0 0.0
        %833 = vmatpush2.msra.mxu0 0.0
        %834 = vmatprep.subr.mxu0 0.0
        %835 = vmatpush2.msra.mxu0 0.0
        %836 = vmatprep.subr.mxu0 0.0
        %837 = vmatpush2.msra.mxu0 0.0
        %838 = vmatprep.subr.mxu0 0.0
        %839 = vmatpush2.msra.mxu0 0.0
        %840 = vmatprep.subr.mxu0 0.0
        %841 = vmatpush2.msra.mxu0 0.0
        %842 = vmatprep.subr.mxu0 0.0
        %843 = vmatpush2.msra.mxu0 0.0
        %844 = vmatprep.subr.mxu0 0.0
        %845 = vmatpush2.msra.mxu0 0.0
        %846 = vmatprep.subr.mxu0 0.0
        %847 = vmatpush2.msra.mxu0 0.0
        %848 = vmatprep.subr.mxu0 0.0
        %849 = vmatpush2.msra.mxu0 0.0
        %850 = vmatprep.subr.mxu0 0.0
        %851 = vmatpush2.msra.mxu0 0.0
        %852 = vmatprep.subr.mxu0 0.0
        %853 = vmatpush2.msra.mxu0 0.0
        %854 = vmatprep.subr.mxu0 0.0
        %855 = vmatpush2.msra.mxu0 0.0
        %856 = vmatprep.mubr.f32.mxu0 0.0
        %857 = vmatmul.mubr.f32.gmra.mxu0 %v790
        %v858 = vpop.f32.mrf.mxu0
        %v859 = vadd.f32 %v786, %v858
        %v860 = vpop.f32.mrf.mxu0
        %861 = vdwg.mxu0
        %v862 = vmax.f32 %v859, 0.0
        %v863 = vld [vmem:[%s776] sm:$0xff]
        %v864 = vld [vmem:[%s4] sm:$0xff]
        %v865 = vld [vmem:[%s4 + $0x8] sm:$0xff]
        %v866 = vld [vmem:[%s5] sm:$0x1]
        %v868 = vlaneseq
        %v869 = vshrl.u32 %v868, 7
        %v870 = vsub.s32 0, %v869
        %v871 = vrot.slane %v866, %v870
        %vm873 = vcmask 130048
        %v875 = vsel %vm873, %v863, 0
        %877 = vmatprep.subr.mxu0 0.0
        %878 = vmatpush1.msra.mxu0 0.0
        %879 = vmatprep.subr.mxu0 0.0
        %880 = vmatpush1.msra.mxu0 0.0
        %881 = vmatprep.subr.mxu0 0.0
        %882 = vmatpush1.msra.mxu0 0.0
        %883 = vmatprep.subr.mxu0 0.0
        %884 = vmatpush1.msra.mxu0 0.0
        %885 = vmatprep.subr.mxu0 0.0
        %886 = vmatpush1.msra.mxu0 0.0
        %887 = vmatprep.subr.mxu0 0.0
        %888 = vmatpush1.msra.mxu0 0.0
        %889 = vmatprep.subr.mxu0 0.0
        %890 = vmatpush1.msra.mxu0 0.0
        %891 = vmatprep.subr.mxu0 0.0
        %892 = vmatpush1.msra.mxu0 0.0
        %893 = vmatprep.subr.mxu0 0.0
        %894 = vmatpush1.msra.mxu0 0.0
        %895 = vmatprep.subr.mxu0 0.0
        %896 = vmatpush1.msra.mxu0 0.0
        %897 = vmatprep.subr.mxu0 0.0
        %898 = vmatpush1.msra.mxu0 0.0
        %899 = vmatprep.subr.mxu0 0.0
        %900 = vmatpush1.msra.mxu0 0.0
        %901 = vmatprep.subr.mxu0 0.0
        %902 = vmatpush1.msra.mxu0 0.0
        %903 = vmatprep.subr.mxu0 0.0
        %904 = vmatpush1.msra.mxu0 0.0
        %905 = vmatprep.subr.mxu0 0.0
        %906 = vmatpush1.msra.mxu0 %v865
        %907 = vmatprep.subr.mxu0 0.0
        %908 = vmatpush1.msra.mxu0 %v864
        %909 = vmatprep.subr.mxu0 0.0
        %910 = vmatpush2.msra.mxu0 0.0
        %911 = vmatprep.subr.mxu0 0.0
        %912 = vmatpush2.msra.mxu0 0.0
        %913 = vmatprep.subr.mxu0 0.0
        %914 = vmatpush2.msra.mxu0 0.0
        %915 = vmatprep.subr.mxu0 0.0
        %916 = vmatpush2.msra.mxu0 0.0
        %917 = vmatprep.subr.mxu0 0.0
        %918 = vmatpush2.msra.mxu0 0.0
        %919 = vmatprep.subr.mxu0 0.0
        %920 = vmatpush2.msra.mxu0 0.0
        %921 = vmatprep.subr.mxu0 0.0
        %922 = vmatpush2.msra.mxu0 0.0
        %923 = vmatprep.subr.mxu0 0.0
        %924 = vmatpush2.msra.mxu0 0.0
        %925 = vmatprep.subr.mxu0 0.0
        %926 = vmatpush2.msra.mxu0 0.0
        %927 = vmatprep.subr.mxu0 0.0
        %928 = vmatpush2.msra.mxu0 0.0
        %929 = vmatprep.subr.mxu0 0.0
        %930 = vmatpush2.msra.mxu0 0.0
        %931 = vmatprep.subr.mxu0 0.0
        %932 = vmatpush2.msra.mxu0 0.0
        %933 = vmatprep.subr.mxu0 0.0
        %934 = vmatpush2.msra.mxu0 0.0
        %935 = vmatprep.subr.mxu0 0.0
        %936 = vmatpush2.msra.mxu0 0.0
        %937 = vmatprep.subr.mxu0 0.0
        %938 = vmatpush2.msra.mxu0 0.0
        %939 = vmatprep.subr.mxu0 0.0
        %940 = vmatpush2.msra.mxu0 0.0
        %941 = vmatprep.mubr.f32.mxu0 0.0
        %942 = vmatmul.mubr.f32.gmra.mxu0 %v875
        %v943 = vpop.f32.mrf.mxu0
        %v944 = vadd.f32 %v871, %v943
        %v945 = vpop.f32.mrf.mxu0
        %946 = vdwg.mxu0
        %v947 = vmax.f32 %v944, 0.0
        %v948 = vrot.slane %v947, 7
        %v949 = vlaneseq
        %v950 = vshrl.u32 %v949, 7
        %vm951 = vcmp.eq.s32.totalorder %v950, 0
        %v952 = vld [vmem:[%s6] sm:$0x1]
        %v954 = vlaneseq
        %v955 = vshrl.u32 %v954, 7
        %v956 = vsub.s32 0, %v955
        %v957 = vrot.slane %v952, %v956
        %v959 = vsel %vm951, %v957, %v948
        %v960 = vld [vmem:[%s7] sm:$0xff]
        %v961 = vld [vmem:[%s7 + $0x8] sm:$0xff]
        %v962 = vadd.f32 %v862, %v960
        %v963 = vadd.f32 %v959, %v961
        %v964 = vmul.f32 %v962, 5.656854
        %v965 = vmul.f32 %v963, 5.656854
        %v966 = vld [vmem:[%s8] sm:$0xff]
        %v967 = vld [vmem:[%s8 + $0x8] sm:$0xff]
        %v968 = vld [vmem:[%s13] sm:$0x1]
        %v969 = vld [vmem:[%s14] sm:$0x1]
        %vm970 = vcmask 261120
        %v971 = vsel %vm970, %v964, 0.0
        %972 = vadd.xlane.f32.xlu0 %v971
        %v973 = vpop.xlane.xlu0 %972
        %v974 = vsel %vm970, %v965, 0.0
        %975 = vadd.xlane.f32.xlu0 %v974
        %v976 = vpop.xlane.xlu0 %975
        %v977 = vrcp.pop 32.0
        %v978 = vmul.f32 %v973, %v977
        %v979 = vmul.f32 %v976, %v977
        %v980 = vsub.f32 %v964, %v978
        %v981 = vsub.f32 %v965, %v979
        %v982 = vmul.f32 %v980, %v980
        %v983 = vmul.f32 %v981, %v981
        %v984 = vsel %vm970, %v982, 0.0
        %985 = vadd.xlane.f32.xlu0 %v984
        %v986 = vpop.xlane.xlu0 %985
        %v987 = vsel %vm970, %v983, 0.0
        %988 = vadd.xlane.f32.xlu0 %v987
        %v989 = vpop.xlane.xlu0 %988
        %v990 = vmul.f32 %v986, %v977
        %v991 = vmul.f32 %v989, %v977
        %v992 = vadd.f32 %v990, 1e-05
        %v993 = vadd.f32 %v991, 1e-05
        %v994 = vrsqrt.pop %v992
        %v995 = vrsqrt.pop %v993
        %v996 = vmul.f32 %v980, %v994
        %v997 = vmul.f32 %v981, %v995
        %v999 = vlaneseq
        %v1000 = vshrl.u32 %v999, 7
        %v1001 = vsub.s32 0, %v1000
        %v1002 = vrot.slane %v968, %v1001
        %v1004 = vmul.f32 %v996, %v1002
        %v1005 = vmul.f32 %v997, %v1002
        %v1007 = vlaneseq
        %v1008 = vshrl.u32 %v1007, 7
        %v1009 = vsub.s32 0, %v1008
        %v1010 = vrot.slane %v969, %v1009
        %v1012 = vadd.f32 %v1004, %v1010
        %v1013 = vadd.f32 %v1005, %v1010
        %v1014 = vld [vmem:[%s9] sm:$0xff]
        %v1015 = vld [vmem:[%s9 + $0x8] sm:$0xff]
        %v1016 = vld [vmem:[%s9 + $0x10] sm:$0xff]
        %v1017 = vld [vmem:[%s9 + $0x18] sm:$0xff]
        %v1018 = vld [vmem:[%s10] sm:$0x1]
        %v1020 = vlaneseq
        %v1021 = vshrl.u32 %v1020, 7
        %v1022 = vsub.s32 0, %v1021
        %v1023 = vrot.slane %v1018, %v1022
        %v1026 = vsel %vm970, %v1012, 0
        %v1029 = vsel %vm970, %v1013, 0
        %1031 = vmatprep.subr.mxu0 0.0
        %1032 = vmatpush1.msra.mxu0 0.0
        %1033 = vmatprep.subr.mxu0 0.0
        %1034 = vmatpush1.msra.mxu0 0.0
        %1035 = vmatprep.subr.mxu0 0.0
        %1036 = vmatpush1.msra.mxu0 0.0
        %1037 = vmatprep.subr.mxu0 0.0
        %1038 = vmatpush1.msra.mxu0 0.0
        %1039 = vmatprep.subr.mxu0 0.0
        %1040 = vmatpush1.msra.mxu0 0.0
        %1041 = vmatprep.subr.mxu0 0.0
        %1042 = vmatpush1.msra.mxu0 0.0
        %1043 = vmatprep.subr.mxu0 0.0
        %1044 = vmatpush1.msra.mxu0 0.0
        %1045 = vmatprep.subr.mxu0 0.0
        %1046 = vmatpush1.msra.mxu0 0.0
        %1047 = vmatprep.subr.mxu0 0.0
        %1048 = vmatpush1.msra.mxu0 0.0
        %1049 = vmatprep.subr.mxu0 0.0
        %1050 = vmatpush1.msra.mxu0 0.0
        %1051 = vmatprep.subr.mxu0 0.0
        %1052 = vmatpush1.msra.mxu0 0.0
        %1053 = vmatprep.subr.mxu0 0.0
        %1054 = vmatpush1.msra.mxu0 0.0
        %1055 = vmatprep.subr.mxu0 0.0
        %1056 = vmatpush1.msra.mxu0 %v1017
        %1057 = vmatprep.subr.mxu0 0.0
        %1058 = vmatpush1.msra.mxu0 %v1016
        %1059 = vmatprep.subr.mxu0 0.0
        %1060 = vmatpush1.msra.mxu0 %v1015
        %1061 = vmatprep.subr.mxu0 0.0
        %1062 = vmatpush1.msra.mxu0 %v1014
        %1063 = vmatprep.subr.mxu0 0.0
        %1064 = vmatpush2.msra.mxu0 0.0
        %1065 = vmatprep.subr.mxu0 0.0
        %1066 = vmatpush2.msra.mxu0 0.0
        %1067 = vmatprep.subr.mxu0 0.0
        %1068 = vmatpush2.msra.mxu0 0.0
        %1069 = vmatprep.subr.mxu0 0.0
        %1070 = vmatpush2.msra.mxu0 0.0
        %1071 = vmatprep.subr.mxu0 0.0
        %1072 = vmatpush2.msra.mxu0 0.0
        %1073 = vmatprep.subr.mxu0 0.0
        %1074 = vmatpush2.msra.mxu0 0.0
        %1075 = vmatprep.subr.mxu0 0.0
        %1076 = vmatpush2.msra.mxu0 0.0
        %1077 = vmatprep.subr.mxu0 0.0
        %1078 = vmatpush2.msra.mxu0 0.0
        %1079 = vmatprep.subr.mxu0 0.0
        %1080 = vmatpush2.msra.mxu0 0.0
        %1081 = vmatprep.subr.mxu0 0.0
        %1082 = vmatpush2.msra.mxu0 0.0
        %1083 = vmatprep.subr.mxu0 0.0
        %1084 = vmatpush2.msra.mxu0 0.0
        %1085 = vmatprep.subr.mxu0 0.0
        %1086 = vmatpush2.msra.mxu0 0.0
        %1087 = vmatprep.subr.mxu0 0.0
        %1088 = vmatpush2.msra.mxu0 0.0
        %1089 = vmatprep.subr.mxu0 0.0
        %1090 = vmatpush2.msra.mxu0 0.0
        %1091 = vmatprep.subr.mxu0 0.0
        %1092 = vmatpush2.msra.mxu0 0.0
        %1093 = vmatprep.subr.mxu0 0.0
        %1094 = vmatpush2.msra.mxu0 0.0
        %1095 = vmatprep.mubr.f32.mxu0 0.0
        %1096 = vmatmul.mubr.f32.gmra.mxu0 %v1026
        %v1097 = vpop.f32.mrf.mxu0
        %v1098 = vadd.f32 %v1023, %v1097
        %v1099 = vpop.f32.mrf.mxu0
        %1100 = vmatprep.mubr.f32.mxu0 0.0
        %1101 = vmatmul.mubr.f32.gmra.mxu0 %v1029
        %v1102 = vpop.f32.mrf.mxu0
        %v1103 = vadd.f32 %v1023, %v1102
        %v1104 = vpop.f32.mrf.mxu0
        %1105 = vdwg.mxu0
        %v1106 = vld [vmem:[%s11] sm:$0xff]
        %v1107 = vld [vmem:[%s11 + $0x8] sm:$0xff]
        %v1108 = vld [vmem:[%s11 + $0x10] sm:$0xff]
        %v1109 = vld [vmem:[%s11 + $0x18] sm:$0xff]
        %1112 = vrot.lane.b32.xlu0 %v1098, 96
        %v1113 = vpop.permute.xlu0 %1112
        %1114 = vrot.lane.b32.xlu0 %v1103, 96
        %v1115 = vpop.permute.xlu0 %1114
        %vm1116 = vcmask 64512
        %v1117 = vsel %vm1116, %v1098, 0
        %v1119 = vsel %vm1116, %v1103, 0
        %v1121 = vsel %vm1116, %v1113, 0
        %v1123 = vsel %vm1116, %v1115, 0
        %1125 = vmatprep.subr.mxu0 0.0
        %1126 = vmatpush1.xpose.msra.mxu0 0.0
        %1127 = vmatprep.subr.mxu0 0.0
        %1128 = vmatpush1.xpose.msra.mxu0 0.0
        %1129 = vmatprep.subr.mxu0 0.0
        %1130 = vmatpush1.xpose.msra.mxu0 0.0
        %1131 = vmatprep.subr.mxu0 0.0
        %1132 = vmatpush1.xpose.msra.mxu0 0.0
        %1133 = vmatprep.subr.mxu0 0.0
        %1134 = vmatpush1.xpose.msra.mxu0 0.0
        %1135 = vmatprep.subr.mxu0 0.0
        %1136 = vmatpush1.xpose.msra.mxu0 0.0
        %1137 = vmatprep.subr.mxu0 0.0
        %1138 = vmatpush1.xpose.msra.mxu0 0.0
        %1139 = vmatprep.subr.mxu0 0.0
        %1140 = vmatpush1.xpose.msra.mxu0 0.0
        %1141 = vmatprep.subr.mxu0 0.0
        %1142 = vmatpush1.xpose.msra.mxu0 0.0
        %1143 = vmatprep.subr.mxu0 0.0
        %1144 = vmatpush1.xpose.msra.mxu0 0.0
        %1145 = vmatprep.subr.mxu0 0.0
        %1146 = vmatpush1.xpose.msra.mxu0 0.0
        %1147 = vmatprep.subr.mxu0 0.0
        %1148 = vmatpush1.xpose.msra.mxu0 0.0
        %1149 = vmatprep.subr.mxu0 0.0
        %1150 = vmatpush1.xpose.msra.mxu0 0.0
        %1151 = vmatprep.subr.mxu0 0.0
        %1152 = vmatpush1.xpose.msra.mxu0 0.0
        %1153 = vmatprep.subr.mxu0 0.0
        %1154 = vmatpush1.xpose.msra.mxu0 %v1123
        %1155 = vmatprep.subr.mxu0 0.0
        %1156 = vmatpush1.xpose.msra.mxu0 %v1121
        %1157 = vmatprep.subr.mxu0 0.0
        %1158 = vmatpush2.xpose.msra.mxu0 0.0
        %1159 = vmatprep.subr.mxu0 0.0
        %1160 = vmatpush2.xpose.msra.mxu0 0.0
        %1161 = vmatprep.subr.mxu0 0.0
        %1162 = vmatpush2.xpose.msra.mxu0 0.0
        %1163 = vmatprep.subr.mxu0 0.0
        %1164 = vmatpush2.xpose.msra.mxu0 0.0
        %1165 = vmatprep.subr.mxu0 0.0
        %1166 = vmatpush2.xpose.msra.mxu0 0.0
        %1167 = vmatprep.subr.mxu0 0.0
        %1168 = vmatpush2.xpose.msra.mxu0 0.0
        %1169 = vmatprep.subr.mxu0 0.0
        %1170 = vmatpush2.xpose.msra.mxu0 0.0
        %1171 = vmatprep.subr.mxu0 0.0
        %1172 = vmatpush2.xpose.msra.mxu0 0.0
        %1173 = vmatprep.subr.mxu0 0.0
        %1174 = vmatpush2.xpose.msra.mxu0 0.0
        %1175 = vmatprep.subr.mxu0 0.0
        %1176 = vmatpush2.xpose.msra.mxu0 0.0
        %1177 = vmatprep.subr.mxu0 0.0
        %1178 = vmatpush2.xpose.msra.mxu0 0.0
        %1179 = vmatprep.subr.mxu0 0.0
        %1180 = vmatpush2.xpose.msra.mxu0 0.0
        %1181 = vmatprep.subr.mxu0 0.0
        %1182 = vmatpush2.xpose.msra.mxu0 0.0
        %1183 = vmatprep.subr.mxu0 0.0
        %1184 = vmatpush2.xpose.msra.mxu0 0.0
        %1185 = vmatprep.subr.mxu0 0.0
        %1186 = vmatpush2.xpose.msra.mxu0 0.0
        %1187 = vmatprep.subr.mxu0 0.0
        %1188 = vmatpush2.xpose.msra.mxu0 0.0
        %1189 = vmatprep.mubr.f32.mxu0 0.0
        %1190 = vmatmul.mubr.f32.gmra.mxu0 %v1117
        %v1191 = vpop.f32.mrf.mxu0
        %v1192 = vadd.f32 %v966, %v1191
        %v1193 = vpop.f32.mrf.mxu0
        %1194 = vmatprep.mubr.f32.mxu0 0.0
        %1195 = vmatmul.mubr.f32.gmra.mxu0 %v1119
        %v1196 = vpop.f32.mrf.mxu0
        %v1197 = vadd.f32 %v967, %v1196
        %v1198 = vpop.f32.mrf.mxu0
        %1199 = vdwg.mxu0
        %v1200 = vsel %vm873, %v1192, -inf
        %1201 = vmax.xlane.f32.xlu0 %v1200
        %v1202 = vpop.xlane.xlu0 %1201
        %v1203 = vsel %vm873, %v1197, -inf
        %1204 = vmax.xlane.f32.xlu0 %v1203
        %v1205 = vpop.xlane.xlu0 %1204
        %v1206 = vsub.f32 %v1192, %v1202
        %v1207 = vsub.f32 %v1197, %v1205
        %v1208 = vmul.f32 %v1206, 1.442695
        %v1209 = vpow.pop %v1208
        %v1210 = vmul.f32 %v1207, 1.442695
        %v1211 = vpow.pop %v1210
        %v1212 = vsel %vm873, %v1209, 0.0
        %1213 = vadd.xlane.f32.xlu0 %v1212
        %v1214 = vpop.xlane.xlu0 %1213
        %v1215 = vsel %vm873, %v1211, 0.0
        %1216 = vadd.xlane.f32.xlu0 %v1215
        %v1217 = vpop.xlane.xlu0 %1216
        %v1218 = vrcp.pop %v1214
        %v1219 = vrcp.pop %v1217
        %v1220 = vmul.f32 %v1209, %v1218
        %v1221 = vmul.f32 %v1211, %v1219
        %1222 = vrot.lane.b32.xlu0 %v1098, 64
        %v1223 = vpop.permute.xlu0 %1222
        %1224 = vrot.lane.b32.xlu0 %v1103, 64
        %v1225 = vpop.permute.xlu0 %1224
        %v1229 = vsel %vm873, %v1220, 0
        %v1232 = vsel %vm873, %v1221, 0
        %1234 = vmatprep.subr.mxu0 0.0
        %1235 = vmatpush1.msra.mxu0 0.0
        %1236 = vmatprep.subr.mxu0 0.0
        %1237 = vmatpush1.msra.mxu0 0.0
        %1238 = vmatprep.subr.mxu0 0.0
        %1239 = vmatpush1.msra.mxu0 0.0
        %1240 = vmatprep.subr.mxu0 0.0
        %1241 = vmatpush1.msra.mxu0 0.0
        %1242 = vmatprep.subr.mxu0 0.0
        %1243 = vmatpush1.msra.mxu0 0.0
        %1244 = vmatprep.subr.mxu0 0.0
        %1245 = vmatpush1.msra.mxu0 0.0
        %1246 = vmatprep.subr.mxu0 0.0
        %1247 = vmatpush1.msra.mxu0 0.0
        %1248 = vmatprep.subr.mxu0 0.0
        %1249 = vmatpush1.msra.mxu0 0.0
        %1250 = vmatprep.subr.mxu0 0.0
        %1251 = vmatpush1.msra.mxu0 0.0
        %1252 = vmatprep.subr.mxu0 0.0
        %1253 = vmatpush1.msra.mxu0 0.0
        %1254 = vmatprep.subr.mxu0 0.0
        %1255 = vmatpush1.msra.mxu0 0.0
        %1256 = vmatprep.subr.mxu0 0.0
        %1257 = vmatpush1.msra.mxu0 0.0
        %1258 = vmatprep.subr.mxu0 0.0
        %1259 = vmatpush1.msra.mxu0 0.0
        %1260 = vmatprep.subr.mxu0 0.0
        %1261 = vmatpush1.msra.mxu0 0.0
        %1262 = vmatprep.subr.mxu0 0.0
        %1263 = vmatpush1.msra.mxu0 %v1225
        %1264 = vmatprep.subr.mxu0 0.0
        %1265 = vmatpush1.msra.mxu0 %v1223
        %1266 = vmatprep.subr.mxu0 0.0
        %1267 = vmatpush2.msra.mxu0 0.0
        %1268 = vmatprep.subr.mxu0 0.0
        %1269 = vmatpush2.msra.mxu0 0.0
        %1270 = vmatprep.subr.mxu0 0.0
        %1271 = vmatpush2.msra.mxu0 0.0
        %1272 = vmatprep.subr.mxu0 0.0
        %1273 = vmatpush2.msra.mxu0 0.0
        %1274 = vmatprep.subr.mxu0 0.0
        %1275 = vmatpush2.msra.mxu0 0.0
        %1276 = vmatprep.subr.mxu0 0.0
        %1277 = vmatpush2.msra.mxu0 0.0
        %1278 = vmatprep.subr.mxu0 0.0
        %1279 = vmatpush2.msra.mxu0 0.0
        %1280 = vmatprep.subr.mxu0 0.0
        %1281 = vmatpush2.msra.mxu0 0.0
        %1282 = vmatprep.subr.mxu0 0.0
        %1283 = vmatpush2.msra.mxu0 0.0
        %1284 = vmatprep.subr.mxu0 0.0
        %1285 = vmatpush2.msra.mxu0 0.0
        %1286 = vmatprep.subr.mxu0 0.0
        %1287 = vmatpush2.msra.mxu0 0.0
        %1288 = vmatprep.subr.mxu0 0.0
        %1289 = vmatpush2.msra.mxu0 0.0
        %1290 = vmatprep.subr.mxu0 0.0
        %1291 = vmatpush2.msra.mxu0 0.0
        %1292 = vmatprep.subr.mxu0 0.0
        %1293 = vmatpush2.msra.mxu0 0.0
        %1294 = vmatprep.subr.mxu0 0.0
        %1295 = vmatpush2.msra.mxu0 0.0
        %1296 = vmatprep.subr.mxu0 0.0
        %1297 = vmatpush2.msra.mxu0 0.0
        %1298 = vmatprep.mubr.f32.mxu0 0.0
        %1299 = vmatmul.mubr.f32.gmra.mxu0 %v1229
        %v1300 = vpop.f32.mrf.mxu0
        %v1301 = vadd.f32 0.0, %v1300
        %v1302 = vpop.f32.mrf.mxu0
        %1303 = vmatprep.mubr.f32.mxu0 0.0
        %1304 = vmatmul.mubr.f32.gmra.mxu0 %v1232
        %v1305 = vpop.f32.mrf.mxu0
        %v1306 = vadd.f32 0.0, %v1305
        %v1307 = vpop.f32.mrf.mxu0
        %1308 = vdwg.mxu0
        %1309 = vrot.lane.b32.xlu0 %v1098, 120
        %v1310 = vpop.permute.xlu0 %1309
        %1311 = vrot.lane.b32.xlu0 %v1103, 120
        %v1312 = vpop.permute.xlu0 %1311
        %1313 = vrot.lane.b32.xlu0 %v1098, 88
        %v1314 = vpop.permute.xlu0 %1313
        %1315 = vrot.lane.b32.xlu0 %v1103, 88
        %v1316 = vpop.permute.xlu0 %1315
        %v1317 = vsel %vm1116, %v1310, 0
        %v1319 = vsel %vm1116, %v1312, 0
        %v1321 = vsel %vm1116, %v1314, 0
        %v1323 = vsel %vm1116, %v1316, 0
        %1325 = vmatprep.subr.mxu0 0.0
        %1326 = vmatpush1.xpose.msra.mxu0 0.0
        %1327 = vmatprep.subr.mxu0 0.0
        %1328 = vmatpush1.xpose.msra.mxu0 0.0
        %1329 = vmatprep.subr.mxu0 0.0
        %1330 = vmatpush1.xpose.msra.mxu0 0.0
        %1331 = vmatprep.subr.mxu0 0.0
        %1332 = vmatpush1.xpose.msra.mxu0 0.0
        %1333 = vmatprep.subr.mxu0 0.0
        %1334 = vmatpush1.xpose.msra.mxu0 0.0
        %1335 = vmatprep.subr.mxu0 0.0
        %1336 = vmatpush1.xpose.msra.mxu0 0.0
        %1337 = vmatprep.subr.mxu0 0.0
        %1338 = vmatpush1.xpose.msra.mxu0 0.0
        %1339 = vmatprep.subr.mxu0 0.0
        %1340 = vmatpush1.xpose.msra.mxu0 0.0
        %1341 = vmatprep.subr.mxu0 0.0
        %1342 = vmatpush1.xpose.msra.mxu0 0.0
        %1343 = vmatprep.subr.mxu0 0.0
        %1344 = vmatpush1.xpose.msra.mxu0 0.0
        %1345 = vmatprep.subr.mxu0 0.0
        %1346 = vmatpush1.xpose.msra.mxu0 0.0
        %1347 = vmatprep.subr.mxu0 0.0
        %1348 = vmatpush1.xpose.msra.mxu0 0.0
        %1349 = vmatprep.subr.mxu0 0.0
        %1350 = vmatpush1.xpose.msra.mxu0 0.0
        %1351 = vmatprep.subr.mxu0 0.0
        %1352 = vmatpush1.xpose.msra.mxu0 0.0
        %1353 = vmatprep.subr.mxu0 0.0
        %1354 = vmatpush1.xpose.msra.mxu0 %v1323
        %1355 = vmatprep.subr.mxu0 0.0
        %1356 = vmatpush1.xpose.msra.mxu0 %v1321
        %1357 = vmatprep.subr.mxu0 0.0
        %1358 = vmatpush2.xpose.msra.mxu0 0.0
        %1359 = vmatprep.subr.mxu0 0.0
        %1360 = vmatpush2.xpose.msra.mxu0 0.0
        %1361 = vmatprep.subr.mxu0 0.0
        %1362 = vmatpush2.xpose.msra.mxu0 0.0
        %1363 = vmatprep.subr.mxu0 0.0
        %1364 = vmatpush2.xpose.msra.mxu0 0.0
        %1365 = vmatprep.subr.mxu0 0.0
        %1366 = vmatpush2.xpose.msra.mxu0 0.0
        %1367 = vmatprep.subr.mxu0 0.0
        %1368 = vmatpush2.xpose.msra.mxu0 0.0
        %1369 = vmatprep.subr.mxu0 0.0
        %1370 = vmatpush2.xpose.msra.mxu0 0.0
        %1371 = vmatprep.subr.mxu0 0.0
        %1372 = vmatpush2.xpose.msra.mxu0 0.0
        %1373 = vmatprep.subr.mxu0 0.0
        %1374 = vmatpush2.xpose.msra.mxu0 0.0
        %1375 = vmatprep.subr.mxu0 0.0
        %1376 = vmatpush2.xpose.msra.mxu0 0.0
        %1377 = vmatprep.subr.mxu0 0.0
        %1378 = vmatpush2.xpose.msra.mxu0 0.0
        %1379 = vmatprep.subr.mxu0 0.0
        %1380 = vmatpush2.xpose.msra.mxu0 0.0
        %1381 = vmatprep.subr.mxu0 0.0
        %1382 = vmatpush2.xpose.msra.mxu0 0.0
        %1383 = vmatprep.subr.mxu0 0.0
        %1384 = vmatpush2.xpose.msra.mxu0 0.0
        %1385 = vmatprep.subr.mxu0 0.0
        %1386 = vmatpush2.xpose.msra.mxu0 0.0
        %1387 = vmatprep.subr.mxu0 0.0
        %1388 = vmatpush2.xpose.msra.mxu0 0.0
        %1389 = vmatprep.mubr.f32.mxu0 0.0
        %1390 = vmatmul.mubr.f32.gmra.mxu0 %v1317
        %v1391 = vpop.f32.mrf.mxu0
        %v1392 = vadd.f32 %v966, %v1391
        %v1393 = vpop.f32.mrf.mxu0
        %1394 = vmatprep.mubr.f32.mxu0 0.0
        %1395 = vmatmul.mubr.f32.gmra.mxu0 %v1319
        %v1396 = vpop.f32.mrf.mxu0
        %v1397 = vadd.f32 %v967, %v1396
        %v1398 = vpop.f32.mrf.mxu0
        %1399 = vdwg.mxu0
        %v1400 = vsel %vm873, %v1392, -inf
        %1401 = vmax.xlane.f32.xlu0 %v1400
        %v1402 = vpop.xlane.xlu0 %1401
        %v1403 = vsel %vm873, %v1397, -inf
        %1404 = vmax.xlane.f32.xlu0 %v1403
        %v1405 = vpop.xlane.xlu0 %1404
        %v1406 = vsub.f32 %v1392, %v1402
        %v1407 = vsub.f32 %v1397, %v1405
        %v1408 = vmul.f32 %v1406, 1.442695
        %v1409 = vpow.pop %v1408
        %v1410 = vmul.f32 %v1407, 1.442695
        %v1411 = vpow.pop %v1410
        %v1412 = vsel %vm873, %v1409, 0.0
        %1413 = vadd.xlane.f32.xlu0 %v1412
        %v1414 = vpop.xlane.xlu0 %1413
        %v1415 = vsel %vm873, %v1411, 0.0
        %1416 = vadd.xlane.f32.xlu0 %v1415
        %v1417 = vpop.xlane.xlu0 %1416
        %v1418 = vrcp.pop %v1414
        %v1419 = vrcp.pop %v1417
        %v1420 = vmul.f32 %v1409, %v1418
        %v1421 = vmul.f32 %v1411, %v1419
        %1422 = vrot.lane.b32.xlu0 %v1098, 56
        %v1423 = vpop.permute.xlu0 %1422
        %1424 = vrot.lane.b32.xlu0 %v1103, 56
        %v1425 = vpop.permute.xlu0 %1424
        %v1429 = vsel %vm873, %v1420, 0
        %v1432 = vsel %vm873, %v1421, 0
        %1434 = vmatprep.subr.mxu0 0.0
        %1435 = vmatpush1.msra.mxu0 0.0
        %1436 = vmatprep.subr.mxu0 0.0
        %1437 = vmatpush1.msra.mxu0 0.0
        %1438 = vmatprep.subr.mxu0 0.0
        %1439 = vmatpush1.msra.mxu0 0.0
        %1440 = vmatprep.subr.mxu0 0.0
        %1441 = vmatpush1.msra.mxu0 0.0
        %1442 = vmatprep.subr.mxu0 0.0
        %1443 = vmatpush1.msra.mxu0 0.0
        %1444 = vmatprep.subr.mxu0 0.0
        %1445 = vmatpush1.msra.mxu0 0.0
        %1446 = vmatprep.subr.mxu0 0.0
        %1447 = vmatpush1.msra.mxu0 0.0
        %1448 = vmatprep.subr.mxu0 0.0
        %1449 = vmatpush1.msra.mxu0 0.0
        %1450 = vmatprep.subr.mxu0 0.0
        %1451 = vmatpush1.msra.mxu0 0.0
        %1452 = vmatprep.subr.mxu0 0.0
        %1453 = vmatpush1.msra.mxu0 0.0
        %1454 = vmatprep.subr.mxu0 0.0
        %1455 = vmatpush1.msra.mxu0 0.0
        %1456 = vmatprep.subr.mxu0 0.0
        %1457 = vmatpush1.msra.mxu0 0.0
        %1458 = vmatprep.subr.mxu0 0.0
        %1459 = vmatpush1.msra.mxu0 0.0
        %1460 = vmatprep.subr.mxu0 0.0
        %1461 = vmatpush1.msra.mxu0 0.0
        %1462 = vmatprep.subr.mxu0 0.0
        %1463 = vmatpush1.msra.mxu0 %v1425
        %1464 = vmatprep.subr.mxu0 0.0
        %1465 = vmatpush1.msra.mxu0 %v1423
        %1466 = vmatprep.subr.mxu0 0.0
        %1467 = vmatpush2.msra.mxu0 0.0
        %1468 = vmatprep.subr.mxu0 0.0
        %1469 = vmatpush2.msra.mxu0 0.0
        %1470 = vmatprep.subr.mxu0 0.0
        %1471 = vmatpush2.msra.mxu0 0.0
        %1472 = vmatprep.subr.mxu0 0.0
        %1473 = vmatpush2.msra.mxu0 0.0
        %1474 = vmatprep.subr.mxu0 0.0
        %1475 = vmatpush2.msra.mxu0 0.0
        %1476 = vmatprep.subr.mxu0 0.0
        %1477 = vmatpush2.msra.mxu0 0.0
        %1478 = vmatprep.subr.mxu0 0.0
        %1479 = vmatpush2.msra.mxu0 0.0
        %1480 = vmatprep.subr.mxu0 0.0
        %1481 = vmatpush2.msra.mxu0 0.0
        %1482 = vmatprep.subr.mxu0 0.0
        %1483 = vmatpush2.msra.mxu0 0.0
        %1484 = vmatprep.subr.mxu0 0.0
        %1485 = vmatpush2.msra.mxu0 0.0
        %1486 = vmatprep.subr.mxu0 0.0
        %1487 = vmatpush2.msra.mxu0 0.0
        %1488 = vmatprep.subr.mxu0 0.0
        %1489 = vmatpush2.msra.mxu0 0.0
        %1490 = vmatprep.subr.mxu0 0.0
        %1491 = vmatpush2.msra.mxu0 0.0
        %1492 = vmatprep.subr.mxu0 0.0
        %1493 = vmatpush2.msra.mxu0 0.0
        %1494 = vmatprep.subr.mxu0 0.0
        %1495 = vmatpush2.msra.mxu0 0.0
        %1496 = vmatprep.subr.mxu0 0.0
        %1497 = vmatpush2.msra.mxu0 0.0
        %1498 = vmatprep.mubr.f32.mxu0 0.0
        %1499 = vmatmul.mubr.f32.gmra.mxu0 %v1429
        %v1500 = vpop.f32.mrf.mxu0
        %v1501 = vadd.f32 0.0, %v1500
        %v1502 = vpop.f32.mrf.mxu0
        %1503 = vmatprep.mubr.f32.mxu0 0.0
        %1504 = vmatmul.mubr.f32.gmra.mxu0 %v1432
        %v1505 = vpop.f32.mrf.mxu0
        %v1506 = vadd.f32 0.0, %v1505
        %v1507 = vpop.f32.mrf.mxu0
        %1508 = vdwg.mxu0
        %v1510 = vsel %vm1116, %v1501, 0
        %v1513 = vsel %vm1116, %v1506, 0
        %1515 = vmatprep.subr.mxu0 0.0
        %1516 = vmatpush1.msra.mxu0 0.0
        %1517 = vmatprep.subr.mxu0 0.0
        %1518 = vmatpush1.msra.mxu0 0.0
        %1519 = vmatprep.subr.mxu0 0.0
        %1520 = vmatpush1.msra.mxu0 0.0
        %1521 = vmatprep.subr.mxu0 0.0
        %1522 = vmatpush1.msra.mxu0 0.0
        %1523 = vmatprep.subr.mxu0 0.0
        %1524 = vmatpush1.msra.mxu0 0.0
        %1525 = vmatprep.subr.mxu0 0.0
        %1526 = vmatpush1.msra.mxu0 0.0
        %1527 = vmatprep.subr.mxu0 0.0
        %1528 = vmatpush1.msra.mxu0 0.0
        %1529 = vmatprep.subr.mxu0 0.0
        %1530 = vmatpush1.msra.mxu0 0.0
        %1531 = vmatprep.subr.mxu0 0.0
        %1532 = vmatpush1.msra.mxu0 0.0
        %1533 = vmatprep.subr.mxu0 0.0
        %1534 = vmatpush1.msra.mxu0 0.0
        %1535 = vmatprep.subr.mxu0 0.0
        %1536 = vmatpush1.msra.mxu0 0.0
        %1537 = vmatprep.subr.mxu0 0.0
        %1538 = vmatpush1.msra.mxu0 0.0
        %1539 = vmatprep.subr.mxu0 0.0
        %1540 = vmatpush1.msra.mxu0 0.0
        %1541 = vmatprep.subr.mxu0 0.0
        %1542 = vmatpush1.msra.mxu0 0.0
        %1543 = vmatprep.subr.mxu0 0.0
        %1544 = vmatpush1.msra.mxu0 0.0
        %1545 = vmatprep.subr.mxu0 0.0
        %1546 = vmatpush1.msra.mxu0 %v1107
        %1547 = vmatprep.subr.mxu0 0.0
        %1548 = vmatpush2.msra.mxu0 0.0
        %1549 = vmatprep.subr.mxu0 0.0
        %1550 = vmatpush2.msra.mxu0 0.0
        %1551 = vmatprep.subr.mxu0 0.0
        %1552 = vmatpush2.msra.mxu0 0.0
        %1553 = vmatprep.subr.mxu0 0.0
        %1554 = vmatpush2.msra.mxu0 0.0
        %1555 = vmatprep.subr.mxu0 0.0
        %1556 = vmatpush2.msra.mxu0 0.0
        %1557 = vmatprep.subr.mxu0 0.0
        %1558 = vmatpush2.msra.mxu0 0.0
        %1559 = vmatprep.subr.mxu0 0.0
        %1560 = vmatpush2.msra.mxu0 0.0
        %1561 = vmatprep.subr.mxu0 0.0
        %1562 = vmatpush2.msra.mxu0 0.0
        %1563 = vmatprep.subr.mxu0 0.0
        %1564 = vmatpush2.msra.mxu0 0.0
        %1565 = vmatprep.subr.mxu0 0.0
        %1566 = vmatpush2.msra.mxu0 0.0
        %1567 = vmatprep.subr.mxu0 0.0
        %1568 = vmatpush2.msra.mxu0 0.0
        %1569 = vmatprep.subr.mxu0 0.0
        %1570 = vmatpush2.msra.mxu0 0.0
        %1571 = vmatprep.subr.mxu0 0.0
        %1572 = vmatpush2.msra.mxu0 0.0
        %1573 = vmatprep.subr.mxu0 0.0
        %1574 = vmatpush2.msra.mxu0 0.0
        %1575 = vmatprep.subr.mxu0 0.0
        %1576 = vmatpush2.msra.mxu0 0.0
        %1577 = vmatprep.subr.mxu0 0.0
        %1578 = vmatpush2.msra.mxu0 0.0
        %1579 = vmatprep.mubr.f32.mxu0 0.0
        %1580 = vmatmul.mubr.f32.gmra.mxu0 %v1510
        %v1581 = vpop.f32.mrf.mxu0
        %v1582 = vadd.f32 0.0, %v1581
        %v1583 = vpop.f32.mrf.mxu0
        %1584 = vmatprep.mubr.f32.mxu0 0.0
        %1585 = vmatmul.mubr.f32.gmra.mxu0 %v1513
        %v1586 = vpop.f32.mrf.mxu0
        %v1587 = vadd.f32 0.0, %v1586
        %v1588 = vpop.f32.mrf.mxu0
        %1589 = vdwg.mxu0
        %v1591 = vsel %vm1116, %v1301, 0
        %v1594 = vsel %vm1116, %v1306, 0
        %1596 = vmatprep.subr.mxu0 0.0
        %1597 = vmatpush1.msra.mxu0 0.0
        %1598 = vmatprep.subr.mxu0 0.0
        %1599 = vmatpush1.msra.mxu0 0.0
        %1600 = vmatprep.subr.mxu0 0.0
        %1601 = vmatpush1.msra.mxu0 0.0
        %1602 = vmatprep.subr.mxu0 0.0
        %1603 = vmatpush1.msra.mxu0 0.0
        %1604 = vmatprep.subr.mxu0 0.0
        %1605 = vmatpush1.msra.mxu0 0.0
        %1606 = vmatprep.subr.mxu0 0.0
        %1607 = vmatpush1.msra.mxu0 0.0
        %1608 = vmatprep.subr.mxu0 0.0
        %1609 = vmatpush1.msra.mxu0 0.0
        %1610 = vmatprep.subr.mxu0 0.0
        %1611 = vmatpush1.msra.mxu0 0.0
        %1612 = vmatprep.subr.mxu0 0.0
        %1613 = vmatpush1.msra.mxu0 0.0
        %1614 = vmatprep.subr.mxu0 0.0
        %1615 = vmatpush1.msra.mxu0 0.0
        %1616 = vmatprep.subr.mxu0 0.0
        %1617 = vmatpush1.msra.mxu0 0.0
        %1618 = vmatprep.subr.mxu0 0.0
        %1619 = vmatpush1.msra.mxu0 0.0
        %1620 = vmatprep.subr.mxu0 0.0
        %1621 = vmatpush1.msra.mxu0 0.0
        %1622 = vmatprep.subr.mxu0 0.0
        %1623 = vmatpush1.msra.mxu0 0.0
        %1624 = vmatprep.subr.mxu0 0.0
        %1625 = vmatpush1.msra.mxu0 0.0
        %1626 = vmatprep.subr.mxu0 0.0
        %1627 = vmatpush1.msra.mxu0 %v1106
        %1628 = vmatprep.subr.mxu0 0.0
        %1629 = vmatpush2.msra.mxu0 0.0
        %1630 = vmatprep.subr.mxu0 0.0
        %1631 = vmatpush2.msra.mxu0 0.0
        %1632 = vmatprep.subr.mxu0 0.0
        %1633 = vmatpush2.msra.mxu0 0.0
        %1634 = vmatprep.subr.mxu0 0.0
        %1635 = vmatpush2.msra.mxu0 0.0
        %1636 = vmatprep.subr.mxu0 0.0
        %1637 = vmatpush2.msra.mxu0 0.0
        %1638 = vmatprep.subr.mxu0 0.0
        %1639 = vmatpush2.msra.mxu0 0.0
        %1640 = vmatprep.subr.mxu0 0.0
        %1641 = vmatpush2.msra.mxu0 0.0
        %1642 = vmatprep.subr.mxu0 0.0
        %1643 = vmatpush2.msra.mxu0 0.0
        %1644 = vmatprep.subr.mxu0 0.0
        %1645 = vmatpush2.msra.mxu0 0.0
        %1646 = vmatprep.subr.mxu0 0.0
        %1647 = vmatpush2.msra.mxu0 0.0
        %1648 = vmatprep.subr.mxu0 0.0
        %1649 = vmatpush2.msra.mxu0 0.0
        %1650 = vmatprep.subr.mxu0 0.0
        %1651 = vmatpush2.msra.mxu0 0.0
        %1652 = vmatprep.subr.mxu0 0.0
        %1653 = vmatpush2.msra.mxu0 0.0
        %1654 = vmatprep.subr.mxu0 0.0
        %1655 = vmatpush2.msra.mxu0 0.0
        %1656 = vmatprep.subr.mxu0 0.0
        %1657 = vmatpush2.msra.mxu0 0.0
        %1658 = vmatprep.subr.mxu0 0.0
        %1659 = vmatpush2.msra.mxu0 0.0
        %1660 = vmatprep.mubr.f32.mxu0 0.0
        %1661 = vmatmul.mubr.f32.gmra.mxu0 %v1591
        %v1662 = vpop.f32.mrf.mxu0
        %v1663 = vadd.f32 %v1582, %v1662
        %v1664 = vpop.f32.mrf.mxu0
        %1665 = vmatprep.mubr.f32.mxu0 0.0
        %1666 = vmatmul.mubr.f32.gmra.mxu0 %v1594
        %v1667 = vpop.f32.mrf.mxu0
        %v1668 = vadd.f32 %v1587, %v1667
        %v1669 = vpop.f32.mrf.mxu0
        %1670 = vdwg.mxu0
        %1671 = vrot.lane.b32.xlu0 %v1098, 112
        %v1672 = vpop.permute.xlu0 %1671
        %1673 = vrot.lane.b32.xlu0 %v1103, 112
        %v1674 = vpop.permute.xlu0 %1673
        %1675 = vrot.lane.b32.xlu0 %v1098, 80
        %v1676 = vpop.permute.xlu0 %1675
        %1677 = vrot.lane.b32.xlu0 %v1103, 80
        %v1678 = vpop.permute.xlu0 %1677
        %v1679 = vsel %vm1116, %v1672, 0
        %v1681 = vsel %vm1116, %v1674, 0
        %v1683 = vsel %vm1116, %v1676, 0
        %v1685 = vsel %vm1116, %v1678, 0
        %1687 = vmatprep.subr.mxu0 0.0
        %1688 = vmatpush1.xpose.msra.mxu0 0.0
        %1689 = vmatprep.subr.mxu0 0.0
        %1690 = vmatpush1.xpose.msra.mxu0 0.0
        %1691 = vmatprep.subr.mxu0 0.0
        %1692 = vmatpush1.xpose.msra.mxu0 0.0
        %1693 = vmatprep.subr.mxu0 0.0
        %1694 = vmatpush1.xpose.msra.mxu0 0.0
        %1695 = vmatprep.subr.mxu0 0.0
        %1696 = vmatpush1.xpose.msra.mxu0 0.0
        %1697 = vmatprep.subr.mxu0 0.0
        %1698 = vmatpush1.xpose.msra.mxu0 0.0
        %1699 = vmatprep.subr.mxu0 0.0
        %1700 = vmatpush1.xpose.msra.mxu0 0.0
        %1701 = vmatprep.subr.mxu0 0.0
        %1702 = vmatpush1.xpose.msra.mxu0 0.0
        %1703 = vmatprep.subr.mxu0 0.0
        %1704 = vmatpush1.xpose.msra.mxu0 0.0
        %1705 = vmatprep.subr.mxu0 0.0
        %1706 = vmatpush1.xpose.msra.mxu0 0.0
        %1707 = vmatprep.subr.mxu0 0.0
        %1708 = vmatpush1.xpose.msra.mxu0 0.0
        %1709 = vmatprep.subr.mxu0 0.0
        %1710 = vmatpush1.xpose.msra.mxu0 0.0
        %1711 = vmatprep.subr.mxu0 0.0
        %1712 = vmatpush1.xpose.msra.mxu0 0.0
        %1713 = vmatprep.subr.mxu0 0.0
        %1714 = vmatpush1.xpose.msra.mxu0 0.0
        %1715 = vmatprep.subr.mxu0 0.0
        %1716 = vmatpush1.xpose.msra.mxu0 %v1685
        %1717 = vmatprep.subr.mxu0 0.0
        %1718 = vmatpush1.xpose.msra.mxu0 %v1683
        %1719 = vmatprep.subr.mxu0 0.0
        %1720 = vmatpush2.xpose.msra.mxu0 0.0
        %1721 = vmatprep.subr.mxu0 0.0
        %1722 = vmatpush2.xpose.msra.mxu0 0.0
        %1723 = vmatprep.subr.mxu0 0.0
        %1724 = vmatpush2.xpose.msra.mxu0 0.0
        %1725 = vmatprep.subr.mxu0 0.0
        %1726 = vmatpush2.xpose.msra.mxu0 0.0
        %1727 = vmatprep.subr.mxu0 0.0
        %1728 = vmatpush2.xpose.msra.mxu0 0.0
        %1729 = vmatprep.subr.mxu0 0.0
        %1730 = vmatpush2.xpose.msra.mxu0 0.0
        %1731 = vmatprep.subr.mxu0 0.0
        %1732 = vmatpush2.xpose.msra.mxu0 0.0
        %1733 = vmatprep.subr.mxu0 0.0
        %1734 = vmatpush2.xpose.msra.mxu0 0.0
        %1735 = vmatprep.subr.mxu0 0.0
        %1736 = vmatpush2.xpose.msra.mxu0 0.0
        %1737 = vmatprep.subr.mxu0 0.0
        %1738 = vmatpush2.xpose.msra.mxu0 0.0
        %1739 = vmatprep.subr.mxu0 0.0
        %1740 = vmatpush2.xpose.msra.mxu0 0.0
        %1741 = vmatprep.subr.mxu0 0.0
        %1742 = vmatpush2.xpose.msra.mxu0 0.0
        %1743 = vmatprep.subr.mxu0 0.0
        %1744 = vmatpush2.xpose.msra.mxu0 0.0
        %1745 = vmatprep.subr.mxu0 0.0
        %1746 = vmatpush2.xpose.msra.mxu0 0.0
        %1747 = vmatprep.subr.mxu0 0.0
        %1748 = vmatpush2.xpose.msra.mxu0 0.0
        %1749 = vmatprep.subr.mxu0 0.0
        %1750 = vmatpush2.xpose.msra.mxu0 0.0
        %1751 = vmatprep.mubr.f32.mxu0 0.0
        %1752 = vmatmul.mubr.f32.gmra.mxu0 %v1679
        %v1753 = vpop.f32.mrf.mxu0
        %v1754 = vadd.f32 %v966, %v1753
        %v1755 = vpop.f32.mrf.mxu0
        %1756 = vmatprep.mubr.f32.mxu0 0.0
        %1757 = vmatmul.mubr.f32.gmra.mxu0 %v1681
        %v1758 = vpop.f32.mrf.mxu0
        %v1759 = vadd.f32 %v967, %v1758
        %v1760 = vpop.f32.mrf.mxu0
        %1761 = vdwg.mxu0
        %v1762 = vsel %vm873, %v1754, -inf
        %1763 = vmax.xlane.f32.xlu0 %v1762
        %v1764 = vpop.xlane.xlu0 %1763
        %v1765 = vsel %vm873, %v1759, -inf
        %1766 = vmax.xlane.f32.xlu0 %v1765
        %v1767 = vpop.xlane.xlu0 %1766
        %v1768 = vsub.f32 %v1754, %v1764
        %v1769 = vsub.f32 %v1759, %v1767
        %v1770 = vmul.f32 %v1768, 1.442695
        %v1771 = vpow.pop %v1770
        %v1772 = vmul.f32 %v1769, 1.442695
        %v1773 = vpow.pop %v1772
        %v1774 = vsel %vm873, %v1771, 0.0
        %1775 = vadd.xlane.f32.xlu0 %v1774
        %v1776 = vpop.xlane.xlu0 %1775
        %v1777 = vsel %vm873, %v1773, 0.0
        %1778 = vadd.xlane.f32.xlu0 %v1777
        %v1779 = vpop.xlane.xlu0 %1778
        %v1780 = vrcp.pop %v1776
        %v1781 = vrcp.pop %v1779
        %v1782 = vmul.f32 %v1771, %v1780
        %v1783 = vmul.f32 %v1773, %v1781
        %1784 = vrot.lane.b32.xlu0 %v1098, 48
        %v1785 = vpop.permute.xlu0 %1784
        %1786 = vrot.lane.b32.xlu0 %v1103, 48
        %v1787 = vpop.permute.xlu0 %1786
        %v1791 = vsel %vm873, %v1782, 0
        %v1794 = vsel %vm873, %v1783, 0
        %1796 = vmatprep.subr.mxu0 0.0
        %1797 = vmatpush1.msra.mxu0 0.0
        %1798 = vmatprep.subr.mxu0 0.0
        %1799 = vmatpush1.msra.mxu0 0.0
        %1800 = vmatprep.subr.mxu0 0.0
        %1801 = vmatpush1.msra.mxu0 0.0
        %1802 = vmatprep.subr.mxu0 0.0
        %1803 = vmatpush1.msra.mxu0 0.0
        %1804 = vmatprep.subr.mxu0 0.0
        %1805 = vmatpush1.msra.mxu0 0.0
        %1806 = vmatprep.subr.mxu0 0.0
        %1807 = vmatpush1.msra.mxu0 0.0
        %1808 = vmatprep.subr.mxu0 0.0
        %1809 = vmatpush1.msra.mxu0 0.0
        %1810 = vmatprep.subr.mxu0 0.0
        %1811 = vmatpush1.msra.mxu0 0.0
        %1812 = vmatprep.subr.mxu0 0.0
        %1813 = vmatpush1.msra.mxu0 0.0
        %1814 = vmatprep.subr.mxu0 0.0
        %1815 = vmatpush1.msra.mxu0 0.0
        %1816 = vmatprep.subr.mxu0 0.0
        %1817 = vmatpush1.msra.mxu0 0.0
        %1818 = vmatprep.subr.mxu0 0.0
        %1819 = vmatpush1.msra.mxu0 0.0
        %1820 = vmatprep.subr.mxu0 0.0
        %1821 = vmatpush1.msra.mxu0 0.0
        %1822 = vmatprep.subr.mxu0 0.0
        %1823 = vmatpush1.msra.mxu0 0.0
        %1824 = vmatprep.subr.mxu0 0.0
        %1825 = vmatpush1.msra.mxu0 %v1787
        %1826 = vmatprep.subr.mxu0 0.0
        %1827 = vmatpush1.msra.mxu0 %v1785
        %1828 = vmatprep.subr.mxu0 0.0
        %1829 = vmatpush2.msra.mxu0 0.0
        %1830 = vmatprep.subr.mxu0 0.0
        %1831 = vmatpush2.msra.mxu0 0.0
        %1832 = vmatprep.subr.mxu0 0.0
        %1833 = vmatpush2.msra.mxu0 0.0
        %1834 = vmatprep.subr.mxu0 0.0
        %1835 = vmatpush2.msra.mxu0 0.0
        %1836 = vmatprep.subr.mxu0 0.0
        %1837 = vmatpush2.msra.mxu0 0.0
        %1838 = vmatprep.subr.mxu0 0.0
        %1839 = vmatpush2.msra.mxu0 0.0
        %1840 = vmatprep.subr.mxu0 0.0
        %1841 = vmatpush2.msra.mxu0 0.0
        %1842 = vmatprep.subr.mxu0 0.0
        %1843 = vmatpush2.msra.mxu0 0.0
        %1844 = vmatprep.subr.mxu0 0.0
        %1845 = vmatpush2.msra.mxu0 0.0
        %1846 = vmatprep.subr.mxu0 0.0
        %1847 = vmatpush2.msra.mxu0 0.0
        %1848 = vmatprep.subr.mxu0 0.0
        %1849 = vmatpush2.msra.mxu0 0.0
        %1850 = vmatprep.subr.mxu0 0.0
        %1851 = vmatpush2.msra.mxu0 0.0
        %1852 = vmatprep.subr.mxu0 0.0
        %1853 = vmatpush2.msra.mxu0 0.0
        %1854 = vmatprep.subr.mxu0 0.0
        %1855 = vmatpush2.msra.mxu0 0.0
        %1856 = vmatprep.subr.mxu0 0.0
        %1857 = vmatpush2.msra.mxu0 0.0
        %1858 = vmatprep.subr.mxu0 0.0
        %1859 = vmatpush2.msra.mxu0 0.0
        %1860 = vmatprep.mubr.f32.mxu0 0.0
        %1861 = vmatmul.mubr.f32.gmra.mxu0 %v1791
        %v1862 = vpop.f32.mrf.mxu0
        %v1863 = vadd.f32 0.0, %v1862
        %v1864 = vpop.f32.mrf.mxu0
        %1865 = vmatprep.mubr.f32.mxu0 0.0
        %1866 = vmatmul.mubr.f32.gmra.mxu0 %v1794
        %v1867 = vpop.f32.mrf.mxu0
        %v1868 = vadd.f32 0.0, %v1867
        %v1869 = vpop.f32.mrf.mxu0
        %1870 = vdwg.mxu0
        %v1872 = vsel %vm1116, %v1863, 0
        %v1875 = vsel %vm1116, %v1868, 0
        %1877 = vmatprep.subr.mxu0 0.0
        %1878 = vmatpush1.msra.mxu0 0.0
        %1879 = vmatprep.subr.mxu0 0.0
        %1880 = vmatpush1.msra.mxu0 0.0
        %1881 = vmatprep.subr.mxu0 0.0
        %1882 = vmatpush1.msra.mxu0 0.0
        %1883 = vmatprep.subr.mxu0 0.0
        %1884 = vmatpush1.msra.mxu0 0.0
        %1885 = vmatprep.subr.mxu0 0.0
        %1886 = vmatpush1.msra.mxu0 0.0
        %1887 = vmatprep.subr.mxu0 0.0
        %1888 = vmatpush1.msra.mxu0 0.0
        %1889 = vmatprep.subr.mxu0 0.0
        %1890 = vmatpush1.msra.mxu0 0.0
        %1891 = vmatprep.subr.mxu0 0.0
        %1892 = vmatpush1.msra.mxu0 0.0
        %1893 = vmatprep.subr.mxu0 0.0
        %1894 = vmatpush1.msra.mxu0 0.0
        %1895 = vmatprep.subr.mxu0 0.0
        %1896 = vmatpush1.msra.mxu0 0.0
        %1897 = vmatprep.subr.mxu0 0.0
        %1898 = vmatpush1.msra.mxu0 0.0
        %1899 = vmatprep.subr.mxu0 0.0
        %1900 = vmatpush1.msra.mxu0 0.0
        %1901 = vmatprep.subr.mxu0 0.0
        %1902 = vmatpush1.msra.mxu0 0.0
        %1903 = vmatprep.subr.mxu0 0.0
        %1904 = vmatpush1.msra.mxu0 0.0
        %1905 = vmatprep.subr.mxu0 0.0
        %1906 = vmatpush1.msra.mxu0 0.0
        %1907 = vmatprep.subr.mxu0 0.0
        %1908 = vmatpush1.msra.mxu0 %v1108
        %1909 = vmatprep.subr.mxu0 0.0
        %1910 = vmatpush2.msra.mxu0 0.0
        %1911 = vmatprep.subr.mxu0 0.0
        %1912 = vmatpush2.msra.mxu0 0.0
        %1913 = vmatprep.subr.mxu0 0.0
        %1914 = vmatpush2.msra.mxu0 0.0
        %1915 = vmatprep.subr.mxu0 0.0
        %1916 = vmatpush2.msra.mxu0 0.0
        %1917 = vmatprep.subr.mxu0 0.0
        %1918 = vmatpush2.msra.mxu0 0.0
        %1919 = vmatprep.subr.mxu0 0.0
        %1920 = vmatpush2.msra.mxu0 0.0
        %1921 = vmatprep.subr.mxu0 0.0
        %1922 = vmatpush2.msra.mxu0 0.0
        %1923 = vmatprep.subr.mxu0 0.0
        %1924 = vmatpush2.msra.mxu0 0.0
        %1925 = vmatprep.subr.mxu0 0.0
        %1926 = vmatpush2.msra.mxu0 0.0
        %1927 = vmatprep.subr.mxu0 0.0
        %1928 = vmatpush2.msra.mxu0 0.0
        %1929 = vmatprep.subr.mxu0 0.0
        %1930 = vmatpush2.msra.mxu0 0.0
        %1931 = vmatprep.subr.mxu0 0.0
        %1932 = vmatpush2.msra.mxu0 0.0
        %1933 = vmatprep.subr.mxu0 0.0
        %1934 = vmatpush2.msra.mxu0 0.0
        %1935 = vmatprep.subr.mxu0 0.0
        %1936 = vmatpush2.msra.mxu0 0.0
        %1937 = vmatprep.subr.mxu0 0.0
        %1938 = vmatpush2.msra.mxu0 0.0
        %1939 = vmatprep.subr.mxu0 0.0
        %1940 = vmatpush2.msra.mxu0 0.0
        %1941 = vmatprep.mubr.f32.mxu0 0.0
        %1942 = vmatmul.mubr.f32.gmra.mxu0 %v1872
        %v1943 = vpop.f32.mrf.mxu0
        %v1944 = vadd.f32 0.0, %v1943
        %v1945 = vpop.f32.mrf.mxu0
        %1946 = vmatprep.mubr.f32.mxu0 0.0
        %1947 = vmatmul.mubr.f32.gmra.mxu0 %v1875
        %v1948 = vpop.f32.mrf.mxu0
        %v1949 = vadd.f32 0.0, %v1948
        %v1950 = vpop.f32.mrf.mxu0
        %1951 = vdwg.mxu0
        %v1952 = vadd.f32 %v1663, %v1944
        %v1953 = vadd.f32 %v1668, %v1949
        %1954 = vrot.lane.b32.xlu0 %v1098, 104
        %v1955 = vpop.permute.xlu0 %1954
        %1956 = vrot.lane.b32.xlu0 %v1103, 104
        %v1957 = vpop.permute.xlu0 %1956
        %1958 = vrot.lane.b32.xlu0 %v1098, 72
        %v1959 = vpop.permute.xlu0 %1958
        %1960 = vrot.lane.b32.xlu0 %v1103, 72
        %v1961 = vpop.permute.xlu0 %1960
        %v1962 = vsel %vm1116, %v1955, 0
        %v1964 = vsel %vm1116, %v1957, 0
        %v1966 = vsel %vm1116, %v1959, 0
        %v1968 = vsel %vm1116, %v1961, 0
        %1970 = vmatprep.subr.mxu0 0.0
        %1971 = vmatpush1.xpose.msra.mxu0 0.0
        %1972 = vmatprep.subr.mxu0 0.0
        %1973 = vmatpush1.xpose.msra.mxu0 0.0
        %1974 = vmatprep.subr.mxu0 0.0
        %1975 = vmatpush1.xpose.msra.mxu0 0.0
        %1976 = vmatprep.subr.mxu0 0.0
        %1977 = vmatpush1.xpose.msra.mxu0 0.0
        %1978 = vmatprep.subr.mxu0 0.0
        %1979 = vmatpush1.xpose.msra.mxu0 0.0
        %1980 = vmatprep.subr.mxu0 0.0
        %1981 = vmatpush1.xpose.msra.mxu0 0.0
        %1982 = vmatprep.subr.mxu0 0.0
        %1983 = vmatpush1.xpose.msra.mxu0 0.0
        %1984 = vmatprep.subr.mxu0 0.0
        %1985 = vmatpush1.xpose.msra.mxu0 0.0
        %1986 = vmatprep.subr.mxu0 0.0
        %1987 = vmatpush1.xpose.msra.mxu0 0.0
        %1988 = vmatprep.subr.mxu0 0.0
        %1989 = vmatpush1.xpose.msra.mxu0 0.0
        %1990 = vmatprep.subr.mxu0 0.0
        %1991 = vmatpush1.xpose.msra.mxu0 0.0
        %1992 = vmatprep.subr.mxu0 0.0
        %1993 = vmatpush1.xpose.msra.mxu0 0.0
        %1994 = vmatprep.subr.mxu0 0.0
        %1995 = vmatpush1.xpose.msra.mxu0 0.0
        %1996 = vmatprep.subr.mxu0 0.0
        %1997 = vmatpush1.xpose.msra.mxu0 0.0
        %1998 = vmatprep.subr.mxu0 0.0
        %1999 = vmatpush1.xpose.msra.mxu0 %v1968
        %2000 = vmatprep.subr.mxu0 0.0
        %2001 = vmatpush1.xpose.msra.mxu0 %v1966
        %2002 = vmatprep.subr.mxu0 0.0
        %2003 = vmatpush2.xpose.msra.mxu0 0.0
        %2004 = vmatprep.subr.mxu0 0.0
        %2005 = vmatpush2.xpose.msra.mxu0 0.0
        %2006 = vmatprep.subr.mxu0 0.0
        %2007 = vmatpush2.xpose.msra.mxu0 0.0
        %2008 = vmatprep.subr.mxu0 0.0
        %2009 = vmatpush2.xpose.msra.mxu0 0.0
        %2010 = vmatprep.subr.mxu0 0.0
        %2011 = vmatpush2.xpose.msra.mxu0 0.0
        %2012 = vmatprep.subr.mxu0 0.0
        %2013 = vmatpush2.xpose.msra.mxu0 0.0
        %2014 = vmatprep.subr.mxu0 0.0
        %2015 = vmatpush2.xpose.msra.mxu0 0.0
        %2016 = vmatprep.subr.mxu0 0.0
        %2017 = vmatpush2.xpose.msra.mxu0 0.0
        %2018 = vmatprep.subr.mxu0 0.0
        %2019 = vmatpush2.xpose.msra.mxu0 0.0
        %2020 = vmatprep.subr.mxu0 0.0
        %2021 = vmatpush2.xpose.msra.mxu0 0.0
        %2022 = vmatprep.subr.mxu0 0.0
        %2023 = vmatpush2.xpose.msra.mxu0 0.0
        %2024 = vmatprep.subr.mxu0 0.0
        %2025 = vmatpush2.xpose.msra.mxu0 0.0
        %2026 = vmatprep.subr.mxu0 0.0
        %2027 = vmatpush2.xpose.msra.mxu0 0.0
        %2028 = vmatprep.subr.mxu0 0.0
        %2029 = vmatpush2.xpose.msra.mxu0 0.0
        %2030 = vmatprep.subr.mxu0 0.0
        %2031 = vmatpush2.xpose.msra.mxu0 0.0
        %2032 = vmatprep.subr.mxu0 0.0
        %2033 = vmatpush2.xpose.msra.mxu0 0.0
        %2034 = vmatprep.mubr.f32.mxu0 0.0
        %2035 = vmatmul.mubr.f32.gmra.mxu0 %v1962
        %v2036 = vpop.f32.mrf.mxu0
        %v2037 = vadd.f32 %v966, %v2036
        %v2038 = vpop.f32.mrf.mxu0
        %2039 = vmatprep.mubr.f32.mxu0 0.0
        %2040 = vmatmul.mubr.f32.gmra.mxu0 %v1964
        %v2041 = vpop.f32.mrf.mxu0
        %v2042 = vadd.f32 %v967, %v2041
        %v2043 = vpop.f32.mrf.mxu0
        %2044 = vdwg.mxu0
        %v2045 = vsel %vm873, %v2037, -inf
        %2046 = vmax.xlane.f32.xlu0 %v2045
        %v2047 = vpop.xlane.xlu0 %2046
        %v2048 = vsel %vm873, %v2042, -inf
        %2049 = vmax.xlane.f32.xlu0 %v2048
        %v2050 = vpop.xlane.xlu0 %2049
        %v2051 = vsub.f32 %v2037, %v2047
        %v2052 = vsub.f32 %v2042, %v2050
        %v2053 = vmul.f32 %v2051, 1.442695
        %v2054 = vpow.pop %v2053
        %v2055 = vmul.f32 %v2052, 1.442695
        %v2056 = vpow.pop %v2055
        %v2057 = vsel %vm873, %v2054, 0.0
        %2058 = vadd.xlane.f32.xlu0 %v2057
        %v2059 = vpop.xlane.xlu0 %2058
        %v2060 = vsel %vm873, %v2056, 0.0
        %2061 = vadd.xlane.f32.xlu0 %v2060
        %v2062 = vpop.xlane.xlu0 %2061
        %v2063 = vrcp.pop %v2059
        %v2064 = vrcp.pop %v2062
        %v2065 = vmul.f32 %v2054, %v2063
        %v2066 = vmul.f32 %v2056, %v2064
        %2067 = vrot.lane.b32.xlu0 %v1098, 40
        %v2068 = vpop.permute.xlu0 %2067
        %2069 = vrot.lane.b32.xlu0 %v1103, 40
        %v2070 = vpop.permute.xlu0 %2069
        %v2074 = vsel %vm873, %v2065, 0
        %v2077 = vsel %vm873, %v2066, 0
        %2079 = vmatprep.subr.mxu0 0.0
        %2080 = vmatpush1.msra.mxu0 0.0
        %2081 = vmatprep.subr.mxu0 0.0
        %2082 = vmatpush1.msra.mxu0 0.0
        %2083 = vmatprep.subr.mxu0 0.0
        %2084 = vmatpush1.msra.mxu0 0.0
        %2085 = vmatprep.subr.mxu0 0.0
        %2086 = vmatpush1.msra.mxu0 0.0
        %2087 = vmatprep.subr.mxu0 0.0
        %2088 = vmatpush1.msra.mxu0 0.0
        %2089 = vmatprep.subr.mxu0 0.0
        %2090 = vmatpush1.msra.mxu0 0.0
        %2091 = vmatprep.subr.mxu0 0.0
        %2092 = vmatpush1.msra.mxu0 0.0
        %2093 = vmatprep.subr.mxu0 0.0
        %2094 = vmatpush1.msra.mxu0 0.0
        %2095 = vmatprep.subr.mxu0 0.0
        %2096 = vmatpush1.msra.mxu0 0.0
        %2097 = vmatprep.subr.mxu0 0.0
        %2098 = vmatpush1.msra.mxu0 0.0
        %2099 = vmatprep.subr.mxu0 0.0
        %2100 = vmatpush1.msra.mxu0 0.0
        %2101 = vmatprep.subr.mxu0 0.0
        %2102 = vmatpush1.msra.mxu0 0.0
        %2103 = vmatprep.subr.mxu0 0.0
        %2104 = vmatpush1.msra.mxu0 0.0
        %2105 = vmatprep.subr.mxu0 0.0
        %2106 = vmatpush1.msra.mxu0 0.0
        %2107 = vmatprep.subr.mxu0 0.0
        %2108 = vmatpush1.msra.mxu0 %v2070
        %2109 = vmatprep.subr.mxu0 0.0
        %2110 = vmatpush1.msra.mxu0 %v2068
        %2111 = vmatprep.subr.mxu0 0.0
        %2112 = vmatpush2.msra.mxu0 0.0
        %2113 = vmatprep.subr.mxu0 0.0
        %2114 = vmatpush2.msra.mxu0 0.0
        %2115 = vmatprep.subr.mxu0 0.0
        %2116 = vmatpush2.msra.mxu0 0.0
        %2117 = vmatprep.subr.mxu0 0.0
        %2118 = vmatpush2.msra.mxu0 0.0
        %2119 = vmatprep.subr.mxu0 0.0
        %2120 = vmatpush2.msra.mxu0 0.0
        %2121 = vmatprep.subr.mxu0 0.0
        %2122 = vmatpush2.msra.mxu0 0.0
        %2123 = vmatprep.subr.mxu0 0.0
        %2124 = vmatpush2.msra.mxu0 0.0
        %2125 = vmatprep.subr.mxu0 0.0
        %2126 = vmatpush2.msra.mxu0 0.0
        %2127 = vmatprep.subr.mxu0 0.0
        %2128 = vmatpush2.msra.mxu0 0.0
        %2129 = vmatprep.subr.mxu0 0.0
        %2130 = vmatpush2.msra.mxu0 0.0
        %2131 = vmatprep.subr.mxu0 0.0
        %2132 = vmatpush2.msra.mxu0 0.0
        %2133 = vmatprep.subr.mxu0 0.0
        %2134 = vmatpush2.msra.mxu0 0.0
        %2135 = vmatprep.subr.mxu0 0.0
        %2136 = vmatpush2.msra.mxu0 0.0
        %2137 = vmatprep.subr.mxu0 0.0
        %2138 = vmatpush2.msra.mxu0 0.0
        %2139 = vmatprep.subr.mxu0 0.0
        %2140 = vmatpush2.msra.mxu0 0.0
        %2141 = vmatprep.subr.mxu0 0.0
        %2142 = vmatpush2.msra.mxu0 0.0
        %2143 = vmatprep.mubr.f32.mxu0 0.0
        %2144 = vmatmul.mubr.f32.gmra.mxu0 %v2074
        %v2145 = vpop.f32.mrf.mxu0
        %v2146 = vadd.f32 0.0, %v2145
        %v2147 = vpop.f32.mrf.mxu0
        %2148 = vmatprep.mubr.f32.mxu0 0.0
        %2149 = vmatmul.mubr.f32.gmra.mxu0 %v2077
        %v2150 = vpop.f32.mrf.mxu0
        %v2151 = vadd.f32 0.0, %v2150
        %v2152 = vpop.f32.mrf.mxu0
        %2153 = vdwg.mxu0
        %v2155 = vsel %vm1116, %v2146, 0
        %v2158 = vsel %vm1116, %v2151, 0
        %2160 = vmatprep.subr.mxu0 0.0
        %2161 = vmatpush1.msra.mxu0 0.0
        %2162 = vmatprep.subr.mxu0 0.0
        %2163 = vmatpush1.msra.mxu0 0.0
        %2164 = vmatprep.subr.mxu0 0.0
        %2165 = vmatpush1.msra.mxu0 0.0
        %2166 = vmatprep.subr.mxu0 0.0
        %2167 = vmatpush1.msra.mxu0 0.0
        %2168 = vmatprep.subr.mxu0 0.0
        %2169 = vmatpush1.msra.mxu0 0.0
        %2170 = vmatprep.subr.mxu0 0.0
        %2171 = vmatpush1.msra.mxu0 0.0
        %2172 = vmatprep.subr.mxu0 0.0
        %2173 = vmatpush1.msra.mxu0 0.0
        %2174 = vmatprep.subr.mxu0 0.0
        %2175 = vmatpush1.msra.mxu0 0.0
        %2176 = vmatprep.subr.mxu0 0.0
        %2177 = vmatpush1.msra.mxu0 0.0
        %2178 = vmatprep.subr.mxu0 0.0
        %2179 = vmatpush1.msra.mxu0 0.0
        %2180 = vmatprep.subr.mxu0 0.0
        %2181 = vmatpush1.msra.mxu0 0.0
        %2182 = vmatprep.subr.mxu0 0.0
        %2183 = vmatpush1.msra.mxu0 0.0
        %2184 = vmatprep.subr.mxu0 0.0
        %2185 = vmatpush1.msra.mxu0 0.0
        %2186 = vmatprep.subr.mxu0 0.0
        %2187 = vmatpush1.msra.mxu0 0.0
        %2188 = vmatprep.subr.mxu0 0.0
        %2189 = vmatpush1.msra.mxu0 0.0
        %2190 = vmatprep.subr.mxu0 0.0
        %2191 = vmatpush1.msra.mxu0 %v1109
        %2192 = vmatprep.subr.mxu0 0.0
        %2193 = vmatpush2.msra.mxu0 0.0
        %2194 = vmatprep.subr.mxu0 0.0
        %2195 = vmatpush2.msra.mxu0 0.0
        %2196 = vmatprep.subr.mxu0 0.0
        %2197 = vmatpush2.msra.mxu0 0.0
        %2198 = vmatprep.subr.mxu0 0.0
        %2199 = vmatpush2.msra.mxu0 0.0
        %2200 = vmatprep.subr.mxu0 0.0
        %2201 = vmatpush2.msra.mxu0 0.0
        %2202 = vmatprep.subr.mxu0 0.0
        %2203 = vmatpush2.msra.mxu0 0.0
        %2204 = vmatprep.subr.mxu0 0.0
        %2205 = vmatpush2.msra.mxu0 0.0
        %2206 = vmatprep.subr.mxu0 0.0
        %2207 = vmatpush2.msra.mxu0 0.0
        %2208 = vmatprep.subr.mxu0 0.0
        %2209 = vmatpush2.msra.mxu0 0.0
        %2210 = vmatprep.subr.mxu0 0.0
        %2211 = vmatpush2.msra.mxu0 0.0
        %2212 = vmatprep.subr.mxu0 0.0
        %2213 = vmatpush2.msra.mxu0 0.0
        %2214 = vmatprep.subr.mxu0 0.0
        %2215 = vmatpush2.msra.mxu0 0.0
        %2216 = vmatprep.subr.mxu0 0.0
        %2217 = vmatpush2.msra.mxu0 0.0
        %2218 = vmatprep.subr.mxu0 0.0
        %2219 = vmatpush2.msra.mxu0 0.0
        %2220 = vmatprep.subr.mxu0 0.0
        %2221 = vmatpush2.msra.mxu0 0.0
        %2222 = vmatprep.subr.mxu0 0.0
        %2223 = vmatpush2.msra.mxu0 0.0
        %2224 = vmatprep.mubr.f32.mxu0 0.0
        %2225 = vmatmul.mubr.f32.gmra.mxu0 %v2155
        %v2226 = vpop.f32.mrf.mxu0
        %v2227 = vadd.f32 0.0, %v2226
        %v2228 = vpop.f32.mrf.mxu0
        %2229 = vmatprep.mubr.f32.mxu0 0.0
        %2230 = vmatmul.mubr.f32.gmra.mxu0 %v2158
        %v2231 = vpop.f32.mrf.mxu0
        %v2232 = vadd.f32 0.0, %v2231
        %v2233 = vpop.f32.mrf.mxu0
        %2234 = vdwg.mxu0
        %v2235 = vadd.f32 %v1952, %v2227
        %v2236 = vadd.f32 %v1953, %v2232
        %v2237 = vadd.f32 %v964, %v2235
        %v2238 = vadd.f32 %v965, %v2236
        %v2239 = vld [vmem:[%s12] sm:$0x1]
        %v2241 = vlaneseq
        %v2242 = vshrl.u32 %v2241, 7
        %v2243 = vsub.s32 0, %v2242
        %v2244 = vrot.slane %v2239, %v2243
        %v2246 = vadd.f32 %v2237, %v2244
        %v2247 = vadd.f32 %v2238, %v2244
        %v2248 = vld [vmem:[%s19] sm:$0x1]
        %v2249 = vld [vmem:[%s20] sm:$0x1]
        %v2250 = vsel %vm970, %v2246, 0.0
        %2251 = vadd.xlane.f32.xlu0 %v2250
        %v2252 = vpop.xlane.xlu0 %2251
        %v2253 = vsel %vm970, %v2247, 0.0
        %2254 = vadd.xlane.f32.xlu0 %v2253
        %v2255 = vpop.xlane.xlu0 %2254
        %v2256 = vmul.f32 %v2252, %v977
        %v2257 = vmul.f32 %v2255, %v977
        %v2258 = vsub.f32 %v2246, %v2256
        %v2259 = vsub.f32 %v2247, %v2257
        %v2260 = vmul.f32 %v2258, %v2258
        %v2261 = vmul.f32 %v2259, %v2259
        %v2262 = vsel %vm970, %v2260, 0.0
        %2263 = vadd.xlane.f32.xlu0 %v2262
        %v2264 = vpop.xlane.xlu0 %2263
        %v2265 = vsel %vm970, %v2261, 0.0
        %2266 = vadd.xlane.f32.xlu0 %v2265
        %v2267 = vpop.xlane.xlu0 %2266
        %v2268 = vmul.f32 %v2264, %v977
        %v2269 = vmul.f32 %v2267, %v977
        %v2270 = vadd.f32 %v2268, 1e-05
        %v2271 = vadd.f32 %v2269, 1e-05
        %v2272 = vrsqrt.pop %v2270
        %v2273 = vrsqrt.pop %v2271
        %v2274 = vmul.f32 %v2258, %v2272
        %v2275 = vmul.f32 %v2259, %v2273
        %v2277 = vlaneseq
        %v2278 = vshrl.u32 %v2277, 7
        %v2279 = vsub.s32 0, %v2278
        %v2280 = vrot.slane %v2248, %v2279
        %v2282 = vmul.f32 %v2274, %v2280
        %v2283 = vmul.f32 %v2275, %v2280
        %v2285 = vlaneseq
        %v2286 = vshrl.u32 %v2285, 7
        %v2287 = vsub.s32 0, %v2286
        %v2288 = vrot.slane %v2249, %v2287
        %v2290 = vadd.f32 %v2282, %v2288
        %v2291 = vadd.f32 %v2283, %v2288
        %v2292 = vld [vmem:[%s15] sm:$0xff]
        %v2293 = vld [vmem:[%s15 + $0x8] sm:$0xff]
        %v2294 = vld [vmem:[%s15 + $0x10] sm:$0xff]
        %v2295 = vld [vmem:[%s15 + $0x18] sm:$0xff]
        %v2296 = vld [vmem:[%s16] sm:$0x1]
        %v2298 = vlaneseq
        %v2299 = vshrl.u32 %v2298, 7
        %v2300 = vsub.s32 0, %v2299
        %v2301 = vrot.slane %v2296, %v2300
        %v2304 = vsel %vm970, %v2290, 0
        %v2307 = vsel %vm970, %v2291, 0
        %2309 = vmatprep.subr.mxu0 0.0
        %2310 = vmatpush1.msra.mxu0 0.0
        %2311 = vmatprep.subr.mxu0 0.0
        %2312 = vmatpush1.msra.mxu0 0.0
        %2313 = vmatprep.subr.mxu0 0.0
        %2314 = vmatpush1.msra.mxu0 0.0
        %2315 = vmatprep.subr.mxu0 0.0
        %2316 = vmatpush1.msra.mxu0 0.0
        %2317 = vmatprep.subr.mxu0 0.0
        %2318 = vmatpush1.msra.mxu0 0.0
        %2319 = vmatprep.subr.mxu0 0.0
        %2320 = vmatpush1.msra.mxu0 0.0
        %2321 = vmatprep.subr.mxu0 0.0
        %2322 = vmatpush1.msra.mxu0 0.0
        %2323 = vmatprep.subr.mxu0 0.0
        %2324 = vmatpush1.msra.mxu0 0.0
        %2325 = vmatprep.subr.mxu0 0.0
        %2326 = vmatpush1.msra.mxu0 0.0
        %2327 = vmatprep.subr.mxu0 0.0
        %2328 = vmatpush1.msra.mxu0 0.0
        %2329 = vmatprep.subr.mxu0 0.0
        %2330 = vmatpush1.msra.mxu0 0.0
        %2331 = vmatprep.subr.mxu0 0.0
        %2332 = vmatpush1.msra.mxu0 0.0
        %2333 = vmatprep.subr.mxu0 0.0
        %2334 = vmatpush1.msra.mxu0 %v2295
        %2335 = vmatprep.subr.mxu0 0.0
        %2336 = vmatpush1.msra.mxu0 %v2294
        %2337 = vmatprep.subr.mxu0 0.0
        %2338 = vmatpush1.msra.mxu0 %v2293
        %2339 = vmatprep.subr.mxu0 0.0
        %2340 = vmatpush1.msra.mxu0 %v2292
        %2341 = vmatprep.subr.mxu0 0.0
        %2342 = vmatpush2.msra.mxu0 0.0
        %2343 = vmatprep.subr.mxu0 0.0
        %2344 = vmatpush2.msra.mxu0 0.0
        %2345 = vmatprep.subr.mxu0 0.0
        %2346 = vmatpush2.msra.mxu0 0.0
        %2347 = vmatprep.subr.mxu0 0.0
        %2348 = vmatpush2.msra.mxu0 0.0
        %2349 = vmatprep.subr.mxu0 0.0
        %2350 = vmatpush2.msra.mxu0 0.0
        %2351 = vmatprep.subr.mxu0 0.0
        %2352 = vmatpush2.msra.mxu0 0.0
        %2353 = vmatprep.subr.mxu0 0.0
        %2354 = vmatpush2.msra.mxu0 0.0
        %2355 = vmatprep.subr.mxu0 0.0
        %2356 = vmatpush2.msra.mxu0 0.0
        %2357 = vmatprep.subr.mxu0 0.0
        %2358 = vmatpush2.msra.mxu0 0.0
        %2359 = vmatprep.subr.mxu0 0.0
        %2360 = vmatpush2.msra.mxu0 0.0
        %2361 = vmatprep.subr.mxu0 0.0
        %2362 = vmatpush2.msra.mxu0 0.0
        %2363 = vmatprep.subr.mxu0 0.0
        %2364 = vmatpush2.msra.mxu0 0.0
        %2365 = vmatprep.subr.mxu0 0.0
        %2366 = vmatpush2.msra.mxu0 0.0
        %2367 = vmatprep.subr.mxu0 0.0
        %2368 = vmatpush2.msra.mxu0 0.0
        %2369 = vmatprep.subr.mxu0 0.0
        %2370 = vmatpush2.msra.mxu0 0.0
        %2371 = vmatprep.subr.mxu0 0.0
        %2372 = vmatpush2.msra.mxu0 0.0
        %2373 = vmatprep.mubr.f32.mxu0 0.0
        %2374 = vmatmul.mubr.f32.gmra.mxu0 %v2304
        %v2375 = vpop.f32.mrf.mxu0
        %v2376 = vadd.f32 %v2301, %v2375
        %v2377 = vpop.f32.mrf.mxu0
        %2378 = vmatprep.mubr.f32.mxu0 0.0
        %2379 = vmatmul.mubr.f32.gmra.mxu0 %v2307
        %v2380 = vpop.f32.mrf.mxu0
        %v2381 = vadd.f32 %v2301, %v2380
        %v2382 = vpop.f32.mrf.mxu0
        %2383 = vdwg.mxu0
        %v2384 = vmax.f32 %v2376, 0.0
        %v2385 = vmax.f32 %v2381, 0.0
        %v2386 = vld [vmem:[%s17] sm:$0xff]
        %v2387 = vld [vmem:[%s17 + $0x8] sm:$0xff]
        %v2388 = vld [vmem:[%s17 + $0x10] sm:$0xff]
        %v2389 = vld [vmem:[%s17 + $0x18] sm:$0xff]
        %v2390 = vld [vmem:[%s17 + $0x20] sm:$0xff]
        %v2391 = vld [vmem:[%s17 + $0x28] sm:$0xff]
        %v2392 = vld [vmem:[%s17 + $0x30] sm:$0xff]
        %v2393 = vld [vmem:[%s17 + $0x38] sm:$0xff]
        %v2394 = vld [vmem:[%s17 + $0x40] sm:$0xff]
        %v2395 = vld [vmem:[%s17 + $0x48] sm:$0xff]
        %v2396 = vld [vmem:[%s17 + $0x50] sm:$0xff]
        %v2397 = vld [vmem:[%s17 + $0x58] sm:$0xff]
        %v2398 = vld [vmem:[%s17 + $0x60] sm:$0xff]
        %v2399 = vld [vmem:[%s17 + $0x68] sm:$0xff]
        %v2400 = vld [vmem:[%s17 + $0x70] sm:$0xff]
        %v2401 = vld [vmem:[%s17 + $0x78] sm:$0xff]
        %v2402 = vld [vmem:[%s18] sm:$0x1]
        %v2404 = vlaneseq
        %v2405 = vshrl.u32 %v2404, 7
        %v2406 = vsub.s32 0, %v2405
        %v2407 = vrot.slane %v2402, %v2406
        %2409 = vmatprep.subr.mxu0 0.0
        %2410 = vmatpush1.msra.mxu0 %v2401
        %2411 = vmatprep.subr.mxu0 0.0
        %2412 = vmatpush1.msra.mxu0 %v2400
        %2413 = vmatprep.subr.mxu0 0.0
        %2414 = vmatpush1.msra.mxu0 %v2399
        %2415 = vmatprep.subr.mxu0 0.0
        %2416 = vmatpush1.msra.mxu0 %v2398
        %2417 = vmatprep.subr.mxu0 0.0
        %2418 = vmatpush1.msra.mxu0 %v2397
        %2419 = vmatprep.subr.mxu0 0.0
        %2420 = vmatpush1.msra.mxu0 %v2396
        %2421 = vmatprep.subr.mxu0 0.0
        %2422 = vmatpush1.msra.mxu0 %v2395
        %2423 = vmatprep.subr.mxu0 0.0
        %2424 = vmatpush1.msra.mxu0 %v2394
        %2425 = vmatprep.subr.mxu0 0.0
        %2426 = vmatpush1.msra.mxu0 %v2393
        %2427 = vmatprep.subr.mxu0 0.0
        %2428 = vmatpush1.msra.mxu0 %v2392
        %2429 = vmatprep.subr.mxu0 0.0
        %2430 = vmatpush1.msra.mxu0 %v2391
        %2431 = vmatprep.subr.mxu0 0.0
        %2432 = vmatpush1.msra.mxu0 %v2390
        %2433 = vmatprep.subr.mxu0 0.0
        %2434 = vmatpush1.msra.mxu0 %v2389
        %2435 = vmatprep.subr.mxu0 0.0
        %2436 = vmatpush1.msra.mxu0 %v2388
        %2437 = vmatprep.subr.mxu0 0.0
        %2438 = vmatpush1.msra.mxu0 %v2387
        %2439 = vmatprep.subr.mxu0 0.0
        %2440 = vmatpush1.msra.mxu0 %v2386
        %2441 = vmatprep.subr.mxu0 0.0
        %2442 = vmatpush2.msra.mxu0 0.0
        %2443 = vmatprep.subr.mxu0 0.0
        %2444 = vmatpush2.msra.mxu0 0.0
        %2445 = vmatprep.subr.mxu0 0.0
        %2446 = vmatpush2.msra.mxu0 0.0
        %2447 = vmatprep.subr.mxu0 0.0
        %2448 = vmatpush2.msra.mxu0 0.0
        %2449 = vmatprep.subr.mxu0 0.0
        %2450 = vmatpush2.msra.mxu0 0.0
        %2451 = vmatprep.subr.mxu0 0.0
        %2452 = vmatpush2.msra.mxu0 0.0
        %2453 = vmatprep.subr.mxu0 0.0
        %2454 = vmatpush2.msra.mxu0 0.0
        %2455 = vmatprep.subr.mxu0 0.0
        %2456 = vmatpush2.msra.mxu0 0.0
        %2457 = vmatprep.subr.mxu0 0.0
        %2458 = vmatpush2.msra.mxu0 0.0
        %2459 = vmatprep.subr.mxu0 0.0
        %2460 = vmatpush2.msra.mxu0 0.0
        %2461 = vmatprep.subr.mxu0 0.0
        %2462 = vmatpush2.msra.mxu0 0.0
        %2463 = vmatprep.subr.mxu0 0.0
        %2464 = vmatpush2.msra.mxu0 0.0
        %2465 = vmatprep.subr.mxu0 0.0
        %2466 = vmatpush2.msra.mxu0 0.0
        %2467 = vmatprep.subr.mxu0 0.0
        %2468 = vmatpush2.msra.mxu0 0.0
        %2469 = vmatprep.subr.mxu0 0.0
        %2470 = vmatpush2.msra.mxu0 0.0
        %2471 = vmatprep.subr.mxu0 0.0
        %2472 = vmatpush2.msra.mxu0 0.0
        %2473 = vmatprep.mubr.f32.mxu0 0.0
        %2474 = vmatmul.mubr.f32.gmra.mxu0 %v2384
        %v2475 = vpop.f32.mrf.mxu0
        %v2476 = vadd.f32 %v2407, %v2475
        %v2477 = vpop.f32.mrf.mxu0
        %2478 = vmatprep.mubr.f32.mxu0 0.0
        %2479 = vmatmul.mubr.f32.gmra.mxu0 %v2385
        %v2480 = vpop.f32.mrf.mxu0
        %v2481 = vadd.f32 %v2407, %v2480
        %v2482 = vpop.f32.mrf.mxu0
        %2483 = vdwg.mxu0
        %v2484 = vadd.f32 %v2246, %v2476
        %v2485 = vadd.f32 %v2247, %v2481
        %s2486 = scalar_lea.vmem %s13, 1
        %v2487 = vld [vmem:[%s2486] sm:$0x1]
        %s2488 = scalar_lea.vmem %s14, 1
        %v2489 = vld [vmem:[%s2488] sm:$0x1]
        %v2490 = vsel %vm970, %v2484, 0.0
        %2491 = vadd.xlane.f32.xlu0 %v2490
        %v2492 = vpop.xlane.xlu0 %2491
        %v2493 = vsel %vm970, %v2485, 0.0
        %2494 = vadd.xlane.f32.xlu0 %v2493
        %v2495 = vpop.xlane.xlu0 %2494
        %v2496 = vmul.f32 %v2492, %v977
        %v2497 = vmul.f32 %v2495, %v977
        %v2498 = vsub.f32 %v2484, %v2496
        %v2499 = vsub.f32 %v2485, %v2497
        %v2500 = vmul.f32 %v2498, %v2498
        %v2501 = vmul.f32 %v2499, %v2499
        %v2502 = vsel %vm970, %v2500, 0.0
        %2503 = vadd.xlane.f32.xlu0 %v2502
        %v2504 = vpop.xlane.xlu0 %2503
        %v2505 = vsel %vm970, %v2501, 0.0
        %2506 = vadd.xlane.f32.xlu0 %v2505
        %v2507 = vpop.xlane.xlu0 %2506
        %v2508 = vmul.f32 %v2504, %v977
        %v2509 = vmul.f32 %v2507, %v977
        %v2510 = vadd.f32 %v2508, 1e-05
        %v2511 = vadd.f32 %v2509, 1e-05
        %v2512 = vrsqrt.pop %v2510
        %v2513 = vrsqrt.pop %v2511
        %v2514 = vmul.f32 %v2498, %v2512
        %v2515 = vmul.f32 %v2499, %v2513
        %v2517 = vlaneseq
        %v2518 = vshrl.u32 %v2517, 7
        %v2519 = vsub.s32 0, %v2518
        %v2520 = vrot.slane %v2487, %v2519
        %v2522 = vmul.f32 %v2514, %v2520
        %v2523 = vmul.f32 %v2515, %v2520
        %v2525 = vlaneseq
        %v2526 = vshrl.u32 %v2525, 7
        %v2527 = vsub.s32 0, %v2526
        %v2528 = vrot.slane %v2489, %v2527
        %v2530 = vadd.f32 %v2522, %v2528
        %v2531 = vadd.f32 %v2523, %v2528
        %s2532 = scalar_lea.vmem %s9, 32
        %v2533 = vld [vmem:[%s2532] sm:$0xff]
        %v2534 = vld [vmem:[%s2532 + $0x8] sm:$0xff]
        %v2535 = vld [vmem:[%s2532 + $0x10] sm:$0xff]
        %v2536 = vld [vmem:[%s2532 + $0x18] sm:$0xff]
        %s2537 = scalar_lea.vmem %s10, 1
        %v2538 = vld [vmem:[%s2537] sm:$0x1]
        %v2540 = vlaneseq
        %v2541 = vshrl.u32 %v2540, 7
        %v2542 = vsub.s32 0, %v2541
        %v2543 = vrot.slane %v2538, %v2542
        %v2546 = vsel %vm970, %v2530, 0
        %v2549 = vsel %vm970, %v2531, 0
        %2551 = vmatprep.subr.mxu0 0.0
        %2552 = vmatpush1.msra.mxu0 0.0
        %2553 = vmatprep.subr.mxu0 0.0
        %2554 = vmatpush1.msra.mxu0 0.0
        %2555 = vmatprep.subr.mxu0 0.0
        %2556 = vmatpush1.msra.mxu0 0.0
        %2557 = vmatprep.subr.mxu0 0.0
        %2558 = vmatpush1.msra.mxu0 0.0
        %2559 = vmatprep.subr.mxu0 0.0
        %2560 = vmatpush1.msra.mxu0 0.0
        %2561 = vmatprep.subr.mxu0 0.0
        %2562 = vmatpush1.msra.mxu0 0.0
        %2563 = vmatprep.subr.mxu0 0.0
        %2564 = vmatpush1.msra.mxu0 0.0
        %2565 = vmatprep.subr.mxu0 0.0
        %2566 = vmatpush1.msra.mxu0 0.0
        %2567 = vmatprep.subr.mxu0 0.0
        %2568 = vmatpush1.msra.mxu0 0.0
        %2569 = vmatprep.subr.mxu0 0.0
        %2570 = vmatpush1.msra.mxu0 0.0
        %2571 = vmatprep.subr.mxu0 0.0
        %2572 = vmatpush1.msra.mxu0 0.0
        %2573 = vmatprep.subr.mxu0 0.0
        %2574 = vmatpush1.msra.mxu0 0.0
        %2575 = vmatprep.subr.mxu0 0.0
        %2576 = vmatpush1.msra.mxu0 %v2536
        %2577 = vmatprep.subr.mxu0 0.0
        %2578 = vmatpush1.msra.mxu0 %v2535
        %2579 = vmatprep.subr.mxu0 0.0
        %2580 = vmatpush1.msra.mxu0 %v2534
        %2581 = vmatprep.subr.mxu0 0.0
        %2582 = vmatpush1.msra.mxu0 %v2533
        %2583 = vmatprep.subr.mxu0 0.0
        %2584 = vmatpush2.msra.mxu0 0.0
        %2585 = vmatprep.subr.mxu0 0.0
        %2586 = vmatpush2.msra.mxu0 0.0
        %2587 = vmatprep.subr.mxu0 0.0
        %2588 = vmatpush2.msra.mxu0 0.0
        %2589 = vmatprep.subr.mxu0 0.0
        %2590 = vmatpush2.msra.mxu0 0.0
        %2591 = vmatprep.subr.mxu0 0.0
        %2592 = vmatpush2.msra.mxu0 0.0
        %2593 = vmatprep.subr.mxu0 0.0
        %2594 = vmatpush2.msra.mxu0 0.0
        %2595 = vmatprep.subr.mxu0 0.0
        %2596 = vmatpush2.msra.mxu0 0.0
        %2597 = vmatprep.subr.mxu0 0.0
        %2598 = vmatpush2.msra.mxu0 0.0
        %2599 = vmatprep.subr.mxu0 0.0
        %2600 = vmatpush2.msra.mxu0 0.0
        %2601 = vmatprep.subr.mxu0 0.0
        %2602 = vmatpush2.msra.mxu0 0.0
        %2603 = vmatprep.subr.mxu0 0.0
        %2604 = vmatpush2.msra.mxu0 0.0
        %2605 = vmatprep.subr.mxu0 0.0
        %2606 = vmatpush2.msra.mxu0 0.0
        %2607 = vmatprep.subr.mxu0 0.0
        %2608 = vmatpush2.msra.mxu0 0.0
        %2609 = vmatprep.subr.mxu0 0.0
        %2610 = vmatpush2.msra.mxu0 0.0
        %2611 = vmatprep.subr.mxu0 0.0
        %2612 = vmatpush2.msra.mxu0 0.0
        %2613 = vmatprep.subr.mxu0 0.0
        %2614 = vmatpush2.msra.mxu0 0.0
        %2615 = vmatprep.mubr.f32.mxu0 0.0
        %2616 = vmatmul.mubr.f32.gmra.mxu0 %v2546
        %v2617 = vpop.f32.mrf.mxu0
        %v2618 = vadd.f32 %v2543, %v2617
        %v2619 = vpop.f32.mrf.mxu0
        %2620 = vmatprep.mubr.f32.mxu0 0.0
        %2621 = vmatmul.mubr.f32.gmra.mxu0 %v2549
        %v2622 = vpop.f32.mrf.mxu0
        %v2623 = vadd.f32 %v2543, %v2622
        %v2624 = vpop.f32.mrf.mxu0
        %2625 = vdwg.mxu0
        %s2626 = scalar_lea.vmem %s11, 32
        %v2627 = vld [vmem:[%s2626] sm:$0xff]
        %v2628 = vld [vmem:[%s2626 + $0x8] sm:$0xff]
        %v2629 = vld [vmem:[%s2626 + $0x10] sm:$0xff]
        %v2630 = vld [vmem:[%s2626 + $0x18] sm:$0xff]
        %2633 = vrot.lane.b32.xlu0 %v2618, 96
        %v2634 = vpop.permute.xlu0 %2633
        %2635 = vrot.lane.b32.xlu0 %v2623, 96
        %v2636 = vpop.permute.xlu0 %2635
        %v2637 = vsel %vm1116, %v2618, 0
        %v2639 = vsel %vm1116, %v2623, 0
        %v2641 = vsel %vm1116, %v2634, 0
        %v2643 = vsel %vm1116, %v2636, 0
        %2645 = vmatprep.subr.mxu0 0.0
        %2646 = vmatpush1.xpose.msra.mxu0 0.0
        %2647 = vmatprep.subr.mxu0 0.0
        %2648 = vmatpush1.xpose.msra.mxu0 0.0
        %2649 = vmatprep.subr.mxu0 0.0
        %2650 = vmatpush1.xpose.msra.mxu0 0.0
        %2651 = vmatprep.subr.mxu0 0.0
        %2652 = vmatpush1.xpose.msra.mxu0 0.0
        %2653 = vmatprep.subr.mxu0 0.0
        %2654 = vmatpush1.xpose.msra.mxu0 0.0
        %2655 = vmatprep.subr.mxu0 0.0
        %2656 = vmatpush1.xpose.msra.mxu0 0.0
        %2657 = vmatprep.subr.mxu0 0.0
        %2658 = vmatpush1.xpose.msra.mxu0 0.0
        %2659 = vmatprep.subr.mxu0 0.0
        %2660 = vmatpush1.xpose.msra.mxu0 0.0
        %2661 = vmatprep.subr.mxu0 0.0
        %2662 = vmatpush1.xpose.msra.mxu0 0.0
        %2663 = vmatprep.subr.mxu0 0.0
        %2664 = vmatpush1.xpose.msra.mxu0 0.0
        %2665 = vmatprep.subr.mxu0 0.0
        %2666 = vmatpush1.xpose.msra.mxu0 0.0
        %2667 = vmatprep.subr.mxu0 0.0
        %2668 = vmatpush1.xpose.msra.mxu0 0.0
        %2669 = vmatprep.subr.mxu0 0.0
        %2670 = vmatpush1.xpose.msra.mxu0 0.0
        %2671 = vmatprep.subr.mxu0 0.0
        %2672 = vmatpush1.xpose.msra.mxu0 0.0
        %2673 = vmatprep.subr.mxu0 0.0
        %2674 = vmatpush1.xpose.msra.mxu0 %v2643
        %2675 = vmatprep.subr.mxu0 0.0
        %2676 = vmatpush1.xpose.msra.mxu0 %v2641
        %2677 = vmatprep.subr.mxu0 0.0
        %2678 = vmatpush2.xpose.msra.mxu0 0.0
        %2679 = vmatprep.subr.mxu0 0.0
        %2680 = vmatpush2.xpose.msra.mxu0 0.0
        %2681 = vmatprep.subr.mxu0 0.0
        %2682 = vmatpush2.xpose.msra.mxu0 0.0
        %2683 = vmatprep.subr.mxu0 0.0
        %2684 = vmatpush2.xpose.msra.mxu0 0.0
        %2685 = vmatprep.subr.mxu0 0.0
        %2686 = vmatpush2.xpose.msra.mxu0 0.0
        %2687 = vmatprep.subr.mxu0 0.0
        %2688 = vmatpush2.xpose.msra.mxu0 0.0
        %2689 = vmatprep.subr.mxu0 0.0
        %2690 = vmatpush2.xpose.msra.mxu0 0.0
        %2691 = vmatprep.subr.mxu0 0.0
        %2692 = vmatpush2.xpose.msra.mxu0 0.0
        %2693 = vmatprep.subr.mxu0 0.0
        %2694 = vmatpush2.xpose.msra.mxu0 0.0
        %2695 = vmatprep.subr.mxu0 0.0
        %2696 = vmatpush2.xpose.msra.mxu0 0.0
        %2697 = vmatprep.subr.mxu0 0.0
        %2698 = vmatpush2.xpose.msra.mxu0 0.0
        %2699 = vmatprep.subr.mxu0 0.0
        %2700 = vmatpush2.xpose.msra.mxu0 0.0
        %2701 = vmatprep.subr.mxu0 0.0
        %2702 = vmatpush2.xpose.msra.mxu0 0.0
        %2703 = vmatprep.subr.mxu0 0.0
        %2704 = vmatpush2.xpose.msra.mxu0 0.0
        %2705 = vmatprep.subr.mxu0 0.0
        %2706 = vmatpush2.xpose.msra.mxu0 0.0
        %2707 = vmatprep.subr.mxu0 0.0
        %2708 = vmatpush2.xpose.msra.mxu0 0.0
        %2709 = vmatprep.mubr.f32.mxu0 0.0
        %2710 = vmatmul.mubr.f32.gmra.mxu0 %v2637
        %v2711 = vpop.f32.mrf.mxu0
        %v2712 = vadd.f32 %v966, %v2711
        %v2713 = vpop.f32.mrf.mxu0
        %2714 = vmatprep.mubr.f32.mxu0 0.0
        %2715 = vmatmul.mubr.f32.gmra.mxu0 %v2639
        %v2716 = vpop.f32.mrf.mxu0
        %v2717 = vadd.f32 %v967, %v2716
        %v2718 = vpop.f32.mrf.mxu0
        %2719 = vdwg.mxu0
        %v2720 = vsel %vm873, %v2712, -inf
        %2721 = vmax.xlane.f32.xlu0 %v2720
        %v2722 = vpop.xlane.xlu0 %2721
        %v2723 = vsel %vm873, %v2717, -inf
        %2724 = vmax.xlane.f32.xlu0 %v2723
        %v2725 = vpop.xlane.xlu0 %2724
        %v2726 = vsub.f32 %v2712, %v2722
        %v2727 = vsub.f32 %v2717, %v2725
        %v2728 = vmul.f32 %v2726, 1.442695
        %v2729 = vpow.pop %v2728
        %v2730 = vmul.f32 %v2727, 1.442695
        %v2731 = vpow.pop %v2730
        %v2732 = vsel %vm873, %v2729, 0.0
        %2733 = vadd.xlane.f32.xlu0 %v2732
        %v2734 = vpop.xlane.xlu0 %2733
        %v2735 = vsel %vm873, %v2731, 0.0
        %2736 = vadd.xlane.f32.xlu0 %v2735
        %v2737 = vpop.xlane.xlu0 %2736
        %v2738 = vrcp.pop %v2734
        %v2739 = vrcp.pop %v2737
        %v2740 = vmul.f32 %v2729, %v2738
        %v2741 = vmul.f32 %v2731, %v2739
        %2742 = vrot.lane.b32.xlu0 %v2618, 64
        %v2743 = vpop.permute.xlu0 %2742
        %2744 = vrot.lane.b32.xlu0 %v2623, 64
        %v2745 = vpop.permute.xlu0 %2744
        %v2749 = vsel %vm873, %v2740, 0
        %v2752 = vsel %vm873, %v2741, 0
        %2754 = vmatprep.subr.mxu0 0.0
        %2755 = vmatpush1.msra.mxu0 0.0
        %2756 = vmatprep.subr.mxu0 0.0
        %2757 = vmatpush1.msra.mxu0 0.0
        %2758 = vmatprep.subr.mxu0 0.0
        %2759 = vmatpush1.msra.mxu0 0.0
        %2760 = vmatprep.subr.mxu0 0.0
        %2761 = vmatpush1.msra.mxu0 0.0
        %2762 = vmatprep.subr.mxu0 0.0
        %2763 = vmatpush1.msra.mxu0 0.0
        %2764 = vmatprep.subr.mxu0 0.0
        %2765 = vmatpush1.msra.mxu0 0.0
        %2766 = vmatprep.subr.mxu0 0.0
        %2767 = vmatpush1.msra.mxu0 0.0
        %2768 = vmatprep.subr.mxu0 0.0
        %2769 = vmatpush1.msra.mxu0 0.0
        %2770 = vmatprep.subr.mxu0 0.0
        %2771 = vmatpush1.msra.mxu0 0.0
        %2772 = vmatprep.subr.mxu0 0.0
        %2773 = vmatpush1.msra.mxu0 0.0
        %2774 = vmatprep.subr.mxu0 0.0
        %2775 = vmatpush1.msra.mxu0 0.0
        %2776 = vmatprep.subr.mxu0 0.0
        %2777 = vmatpush1.msra.mxu0 0.0
        %2778 = vmatprep.subr.mxu0 0.0
        %2779 = vmatpush1.msra.mxu0 0.0
        %2780 = vmatprep.subr.mxu0 0.0
        %2781 = vmatpush1.msra.mxu0 0.0
        %2782 = vmatprep.subr.mxu0 0.0
        %2783 = vmatpush1.msra.mxu0 %v2745
        %2784 = vmatprep.subr.mxu0 0.0
        %2785 = vmatpush1.msra.mxu0 %v2743
        %2786 = vmatprep.subr.mxu0 0.0
        %2787 = vmatpush2.msra.mxu0 0.0
        %2788 = vmatprep.subr.mxu0 0.0
        %2789 = vmatpush2.msra.mxu0 0.0
        %2790 = vmatprep.subr.mxu0 0.0
        %2791 = vmatpush2.msra.mxu0 0.0
        %2792 = vmatprep.subr.mxu0 0.0
        %2793 = vmatpush2.msra.mxu0 0.0
        %2794 = vmatprep.subr.mxu0 0.0
        %2795 = vmatpush2.msra.mxu0 0.0
        %2796 = vmatprep.subr.mxu0 0.0
        %2797 = vmatpush2.msra.mxu0 0.0
        %2798 = vmatprep.subr.mxu0 0.0
        %2799 = vmatpush2.msra.mxu0 0.0
        %2800 = vmatprep.subr.mxu0 0.0
        %2801 = vmatpush2.msra.mxu0 0.0
        %2802 = vmatprep.subr.mxu0 0.0
        %2803 = vmatpush2.msra.mxu0 0.0
        %2804 = vmatprep.subr.mxu0 0.0
        %2805 = vmatpush2.msra.mxu0 0.0
        %2806 = vmatprep.subr.mxu0 0.0
        %2807 = vmatpush2.msra.mxu0 0.0
        %2808 = vmatprep.subr.mxu0 0.0
        %2809 = vmatpush2.msra.mxu0 0.0
        %2810 = vmatprep.subr.mxu0 0.0
        %2811 = vmatpush2.msra.mxu0 0.0
        %2812 = vmatprep.subr.mxu0 0.0
        %2813 = vmatpush2.msra.mxu0 0.0
        %2814 = vmatprep.subr.mxu0 0.0
        %2815 = vmatpush2.msra.mxu0 0.0
        %2816 = vmatprep.subr.mxu0 0.0
        %2817 = vmatpush2.msra.mxu0 0.0
        %2818 = vmatprep.mubr.f32.mxu0 0.0
        %2819 = vmatmul.mubr.f32.gmra.mxu0 %v2749
        %v2820 = vpop.f32.mrf.mxu0
        %v2821 = vadd.f32 0.0, %v2820
        %v2822 = vpop.f32.mrf.mxu0
        %2823 = vmatprep.mubr.f32.mxu0 0.0
        %2824 = vmatmul.mubr.f32.gmra.mxu0 %v2752
        %v2825 = vpop.f32.mrf.mxu0
        %v2826 = vadd.f32 0.0, %v2825
        %v2827 = vpop.f32.mrf.mxu0
        %2828 = vdwg.mxu0
        %2829 = vrot.lane.b32.xlu0 %v2618, 120
        %v2830 = vpop.permute.xlu0 %2829
        %2831 = vrot.lane.b32.xlu0 %v2623, 120
        %v2832 = vpop.permute.xlu0 %2831
        %2833 = vrot.lane.b32.xlu0 %v2618, 88
        %v2834 = vpop.permute.xlu0 %2833
        %2835 = vrot.lane.b32.xlu0 %v2623, 88
        %v2836 = vpop.permute.xlu0 %2835
        %v2837 = vsel %vm1116, %v2830, 0
        %v2839 = vsel %vm1116, %v2832, 0
        %v2841 = vsel %vm1116, %v2834, 0
        %v2843 = vsel %vm1116, %v2836, 0
        %2845 = vmatprep.subr.mxu0 0.0
        %2846 = vmatpush1.xpose.msra.mxu0 0.0
        %2847 = vmatprep.subr.mxu0 0.0
        %2848 = vmatpush1.xpose.msra.mxu0 0.0
        %2849 = vmatprep.subr.mxu0 0.0
        %2850 = vmatpush1.xpose.msra.mxu0 0.0
        %2851 = vmatprep.subr.mxu0 0.0
        %2852 = vmatpush1.xpose.msra.mxu0 0.0
        %2853 = vmatprep.subr.mxu0 0.0
        %2854 = vmatpush1.xpose.msra.mxu0 0.0
        %2855 = vmatprep.subr.mxu0 0.0
        %2856 = vmatpush1.xpose.msra.mxu0 0.0
        %2857 = vmatprep.subr.mxu0 0.0
        %2858 = vmatpush1.xpose.msra.mxu0 0.0
        %2859 = vmatprep.subr.mxu0 0.0
        %2860 = vmatpush1.xpose.msra.mxu0 0.0
        %2861 = vmatprep.subr.mxu0 0.0
        %2862 = vmatpush1.xpose.msra.mxu0 0.0
        %2863 = vmatprep.subr.mxu0 0.0
        %2864 = vmatpush1.xpose.msra.mxu0 0.0
        %2865 = vmatprep.subr.mxu0 0.0
        %2866 = vmatpush1.xpose.msra.mxu0 0.0
        %2867 = vmatprep.subr.mxu0 0.0
        %2868 = vmatpush1.xpose.msra.mxu0 0.0
        %2869 = vmatprep.subr.mxu0 0.0
        %2870 = vmatpush1.xpose.msra.mxu0 0.0
        %2871 = vmatprep.subr.mxu0 0.0
        %2872 = vmatpush1.xpose.msra.mxu0 0.0
        %2873 = vmatprep.subr.mxu0 0.0
        %2874 = vmatpush1.xpose.msra.mxu0 %v2843
        %2875 = vmatprep.subr.mxu0 0.0
        %2876 = vmatpush1.xpose.msra.mxu0 %v2841
        %2877 = vmatprep.subr.mxu0 0.0
        %2878 = vmatpush2.xpose.msra.mxu0 0.0
        %2879 = vmatprep.subr.mxu0 0.0
        %2880 = vmatpush2.xpose.msra.mxu0 0.0
        %2881 = vmatprep.subr.mxu0 0.0
        %2882 = vmatpush2.xpose.msra.mxu0 0.0
        %2883 = vmatprep.subr.mxu0 0.0
        %2884 = vmatpush2.xpose.msra.mxu0 0.0
        %2885 = vmatprep.subr.mxu0 0.0
        %2886 = vmatpush2.xpose.msra.mxu0 0.0
        %2887 = vmatprep.subr.mxu0 0.0
        %2888 = vmatpush2.xpose.msra.mxu0 0.0
        %2889 = vmatprep.subr.mxu0 0.0
        %2890 = vmatpush2.xpose.msra.mxu0 0.0
        %2891 = vmatprep.subr.mxu0 0.0
        %2892 = vmatpush2.xpose.msra.mxu0 0.0
        %2893 = vmatprep.subr.mxu0 0.0
        %2894 = vmatpush2.xpose.msra.mxu0 0.0
        %2895 = vmatprep.subr.mxu0 0.0
        %2896 = vmatpush2.xpose.msra.mxu0 0.0
        %2897 = vmatprep.subr.mxu0 0.0
        %2898 = vmatpush2.xpose.msra.mxu0 0.0
        %2899 = vmatprep.subr.mxu0 0.0
        %2900 = vmatpush2.xpose.msra.mxu0 0.0
        %2901 = vmatprep.subr.mxu0 0.0
        %2902 = vmatpush2.xpose.msra.mxu0 0.0
        %2903 = vmatprep.subr.mxu0 0.0
        %2904 = vmatpush2.xpose.msra.mxu0 0.0
        %2905 = vmatprep.subr.mxu0 0.0
        %2906 = vmatpush2.xpose.msra.mxu0 0.0
        %2907 = vmatprep.subr.mxu0 0.0
        %2908 = vmatpush2.xpose.msra.mxu0 0.0
        %2909 = vmatprep.mubr.f32.mxu0 0.0
        %2910 = vmatmul.mubr.f32.gmra.mxu0 %v2837
        %v2911 = vpop.f32.mrf.mxu0
        %v2912 = vadd.f32 %v966, %v2911
        %v2913 = vpop.f32.mrf.mxu0
        %2914 = vmatprep.mubr.f32.mxu0 0.0
        %2915 = vmatmul.mubr.f32.gmra.mxu0 %v2839
        %v2916 = vpop.f32.mrf.mxu0
        %v2917 = vadd.f32 %v967, %v2916
        %v2918 = vpop.f32.mrf.mxu0
        %2919 = vdwg.mxu0
        %v2920 = vsel %vm873, %v2912, -inf
        %2921 = vmax.xlane.f32.xlu0 %v2920
        %v2922 = vpop.xlane.xlu0 %2921
        %v2923 = vsel %vm873, %v2917, -inf
        %2924 = vmax.xlane.f32.xlu0 %v2923
        %v2925 = vpop.xlane.xlu0 %2924
        %v2926 = vsub.f32 %v2912, %v2922
        %v2927 = vsub.f32 %v2917, %v2925
        %v2928 = vmul.f32 %v2926, 1.442695
        %v2929 = vpow.pop %v2928
        %v2930 = vmul.f32 %v2927, 1.442695
        %v2931 = vpow.pop %v2930
        %v2932 = vsel %vm873, %v2929, 0.0
        %2933 = vadd.xlane.f32.xlu0 %v2932
        %v2934 = vpop.xlane.xlu0 %2933
        %v2935 = vsel %vm873, %v2931, 0.0
        %2936 = vadd.xlane.f32.xlu0 %v2935
        %v2937 = vpop.xlane.xlu0 %2936
        %v2938 = vrcp.pop %v2934
        %v2939 = vrcp.pop %v2937
        %v2940 = vmul.f32 %v2929, %v2938
        %v2941 = vmul.f32 %v2931, %v2939
        %2942 = vrot.lane.b32.xlu0 %v2618, 56
        %v2943 = vpop.permute.xlu0 %2942
        %2944 = vrot.lane.b32.xlu0 %v2623, 56
        %v2945 = vpop.permute.xlu0 %2944
        %v2949 = vsel %vm873, %v2940, 0
        %v2952 = vsel %vm873, %v2941, 0
        %2954 = vmatprep.subr.mxu0 0.0
        %2955 = vmatpush1.msra.mxu0 0.0
        %2956 = vmatprep.subr.mxu0 0.0
        %2957 = vmatpush1.msra.mxu0 0.0
        %2958 = vmatprep.subr.mxu0 0.0
        %2959 = vmatpush1.msra.mxu0 0.0
        %2960 = vmatprep.subr.mxu0 0.0
        %2961 = vmatpush1.msra.mxu0 0.0
        %2962 = vmatprep.subr.mxu0 0.0
        %2963 = vmatpush1.msra.mxu0 0.0
        %2964 = vmatprep.subr.mxu0 0.0
        %2965 = vmatpush1.msra.mxu0 0.0
        %2966 = vmatprep.subr.mxu0 0.0
        %2967 = vmatpush1.msra.mxu0 0.0
        %2968 = vmatprep.subr.mxu0 0.0
        %2969 = vmatpush1.msra.mxu0 0.0
        %2970 = vmatprep.subr.mxu0 0.0
        %2971 = vmatpush1.msra.mxu0 0.0
        %2972 = vmatprep.subr.mxu0 0.0
        %2973 = vmatpush1.msra.mxu0 0.0
        %2974 = vmatprep.subr.mxu0 0.0
        %2975 = vmatpush1.msra.mxu0 0.0
        %2976 = vmatprep.subr.mxu0 0.0
        %2977 = vmatpush1.msra.mxu0 0.0
        %2978 = vmatprep.subr.mxu0 0.0
        %2979 = vmatpush1.msra.mxu0 0.0
        %2980 = vmatprep.subr.mxu0 0.0
        %2981 = vmatpush1.msra.mxu0 0.0
        %2982 = vmatprep.subr.mxu0 0.0
        %2983 = vmatpush1.msra.mxu0 %v2945
        %2984 = vmatprep.subr.mxu0 0.0
        %2985 = vmatpush1.msra.mxu0 %v2943
        %2986 = vmatprep.subr.mxu0 0.0
        %2987 = vmatpush2.msra.mxu0 0.0
        %2988 = vmatprep.subr.mxu0 0.0
        %2989 = vmatpush2.msra.mxu0 0.0
        %2990 = vmatprep.subr.mxu0 0.0
        %2991 = vmatpush2.msra.mxu0 0.0
        %2992 = vmatprep.subr.mxu0 0.0
        %2993 = vmatpush2.msra.mxu0 0.0
        %2994 = vmatprep.subr.mxu0 0.0
        %2995 = vmatpush2.msra.mxu0 0.0
        %2996 = vmatprep.subr.mxu0 0.0
        %2997 = vmatpush2.msra.mxu0 0.0
        %2998 = vmatprep.subr.mxu0 0.0
        %2999 = vmatpush2.msra.mxu0 0.0
        %3000 = vmatprep.subr.mxu0 0.0
        %3001 = vmatpush2.msra.mxu0 0.0
        %3002 = vmatprep.subr.mxu0 0.0
        %3003 = vmatpush2.msra.mxu0 0.0
        %3004 = vmatprep.subr.mxu0 0.0
        %3005 = vmatpush2.msra.mxu0 0.0
        %3006 = vmatprep.subr.mxu0 0.0
        %3007 = vmatpush2.msra.mxu0 0.0
        %3008 = vmatprep.subr.mxu0 0.0
        %3009 = vmatpush2.msra.mxu0 0.0
        %3010 = vmatprep.subr.mxu0 0.0
        %3011 = vmatpush2.msra.mxu0 0.0
        %3012 = vmatprep.subr.mxu0 0.0
        %3013 = vmatpush2.msra.mxu0 0.0
        %3014 = vmatprep.subr.mxu0 0.0
        %3015 = vmatpush2.msra.mxu0 0.0
        %3016 = vmatprep.subr.mxu0 0.0
        %3017 = vmatpush2.msra.mxu0 0.0
        %3018 = vmatprep.mubr.f32.mxu0 0.0
        %3019 = vmatmul.mubr.f32.gmra.mxu0 %v2949
        %v3020 = vpop.f32.mrf.mxu0
        %v3021 = vadd.f32 0.0, %v3020
        %v3022 = vpop.f32.mrf.mxu0
        %3023 = vmatprep.mubr.f32.mxu0 0.0
        %3024 = vmatmul.mubr.f32.gmra.mxu0 %v2952
        %v3025 = vpop.f32.mrf.mxu0
        %v3026 = vadd.f32 0.0, %v3025
        %v3027 = vpop.f32.mrf.mxu0
        %3028 = vdwg.mxu0
        %v3030 = vsel %vm1116, %v3021, 0
        %v3033 = vsel %vm1116, %v3026, 0
        %3035 = vmatprep.subr.mxu0 0.0
        %3036 = vmatpush1.msra.mxu0 0.0
        %3037 = vmatprep.subr.mxu0 0.0
        %3038 = vmatpush1.msra.mxu0 0.0
        %3039 = vmatprep.subr.mxu0 0.0
        %3040 = vmatpush1.msra.mxu0 0.0
        %3041 = vmatprep.subr.mxu0 0.0
        %3042 = vmatpush1.msra.mxu0 0.0
        %3043 = vmatprep.subr.mxu0 0.0
        %3044 = vmatpush1.msra.mxu0 0.0
        %3045 = vmatprep.subr.mxu0 0.0
        %3046 = vmatpush1.msra.mxu0 0.0
        %3047 = vmatprep.subr.mxu0 0.0
        %3048 = vmatpush1.msra.mxu0 0.0
        %3049 = vmatprep.subr.mxu0 0.0
        %3050 = vmatpush1.msra.mxu0 0.0
        %3051 = vmatprep.subr.mxu0 0.0
        %3052 = vmatpush1.msra.mxu0 0.0
        %3053 = vmatprep.subr.mxu0 0.0
        %3054 = vmatpush1.msra.mxu0 0.0
        %3055 = vmatprep.subr.mxu0 0.0
        %3056 = vmatpush1.msra.mxu0 0.0
        %3057 = vmatprep.subr.mxu0 0.0
        %3058 = vmatpush1.msra.mxu0 0.0
        %3059 = vmatprep.subr.mxu0 0.0
        %3060 = vmatpush1.msra.mxu0 0.0
        %3061 = vmatprep.subr.mxu0 0.0
        %3062 = vmatpush1.msra.mxu0 0.0
        %3063 = vmatprep.subr.mxu0 0.0
        %3064 = vmatpush1.msra.mxu0 0.0
        %3065 = vmatprep.subr.mxu0 0.0
        %3066 = vmatpush1.msra.mxu0 %v2628
        %3067 = vmatprep.subr.mxu0 0.0
        %3068 = vmatpush2.msra.mxu0 0.0
        %3069 = vmatprep.subr.mxu0 0.0
        %3070 = vmatpush2.msra.mxu0 0.0
        %3071 = vmatprep.subr.mxu0 0.0
        %3072 = vmatpush2.msra.mxu0 0.0
        %3073 = vmatprep.subr.mxu0 0.0
        %3074 = vmatpush2.msra.mxu0 0.0
        %3075 = vmatprep.subr.mxu0 0.0
        %3076 = vmatpush2.msra.mxu0 0.0
        %3077 = vmatprep.subr.mxu0 0.0
        %3078 = vmatpush2.msra.mxu0 0.0
        %3079 = vmatprep.subr.mxu0 0.0
        %3080 = vmatpush2.msra.mxu0 0.0
        %3081 = vmatprep.subr.mxu0 0.0
        %3082 = vmatpush2.msra.mxu0 0.0
        %3083 = vmatprep.subr.mxu0 0.0
        %3084 = vmatpush2.msra.mxu0 0.0
        %3085 = vmatprep.subr.mxu0 0.0
        %3086 = vmatpush2.msra.mxu0 0.0
        %3087 = vmatprep.subr.mxu0 0.0
        %3088 = vmatpush2.msra.mxu0 0.0
        %3089 = vmatprep.subr.mxu0 0.0
        %3090 = vmatpush2.msra.mxu0 0.0
        %3091 = vmatprep.subr.mxu0 0.0
        %3092 = vmatpush2.msra.mxu0 0.0
        %3093 = vmatprep.subr.mxu0 0.0
        %3094 = vmatpush2.msra.mxu0 0.0
        %3095 = vmatprep.subr.mxu0 0.0
        %3096 = vmatpush2.msra.mxu0 0.0
        %3097 = vmatprep.subr.mxu0 0.0
        %3098 = vmatpush2.msra.mxu0 0.0
        %3099 = vmatprep.mubr.f32.mxu0 0.0
        %3100 = vmatmul.mubr.f32.gmra.mxu0 %v3030
        %v3101 = vpop.f32.mrf.mxu0
        %v3102 = vadd.f32 0.0, %v3101
        %v3103 = vpop.f32.mrf.mxu0
        %3104 = vmatprep.mubr.f32.mxu0 0.0
        %3105 = vmatmul.mubr.f32.gmra.mxu0 %v3033
        %v3106 = vpop.f32.mrf.mxu0
        %v3107 = vadd.f32 0.0, %v3106
        %v3108 = vpop.f32.mrf.mxu0
        %3109 = vdwg.mxu0
        %v3111 = vsel %vm1116, %v2821, 0
        %v3114 = vsel %vm1116, %v2826, 0
        %3116 = vmatprep.subr.mxu0 0.0
        %3117 = vmatpush1.msra.mxu0 0.0
        %3118 = vmatprep.subr.mxu0 0.0
        %3119 = vmatpush1.msra.mxu0 0.0
        %3120 = vmatprep.subr.mxu0 0.0
        %3121 = vmatpush1.msra.mxu0 0.0
        %3122 = vmatprep.subr.mxu0 0.0
        %3123 = vmatpush1.msra.mxu0 0.0
        %3124 = vmatprep.subr.mxu0 0.0
        %3125 = vmatpush1.msra.mxu0 0.0
        %3126 = vmatprep.subr.mxu0 0.0
        %3127 = vmatpush1.msra.mxu0 0.0
        %3128 = vmatprep.subr.mxu0 0.0
        %3129 = vmatpush1.msra.mxu0 0.0
        %3130 = vmatprep.subr.mxu0 0.0
        %3131 = vmatpush1.msra.mxu0 0.0
        %3132 = vmatprep.subr.mxu0 0.0
        %3133 = vmatpush1.msra.mxu0 0.0
        %3134 = vmatprep.subr.mxu0 0.0
        %3135 = vmatpush1.msra.mxu0 0.0
        %3136 = vmatprep.subr.mxu0 0.0
        %3137 = vmatpush1.msra.mxu0 0.0
        %3138 = vmatprep.subr.mxu0 0.0
        %3139 = vmatpush1.msra.mxu0 0.0
        %3140 = vmatprep.subr.mxu0 0.0
        %3141 = vmatpush1.msra.mxu0 0.0
        %3142 = vmatprep.subr.mxu0 0.0
        %3143 = vmatpush1.msra.mxu0 0.0
        %3144 = vmatprep.subr.mxu0 0.0
        %3145 = vmatpush1.msra.mxu0 0.0
        %3146 = vmatprep.subr.mxu0 0.0
        %3147 = vmatpush1.msra.mxu0 %v2627
        %3148 = vmatprep.subr.mxu0 0.0
        %3149 = vmatpush2.msra.mxu0 0.0
        %3150 = vmatprep.subr.mxu0 0.0
        %3151 = vmatpush2.msra.mxu0 0.0
        %3152 = vmatprep.subr.mxu0 0.0
        %3153 = vmatpush2.msra.mxu0 0.0
        %3154 = vmatprep.subr.mxu0 0.0
        %3155 = vmatpush2.msra.mxu0 0.0
        %3156 = vmatprep.subr.mxu0 0.0
        %3157 = vmatpush2.msra.mxu0 0.0
        %3158 = vmatprep.subr.mxu0 0.0
        %3159 = vmatpush2.msra.mxu0 0.0
        %3160 = vmatprep.subr.mxu0 0.0
        %3161 = vmatpush2.msra.mxu0 0.0
        %3162 = vmatprep.subr.mxu0 0.0
        %3163 = vmatpush2.msra.mxu0 0.0
        %3164 = vmatprep.subr.mxu0 0.0
        %3165 = vmatpush2.msra.mxu0 0.0
        %3166 = vmatprep.subr.mxu0 0.0
        %3167 = vmatpush2.msra.mxu0 0.0
        %3168 = vmatprep.subr.mxu0 0.0
        %3169 = vmatpush2.msra.mxu0 0.0
        %3170 = vmatprep.subr.mxu0 0.0
        %3171 = vmatpush2.msra.mxu0 0.0
        %3172 = vmatprep.subr.mxu0 0.0
        %3173 = vmatpush2.msra.mxu0 0.0
        %3174 = vmatprep.subr.mxu0 0.0
        %3175 = vmatpush2.msra.mxu0 0.0
        %3176 = vmatprep.subr.mxu0 0.0
        %3177 = vmatpush2.msra.mxu0 0.0
        %3178 = vmatprep.subr.mxu0 0.0
        %3179 = vmatpush2.msra.mxu0 0.0
        %3180 = vmatprep.mubr.f32.mxu0 0.0
        %3181 = vmatmul.mubr.f32.gmra.mxu0 %v3111
        %v3182 = vpop.f32.mrf.mxu0
        %v3183 = vadd.f32 %v3102, %v3182
        %v3184 = vpop.f32.mrf.mxu0
        %3185 = vmatprep.mubr.f32.mxu0 0.0
        %3186 = vmatmul.mubr.f32.gmra.mxu0 %v3114
        %v3187 = vpop.f32.mrf.mxu0
        %v3188 = vadd.f32 %v3107, %v3187
        %v3189 = vpop.f32.mrf.mxu0
        %3190 = vdwg.mxu0
        %3191 = vrot.lane.b32.xlu0 %v2618, 112
        %v3192 = vpop.permute.xlu0 %3191
        %3193 = vrot.lane.b32.xlu0 %v2623, 112
        %v3194 = vpop.permute.xlu0 %3193
        %3195 = vrot.lane.b32.xlu0 %v2618, 80
        %v3196 = vpop.permute.xlu0 %3195
        %3197 = vrot.lane.b32.xlu0 %v2623, 80
        %v3198 = vpop.permute.xlu0 %3197
        %v3199 = vsel %vm1116, %v3192, 0
        %v3201 = vsel %vm1116, %v3194, 0
        %v3203 = vsel %vm1116, %v3196, 0
        %v3205 = vsel %vm1116, %v3198, 0
        %3207 = vmatprep.subr.mxu0 0.0
        %3208 = vmatpush1.xpose.msra.mxu0 0.0
        %3209 = vmatprep.subr.mxu0 0.0
        %3210 = vmatpush1.xpose.msra.mxu0 0.0
        %3211 = vmatprep.subr.mxu0 0.0
        %3212 = vmatpush1.xpose.msra.mxu0 0.0
        %3213 = vmatprep.subr.mxu0 0.0
        %3214 = vmatpush1.xpose.msra.mxu0 0.0
        %3215 = vmatprep.subr.mxu0 0.0
        %3216 = vmatpush1.xpose.msra.mxu0 0.0
        %3217 = vmatprep.subr.mxu0 0.0
        %3218 = vmatpush1.xpose.msra.mxu0 0.0
        %3219 = vmatprep.subr.mxu0 0.0
        %3220 = vmatpush1.xpose.msra.mxu0 0.0
        %3221 = vmatprep.subr.mxu0 0.0
        %3222 = vmatpush1.xpose.msra.mxu0 0.0
        %3223 = vmatprep.subr.mxu0 0.0
        %3224 = vmatpush1.xpose.msra.mxu0 0.0
        %3225 = vmatprep.subr.mxu0 0.0
        %3226 = vmatpush1.xpose.msra.mxu0 0.0
        %3227 = vmatprep.subr.mxu0 0.0
        %3228 = vmatpush1.xpose.msra.mxu0 0.0
        %3229 = vmatprep.subr.mxu0 0.0
        %3230 = vmatpush1.xpose.msra.mxu0 0.0
        %3231 = vmatprep.subr.mxu0 0.0
        %3232 = vmatpush1.xpose.msra.mxu0 0.0
        %3233 = vmatprep.subr.mxu0 0.0
        %3234 = vmatpush1.xpose.msra.mxu0 0.0
        %3235 = vmatprep.subr.mxu0 0.0
        %3236 = vmatpush1.xpose.msra.mxu0 %v3205
        %3237 = vmatprep.subr.mxu0 0.0
        %3238 = vmatpush1.xpose.msra.mxu0 %v3203
        %3239 = vmatprep.subr.mxu0 0.0
        %3240 = vmatpush2.xpose.msra.mxu0 0.0
        %3241 = vmatprep.subr.mxu0 0.0
        %3242 = vmatpush2.xpose.msra.mxu0 0.0
        %3243 = vmatprep.subr.mxu0 0.0
        %3244 = vmatpush2.xpose.msra.mxu0 0.0
        %3245 = vmatprep.subr.mxu0 0.0
        %3246 = vmatpush2.xpose.msra.mxu0 0.0
        %3247 = vmatprep.subr.mxu0 0.0
        %3248 = vmatpush2.xpose.msra.mxu0 0.0
        %3249 = vmatprep.subr.mxu0 0.0
        %3250 = vmatpush2.xpose.msra.mxu0 0.0
        %3251 = vmatprep.subr.mxu0 0.0
        %3252 = vmatpush2.xpose.msra.mxu0 0.0
        %3253 = vmatprep.subr.mxu0 0.0
        %3254 = vmatpush2.xpose.msra.mxu0 0.0
        %3255 = vmatprep.subr.mxu0 0.0
        %3256 = vmatpush2.xpose.msra.mxu0 0.0
        %3257 = vmatprep.subr.mxu0 0.0
        %3258 = vmatpush2.xpose.msra.mxu0 0.0
        %3259 = vmatprep.subr.mxu0 0.0
        %3260 = vmatpush2.xpose.msra.mxu0 0.0
        %3261 = vmatprep.subr.mxu0 0.0
        %3262 = vmatpush2.xpose.msra.mxu0 0.0
        %3263 = vmatprep.subr.mxu0 0.0
        %3264 = vmatpush2.xpose.msra.mxu0 0.0
        %3265 = vmatprep.subr.mxu0 0.0
        %3266 = vmatpush2.xpose.msra.mxu0 0.0
        %3267 = vmatprep.subr.mxu0 0.0
        %3268 = vmatpush2.xpose.msra.mxu0 0.0
        %3269 = vmatprep.subr.mxu0 0.0
        %3270 = vmatpush2.xpose.msra.mxu0 0.0
        %3271 = vmatprep.mubr.f32.mxu0 0.0
        %3272 = vmatmul.mubr.f32.gmra.mxu0 %v3199
        %v3273 = vpop.f32.mrf.mxu0
        %v3274 = vadd.f32 %v966, %v3273
        %v3275 = vpop.f32.mrf.mxu0
        %3276 = vmatprep.mubr.f32.mxu0 0.0
        %3277 = vmatmul.mubr.f32.gmra.mxu0 %v3201
        %v3278 = vpop.f32.mrf.mxu0
        %v3279 = vadd.f32 %v967, %v3278
        %v3280 = vpop.f32.mrf.mxu0
        %3281 = vdwg.mxu0
        %v3282 = vsel %vm873, %v3274, -inf
        %3283 = vmax.xlane.f32.xlu0 %v3282
        %v3284 = vpop.xlane.xlu0 %3283
        %v3285 = vsel %vm873, %v3279, -inf
        %3286 = vmax.xlane.f32.xlu0 %v3285
        %v3287 = vpop.xlane.xlu0 %3286
        %v3288 = vsub.f32 %v3274, %v3284
        %v3289 = vsub.f32 %v3279, %v3287
        %v3290 = vmul.f32 %v3288, 1.442695
        %v3291 = vpow.pop %v3290
        %v3292 = vmul.f32 %v3289, 1.442695
        %v3293 = vpow.pop %v3292
        %v3294 = vsel %vm873, %v3291, 0.0
        %3295 = vadd.xlane.f32.xlu0 %v3294
        %v3296 = vpop.xlane.xlu0 %3295
        %v3297 = vsel %vm873, %v3293, 0.0
        %3298 = vadd.xlane.f32.xlu0 %v3297
        %v3299 = vpop.xlane.xlu0 %3298
        %v3300 = vrcp.pop %v3296
        %v3301 = vrcp.pop %v3299
        %v3302 = vmul.f32 %v3291, %v3300
        %v3303 = vmul.f32 %v3293, %v3301
        %3304 = vrot.lane.b32.xlu0 %v2618, 48
        %v3305 = vpop.permute.xlu0 %3304
        %3306 = vrot.lane.b32.xlu0 %v2623, 48
        %v3307 = vpop.permute.xlu0 %3306
        %v3311 = vsel %vm873, %v3302, 0
        %v3314 = vsel %vm873, %v3303, 0
        %3316 = vmatprep.subr.mxu0 0.0
        %3317 = vmatpush1.msra.mxu0 0.0
        %3318 = vmatprep.subr.mxu0 0.0
        %3319 = vmatpush1.msra.mxu0 0.0
        %3320 = vmatprep.subr.mxu0 0.0
        %3321 = vmatpush1.msra.mxu0 0.0
        %3322 = vmatprep.subr.mxu0 0.0
        %3323 = vmatpush1.msra.mxu0 0.0
        %3324 = vmatprep.subr.mxu0 0.0
        %3325 = vmatpush1.msra.mxu0 0.0
        %3326 = vmatprep.subr.mxu0 0.0
        %3327 = vmatpush1.msra.mxu0 0.0
        %3328 = vmatprep.subr.mxu0 0.0
        %3329 = vmatpush1.msra.mxu0 0.0
        %3330 = vmatprep.subr.mxu0 0.0
        %3331 = vmatpush1.msra.mxu0 0.0
        %3332 = vmatprep.subr.mxu0 0.0
        %3333 = vmatpush1.msra.mxu0 0.0
        %3334 = vmatprep.subr.mxu0 0.0
        %3335 = vmatpush1.msra.mxu0 0.0
        %3336 = vmatprep.subr.mxu0 0.0
        %3337 = vmatpush1.msra.mxu0 0.0
        %3338 = vmatprep.subr.mxu0 0.0
        %3339 = vmatpush1.msra.mxu0 0.0
        %3340 = vmatprep.subr.mxu0 0.0
        %3341 = vmatpush1.msra.mxu0 0.0
        %3342 = vmatprep.subr.mxu0 0.0
        %3343 = vmatpush1.msra.mxu0 0.0
        %3344 = vmatprep.subr.mxu0 0.0
        %3345 = vmatpush1.msra.mxu0 %v3307
        %3346 = vmatprep.subr.mxu0 0.0
        %3347 = vmatpush1.msra.mxu0 %v3305
        %3348 = vmatprep.subr.mxu0 0.0
        %3349 = vmatpush2.msra.mxu0 0.0
        %3350 = vmatprep.subr.mxu0 0.0
        %3351 = vmatpush2.msra.mxu0 0.0
        %3352 = vmatprep.subr.mxu0 0.0
        %3353 = vmatpush2.msra.mxu0 0.0
        %3354 = vmatprep.subr.mxu0 0.0
        %3355 = vmatpush2.msra.mxu0 0.0
        %3356 = vmatprep.subr.mxu0 0.0
        %3357 = vmatpush2.msra.mxu0 0.0
        %3358 = vmatprep.subr.mxu0 0.0
        %3359 = vmatpush2.msra.mxu0 0.0
        %3360 = vmatprep.subr.mxu0 0.0
        %3361 = vmatpush2.msra.mxu0 0.0
        %3362 = vmatprep.subr.mxu0 0.0
        %3363 = vmatpush2.msra.mxu0 0.0
        %3364 = vmatprep.subr.mxu0 0.0
        %3365 = vmatpush2.msra.mxu0 0.0
        %3366 = vmatprep.subr.mxu0 0.0
        %3367 = vmatpush2.msra.mxu0 0.0
        %3368 = vmatprep.subr.mxu0 0.0
        %3369 = vmatpush2.msra.mxu0 0.0
        %3370 = vmatprep.subr.mxu0 0.0
        %3371 = vmatpush2.msra.mxu0 0.0
        %3372 = vmatprep.subr.mxu0 0.0
        %3373 = vmatpush2.msra.mxu0 0.0
        %3374 = vmatprep.subr.mxu0 0.0
        %3375 = vmatpush2.msra.mxu0 0.0
        %3376 = vmatprep.subr.mxu0 0.0
        %3377 = vmatpush2.msra.mxu0 0.0
        %3378 = vmatprep.subr.mxu0 0.0
        %3379 = vmatpush2.msra.mxu0 0.0
        %3380 = vmatprep.mubr.f32.mxu0 0.0
        %3381 = vmatmul.mubr.f32.gmra.mxu0 %v3311
        %v3382 = vpop.f32.mrf.mxu0
        %v3383 = vadd.f32 0.0, %v3382
        %v3384 = vpop.f32.mrf.mxu0
        %3385 = vmatprep.mubr.f32.mxu0 0.0
        %3386 = vmatmul.mubr.f32.gmra.mxu0 %v3314
        %v3387 = vpop.f32.mrf.mxu0
        %v3388 = vadd.f32 0.0, %v3387
        %v3389 = vpop.f32.mrf.mxu0
        %3390 = vdwg.mxu0
        %v3392 = vsel %vm1116, %v3383, 0
        %v3395 = vsel %vm1116, %v3388, 0
        %3397 = vmatprep.subr.mxu0 0.0
        %3398 = vmatpush1.msra.mxu0 0.0
        %3399 = vmatprep.subr.mxu0 0.0
        %3400 = vmatpush1.msra.mxu0 0.0
        %3401 = vmatprep.subr.mxu0 0.0
        %3402 = vmatpush1.msra.mxu0 0.0
        %3403 = vmatprep.subr.mxu0 0.0
        %3404 = vmatpush1.msra.mxu0 0.0
        %3405 = vmatprep.subr.mxu0 0.0
        %3406 = vmatpush1.msra.mxu0 0.0
        %3407 = vmatprep.subr.mxu0 0.0
        %3408 = vmatpush1.msra.mxu0 0.0
        %3409 = vmatprep.subr.mxu0 0.0
        %3410 = vmatpush1.msra.mxu0 0.0
        %3411 = vmatprep.subr.mxu0 0.0
        %3412 = vmatpush1.msra.mxu0 0.0
        %3413 = vmatprep.subr.mxu0 0.0
        %3414 = vmatpush1.msra.mxu0 0.0
        %3415 = vmatprep.subr.mxu0 0.0
        %3416 = vmatpush1.msra.mxu0 0.0
        %3417 = vmatprep.subr.mxu0 0.0
        %3418 = vmatpush1.msra.mxu0 0.0
        %3419 = vmatprep.subr.mxu0 0.0
        %3420 = vmatpush1.msra.mxu0 0.0
        %3421 = vmatprep.subr.mxu0 0.0
        %3422 = vmatpush1.msra.mxu0 0.0
        %3423 = vmatprep.subr.mxu0 0.0
        %3424 = vmatpush1.msra.mxu0 0.0
        %3425 = vmatprep.subr.mxu0 0.0
        %3426 = vmatpush1.msra.mxu0 0.0
        %3427 = vmatprep.subr.mxu0 0.0
        %3428 = vmatpush1.msra.mxu0 %v2629
        %3429 = vmatprep.subr.mxu0 0.0
        %3430 = vmatpush2.msra.mxu0 0.0
        %3431 = vmatprep.subr.mxu0 0.0
        %3432 = vmatpush2.msra.mxu0 0.0
        %3433 = vmatprep.subr.mxu0 0.0
        %3434 = vmatpush2.msra.mxu0 0.0
        %3435 = vmatprep.subr.mxu0 0.0
        %3436 = vmatpush2.msra.mxu0 0.0
        %3437 = vmatprep.subr.mxu0 0.0
        %3438 = vmatpush2.msra.mxu0 0.0
        %3439 = vmatprep.subr.mxu0 0.0
        %3440 = vmatpush2.msra.mxu0 0.0
        %3441 = vmatprep.subr.mxu0 0.0
        %3442 = vmatpush2.msra.mxu0 0.0
        %3443 = vmatprep.subr.mxu0 0.0
        %3444 = vmatpush2.msra.mxu0 0.0
        %3445 = vmatprep.subr.mxu0 0.0
        %3446 = vmatpush2.msra.mxu0 0.0
        %3447 = vmatprep.subr.mxu0 0.0
        %3448 = vmatpush2.msra.mxu0 0.0
        %3449 = vmatprep.subr.mxu0 0.0
        %3450 = vmatpush2.msra.mxu0 0.0
        %3451 = vmatprep.subr.mxu0 0.0
        %3452 = vmatpush2.msra.mxu0 0.0
        %3453 = vmatprep.subr.mxu0 0.0
        %3454 = vmatpush2.msra.mxu0 0.0
        %3455 = vmatprep.subr.mxu0 0.0
        %3456 = vmatpush2.msra.mxu0 0.0
        %3457 = vmatprep.subr.mxu0 0.0
        %3458 = vmatpush2.msra.mxu0 0.0
        %3459 = vmatprep.subr.mxu0 0.0
        %3460 = vmatpush2.msra.mxu0 0.0
        %3461 = vmatprep.mubr.f32.mxu0 0.0
        %3462 = vmatmul.mubr.f32.gmra.mxu0 %v3392
        %v3463 = vpop.f32.mrf.mxu0
        %v3464 = vadd.f32 0.0, %v3463
        %v3465 = vpop.f32.mrf.mxu0
        %3466 = vmatprep.mubr.f32.mxu0 0.0
        %3467 = vmatmul.mubr.f32.gmra.mxu0 %v3395
        %v3468 = vpop.f32.mrf.mxu0
        %v3469 = vadd.f32 0.0, %v3468
        %v3470 = vpop.f32.mrf.mxu0
        %3471 = vdwg.mxu0
        %v3472 = vadd.f32 %v3183, %v3464
        %v3473 = vadd.f32 %v3188, %v3469
        %3474 = vrot.lane.b32.xlu0 %v2618, 104
        %v3475 = vpop.permute.xlu0 %3474
        %3476 = vrot.lane.b32.xlu0 %v2623, 104
        %v3477 = vpop.permute.xlu0 %3476
        %3478 = vrot.lane.b32.xlu0 %v2618, 72
        %v3479 = vpop.permute.xlu0 %3478
        %3480 = vrot.lane.b32.xlu0 %v2623, 72
        %v3481 = vpop.permute.xlu0 %3480
        %v3482 = vsel %vm1116, %v3475, 0
        %v3484 = vsel %vm1116, %v3477, 0
        %v3486 = vsel %vm1116, %v3479, 0
        %v3488 = vsel %vm1116, %v3481, 0
        %3490 = vmatprep.subr.mxu0 0.0
        %3491 = vmatpush1.xpose.msra.mxu0 0.0
        %3492 = vmatprep.subr.mxu0 0.0
        %3493 = vmatpush1.xpose.msra.mxu0 0.0
        %3494 = vmatprep.subr.mxu0 0.0
        %3495 = vmatpush1.xpose.msra.mxu0 0.0
        %3496 = vmatprep.subr.mxu0 0.0
        %3497 = vmatpush1.xpose.msra.mxu0 0.0
        %3498 = vmatprep.subr.mxu0 0.0
        %3499 = vmatpush1.xpose.msra.mxu0 0.0
        %3500 = vmatprep.subr.mxu0 0.0
        %3501 = vmatpush1.xpose.msra.mxu0 0.0
        %3502 = vmatprep.subr.mxu0 0.0
        %3503 = vmatpush1.xpose.msra.mxu0 0.0
        %3504 = vmatprep.subr.mxu0 0.0
        %3505 = vmatpush1.xpose.msra.mxu0 0.0
        %3506 = vmatprep.subr.mxu0 0.0
        %3507 = vmatpush1.xpose.msra.mxu0 0.0
        %3508 = vmatprep.subr.mxu0 0.0
        %3509 = vmatpush1.xpose.msra.mxu0 0.0
        %3510 = vmatprep.subr.mxu0 0.0
        %3511 = vmatpush1.xpose.msra.mxu0 0.0
        %3512 = vmatprep.subr.mxu0 0.0
        %3513 = vmatpush1.xpose.msra.mxu0 0.0
        %3514 = vmatprep.subr.mxu0 0.0
        %3515 = vmatpush1.xpose.msra.mxu0 0.0
        %3516 = vmatprep.subr.mxu0 0.0
        %3517 = vmatpush1.xpose.msra.mxu0 0.0
        %3518 = vmatprep.subr.mxu0 0.0
        %3519 = vmatpush1.xpose.msra.mxu0 %v3488
        %3520 = vmatprep.subr.mxu0 0.0
        %3521 = vmatpush1.xpose.msra.mxu0 %v3486
        %3522 = vmatprep.subr.mxu0 0.0
        %3523 = vmatpush2.xpose.msra.mxu0 0.0
        %3524 = vmatprep.subr.mxu0 0.0
        %3525 = vmatpush2.xpose.msra.mxu0 0.0
        %3526 = vmatprep.subr.mxu0 0.0
        %3527 = vmatpush2.xpose.msra.mxu0 0.0
        %3528 = vmatprep.subr.mxu0 0.0
        %3529 = vmatpush2.xpose.msra.mxu0 0.0
        %3530 = vmatprep.subr.mxu0 0.0
        %3531 = vmatpush2.xpose.msra.mxu0 0.0
        %3532 = vmatprep.subr.mxu0 0.0
        %3533 = vmatpush2.xpose.msra.mxu0 0.0
        %3534 = vmatprep.subr.mxu0 0.0
        %3535 = vmatpush2.xpose.msra.mxu0 0.0
        %3536 = vmatprep.subr.mxu0 0.0
        %3537 = vmatpush2.xpose.msra.mxu0 0.0
        %3538 = vmatprep.subr.mxu0 0.0
        %3539 = vmatpush2.xpose.msra.mxu0 0.0
        %3540 = vmatprep.subr.mxu0 0.0
        %3541 = vmatpush2.xpose.msra.mxu0 0.0
        %3542 = vmatprep.subr.mxu0 0.0
        %3543 = vmatpush2.xpose.msra.mxu0 0.0
        %3544 = vmatprep.subr.mxu0 0.0
        %3545 = vmatpush2.xpose.msra.mxu0 0.0
        %3546 = vmatprep.subr.mxu0 0.0
        %3547 = vmatpush2.xpose.msra.mxu0 0.0
        %3548 = vmatprep.subr.mxu0 0.0
        %3549 = vmatpush2.xpose.msra.mxu0 0.0
        %3550 = vmatprep.subr.mxu0 0.0
        %3551 = vmatpush2.xpose.msra.mxu0 0.0
        %3552 = vmatprep.subr.mxu0 0.0
        %3553 = vmatpush2.xpose.msra.mxu0 0.0
        %3554 = vmatprep.mubr.f32.mxu0 0.0
        %3555 = vmatmul.mubr.f32.gmra.mxu0 %v3482
        %v3556 = vpop.f32.mrf.mxu0
        %v3557 = vadd.f32 %v966, %v3556
        %v3558 = vpop.f32.mrf.mxu0
        %3559 = vmatprep.mubr.f32.mxu0 0.0
        %3560 = vmatmul.mubr.f32.gmra.mxu0 %v3484
        %v3561 = vpop.f32.mrf.mxu0
        %v3562 = vadd.f32 %v967, %v3561
        %v3563 = vpop.f32.mrf.mxu0
        %3564 = vdwg.mxu0
        %v3565 = vsel %vm873, %v3557, -inf
        %3566 = vmax.xlane.f32.xlu0 %v3565
        %v3567 = vpop.xlane.xlu0 %3566
        %v3568 = vsel %vm873, %v3562, -inf
        %3569 = vmax.xlane.f32.xlu0 %v3568
        %v3570 = vpop.xlane.xlu0 %3569
        %v3571 = vsub.f32 %v3557, %v3567
        %v3572 = vsub.f32 %v3562, %v3570
        %v3573 = vmul.f32 %v3571, 1.442695
        %v3574 = vpow.pop %v3573
        %v3575 = vmul.f32 %v3572, 1.442695
        %v3576 = vpow.pop %v3575
        %v3577 = vsel %vm873, %v3574, 0.0
        %3578 = vadd.xlane.f32.xlu0 %v3577
        %v3579 = vpop.xlane.xlu0 %3578
        %v3580 = vsel %vm873, %v3576, 0.0
        %3581 = vadd.xlane.f32.xlu0 %v3580
        %v3582 = vpop.xlane.xlu0 %3581
        %v3583 = vrcp.pop %v3579
        %v3584 = vrcp.pop %v3582
        %v3585 = vmul.f32 %v3574, %v3583
        %v3586 = vmul.f32 %v3576, %v3584
        %3587 = vrot.lane.b32.xlu0 %v2618, 40
        %v3588 = vpop.permute.xlu0 %3587
        %3589 = vrot.lane.b32.xlu0 %v2623, 40
        %v3590 = vpop.permute.xlu0 %3589
        %v3594 = vsel %vm873, %v3585, 0
        %v3597 = vsel %vm873, %v3586, 0
        %3599 = vmatprep.subr.mxu0 0.0
        %3600 = vmatpush1.msra.mxu0 0.0
        %3601 = vmatprep.subr.mxu0 0.0
        %3602 = vmatpush1.msra.mxu0 0.0
        %3603 = vmatprep.subr.mxu0 0.0
        %3604 = vmatpush1.msra.mxu0 0.0
        %3605 = vmatprep.subr.mxu0 0.0
        %3606 = vmatpush1.msra.mxu0 0.0
        %3607 = vmatprep.subr.mxu0 0.0
        %3608 = vmatpush1.msra.mxu0 0.0
        %3609 = vmatprep.subr.mxu0 0.0
        %3610 = vmatpush1.msra.mxu0 0.0
        %3611 = vmatprep.subr.mxu0 0.0
        %3612 = vmatpush1.msra.mxu0 0.0
        %3613 = vmatprep.subr.mxu0 0.0
        %3614 = vmatpush1.msra.mxu0 0.0
        %3615 = vmatprep.subr.mxu0 0.0
        %3616 = vmatpush1.msra.mxu0 0.0
        %3617 = vmatprep.subr.mxu0 0.0
        %3618 = vmatpush1.msra.mxu0 0.0
        %3619 = vmatprep.subr.mxu0 0.0
        %3620 = vmatpush1.msra.mxu0 0.0
        %3621 = vmatprep.subr.mxu0 0.0
        %3622 = vmatpush1.msra.mxu0 0.0
        %3623 = vmatprep.subr.mxu0 0.0
        %3624 = vmatpush1.msra.mxu0 0.0
        %3625 = vmatprep.subr.mxu0 0.0
        %3626 = vmatpush1.msra.mxu0 0.0
        %3627 = vmatprep.subr.mxu0 0.0
        %3628 = vmatpush1.msra.mxu0 %v3590
        %3629 = vmatprep.subr.mxu0 0.0
        %3630 = vmatpush1.msra.mxu0 %v3588
        %3631 = vmatprep.subr.mxu0 0.0
        %3632 = vmatpush2.msra.mxu0 0.0
        %3633 = vmatprep.subr.mxu0 0.0
        %3634 = vmatpush2.msra.mxu0 0.0
        %3635 = vmatprep.subr.mxu0 0.0
        %3636 = vmatpush2.msra.mxu0 0.0
        %3637 = vmatprep.subr.mxu0 0.0
        %3638 = vmatpush2.msra.mxu0 0.0
        %3639 = vmatprep.subr.mxu0 0.0
        %3640 = vmatpush2.msra.mxu0 0.0
        %3641 = vmatprep.subr.mxu0 0.0
        %3642 = vmatpush2.msra.mxu0 0.0
        %3643 = vmatprep.subr.mxu0 0.0
        %3644 = vmatpush2.msra.mxu0 0.0
        %3645 = vmatprep.subr.mxu0 0.0
        %3646 = vmatpush2.msra.mxu0 0.0
        %3647 = vmatprep.subr.mxu0 0.0
        %3648 = vmatpush2.msra.mxu0 0.0
        %3649 = vmatprep.subr.mxu0 0.0
        %3650 = vmatpush2.msra.mxu0 0.0
        %3651 = vmatprep.subr.mxu0 0.0
        %3652 = vmatpush2.msra.mxu0 0.0
        %3653 = vmatprep.subr.mxu0 0.0
        %3654 = vmatpush2.msra.mxu0 0.0
        %3655 = vmatprep.subr.mxu0 0.0
        %3656 = vmatpush2.msra.mxu0 0.0
        %3657 = vmatprep.subr.mxu0 0.0
        %3658 = vmatpush2.msra.mxu0 0.0
        %3659 = vmatprep.subr.mxu0 0.0
        %3660 = vmatpush2.msra.mxu0 0.0
        %3661 = vmatprep.subr.mxu0 0.0
        %3662 = vmatpush2.msra.mxu0 0.0
        %3663 = vmatprep.mubr.f32.mxu0 0.0
        %3664 = vmatmul.mubr.f32.gmra.mxu0 %v3594
        %v3665 = vpop.f32.mrf.mxu0
        %v3666 = vadd.f32 0.0, %v3665
        %v3667 = vpop.f32.mrf.mxu0
        %3668 = vmatprep.mubr.f32.mxu0 0.0
        %3669 = vmatmul.mubr.f32.gmra.mxu0 %v3597
        %v3670 = vpop.f32.mrf.mxu0
        %v3671 = vadd.f32 0.0, %v3670
        %v3672 = vpop.f32.mrf.mxu0
        %3673 = vdwg.mxu0
        %v3675 = vsel %vm1116, %v3666, 0
        %v3678 = vsel %vm1116, %v3671, 0
        %3680 = vmatprep.subr.mxu0 0.0
        %3681 = vmatpush1.msra.mxu0 0.0
        %3682 = vmatprep.subr.mxu0 0.0
        %3683 = vmatpush1.msra.mxu0 0.0
        %3684 = vmatprep.subr.mxu0 0.0
        %3685 = vmatpush1.msra.mxu0 0.0
        %3686 = vmatprep.subr.mxu0 0.0
        %3687 = vmatpush1.msra.mxu0 0.0
        %3688 = vmatprep.subr.mxu0 0.0
        %3689 = vmatpush1.msra.mxu0 0.0
        %3690 = vmatprep.subr.mxu0 0.0
        %3691 = vmatpush1.msra.mxu0 0.0
        %3692 = vmatprep.subr.mxu0 0.0
        %3693 = vmatpush1.msra.mxu0 0.0
        %3694 = vmatprep.subr.mxu0 0.0
        %3695 = vmatpush1.msra.mxu0 0.0
        %3696 = vmatprep.subr.mxu0 0.0
        %3697 = vmatpush1.msra.mxu0 0.0
        %3698 = vmatprep.subr.mxu0 0.0
        %3699 = vmatpush1.msra.mxu0 0.0
        %3700 = vmatprep.subr.mxu0 0.0
        %3701 = vmatpush1.msra.mxu0 0.0
        %3702 = vmatprep.subr.mxu0 0.0
        %3703 = vmatpush1.msra.mxu0 0.0
        %3704 = vmatprep.subr.mxu0 0.0
        %3705 = vmatpush1.msra.mxu0 0.0
        %3706 = vmatprep.subr.mxu0 0.0
        %3707 = vmatpush1.msra.mxu0 0.0
        %3708 = vmatprep.subr.mxu0 0.0
        %3709 = vmatpush1.msra.mxu0 0.0
        %3710 = vmatprep.subr.mxu0 0.0
        %3711 = vmatpush1.msra.mxu0 %v2630
        %3712 = vmatprep.subr.mxu0 0.0
        %3713 = vmatpush2.msra.mxu0 0.0
        %3714 = vmatprep.subr.mxu0 0.0
        %3715 = vmatpush2.msra.mxu0 0.0
        %3716 = vmatprep.subr.mxu0 0.0
        %3717 = vmatpush2.msra.mxu0 0.0
        %3718 = vmatprep.subr.mxu0 0.0
        %3719 = vmatpush2.msra.mxu0 0.0
        %3720 = vmatprep.subr.mxu0 0.0
        %3721 = vmatpush2.msra.mxu0 0.0
        %3722 = vmatprep.subr.mxu0 0.0
        %3723 = vmatpush2.msra.mxu0 0.0
        %3724 = vmatprep.subr.mxu0 0.0
        %3725 = vmatpush2.msra.mxu0 0.0
        %3726 = vmatprep.subr.mxu0 0.0
        %3727 = vmatpush2.msra.mxu0 0.0
        %3728 = vmatprep.subr.mxu0 0.0
        %3729 = vmatpush2.msra.mxu0 0.0
        %3730 = vmatprep.subr.mxu0 0.0
        %3731 = vmatpush2.msra.mxu0 0.0
        %3732 = vmatprep.subr.mxu0 0.0
        %3733 = vmatpush2.msra.mxu0 0.0
        %3734 = vmatprep.subr.mxu0 0.0
        %3735 = vmatpush2.msra.mxu0 0.0
        %3736 = vmatprep.subr.mxu0 0.0
        %3737 = vmatpush2.msra.mxu0 0.0
        %3738 = vmatprep.subr.mxu0 0.0
        %3739 = vmatpush2.msra.mxu0 0.0
        %3740 = vmatprep.subr.mxu0 0.0
        %3741 = vmatpush2.msra.mxu0 0.0
        %3742 = vmatprep.subr.mxu0 0.0
        %3743 = vmatpush2.msra.mxu0 0.0
        %3744 = vmatprep.mubr.f32.mxu0 0.0
        %3745 = vmatmul.mubr.f32.gmra.mxu0 %v3675
        %v3746 = vpop.f32.mrf.mxu0
        %v3747 = vadd.f32 0.0, %v3746
        %v3748 = vpop.f32.mrf.mxu0
        %3749 = vmatprep.mubr.f32.mxu0 0.0
        %3750 = vmatmul.mubr.f32.gmra.mxu0 %v3678
        %v3751 = vpop.f32.mrf.mxu0
        %v3752 = vadd.f32 0.0, %v3751
        %v3753 = vpop.f32.mrf.mxu0
        %3754 = vdwg.mxu0
        %v3755 = vadd.f32 %v3472, %v3747
        %v3756 = vadd.f32 %v3473, %v3752
        %v3757 = vadd.f32 %v2484, %v3755
        %v3758 = vadd.f32 %v2485, %v3756
        %s3759 = scalar_lea.vmem %s12, 1
        %v3760 = vld [vmem:[%s3759] sm:$0x1]
        %v3762 = vlaneseq
        %v3763 = vshrl.u32 %v3762, 7
        %v3764 = vsub.s32 0, %v3763
        %v3765 = vrot.slane %v3760, %v3764
        %v3767 = vadd.f32 %v3757, %v3765
        %v3768 = vadd.f32 %v3758, %v3765
        %s3769 = scalar_lea.vmem %s19, 1
        %v3770 = vld [vmem:[%s3769] sm:$0x1]
        %s3771 = scalar_lea.vmem %s20, 1
        %v3772 = vld [vmem:[%s3771] sm:$0x1]
        %v3773 = vsel %vm970, %v3767, 0.0
        %3774 = vadd.xlane.f32.xlu0 %v3773
        %v3775 = vpop.xlane.xlu0 %3774
        %v3776 = vsel %vm970, %v3768, 0.0
        %3777 = vadd.xlane.f32.xlu0 %v3776
        %v3778 = vpop.xlane.xlu0 %3777
        %v3779 = vmul.f32 %v3775, %v977
        %v3780 = vmul.f32 %v3778, %v977
        %v3781 = vsub.f32 %v3767, %v3779
        %v3782 = vsub.f32 %v3768, %v3780
        %v3783 = vmul.f32 %v3781, %v3781
        %v3784 = vmul.f32 %v3782, %v3782
        %v3785 = vsel %vm970, %v3783, 0.0
        %3786 = vadd.xlane.f32.xlu0 %v3785
        %v3787 = vpop.xlane.xlu0 %3786
        %v3788 = vsel %vm970, %v3784, 0.0
        %3789 = vadd.xlane.f32.xlu0 %v3788
        %v3790 = vpop.xlane.xlu0 %3789
        %v3791 = vmul.f32 %v3787, %v977
        %v3792 = vmul.f32 %v3790, %v977
        %v3793 = vadd.f32 %v3791, 1e-05
        %v3794 = vadd.f32 %v3792, 1e-05
        %v3795 = vrsqrt.pop %v3793
        %v3796 = vrsqrt.pop %v3794
        %v3797 = vmul.f32 %v3781, %v3795
        %v3798 = vmul.f32 %v3782, %v3796
        %v3800 = vlaneseq
        %v3801 = vshrl.u32 %v3800, 7
        %v3802 = vsub.s32 0, %v3801
        %v3803 = vrot.slane %v3770, %v3802
        %v3805 = vmul.f32 %v3797, %v3803
        %v3806 = vmul.f32 %v3798, %v3803
        %v3808 = vlaneseq
        %v3809 = vshrl.u32 %v3808, 7
        %v3810 = vsub.s32 0, %v3809
        %v3811 = vrot.slane %v3772, %v3810
        %v3813 = vadd.f32 %v3805, %v3811
        %v3814 = vadd.f32 %v3806, %v3811
        %s3815 = scalar_lea.vmem %s15, 32
        %v3816 = vld [vmem:[%s3815] sm:$0xff]
        %v3817 = vld [vmem:[%s3815 + $0x8] sm:$0xff]
        %v3818 = vld [vmem:[%s3815 + $0x10] sm:$0xff]
        %v3819 = vld [vmem:[%s3815 + $0x18] sm:$0xff]
        %s3820 = scalar_lea.vmem %s16, 1
        %v3821 = vld [vmem:[%s3820] sm:$0x1]
        %v3823 = vlaneseq
        %v3824 = vshrl.u32 %v3823, 7
        %v3825 = vsub.s32 0, %v3824
        %v3826 = vrot.slane %v3821, %v3825
        %v3829 = vsel %vm970, %v3813, 0
        %v3832 = vsel %vm970, %v3814, 0
        %3834 = vmatprep.subr.mxu0 0.0
        %3835 = vmatpush1.msra.mxu0 0.0
        %3836 = vmatprep.subr.mxu0 0.0
        %3837 = vmatpush1.msra.mxu0 0.0
        %3838 = vmatprep.subr.mxu0 0.0
        %3839 = vmatpush1.msra.mxu0 0.0
        %3840 = vmatprep.subr.mxu0 0.0
        %3841 = vmatpush1.msra.mxu0 0.0
        %3842 = vmatprep.subr.mxu0 0.0
        %3843 = vmatpush1.msra.mxu0 0.0
        %3844 = vmatprep.subr.mxu0 0.0
        %3845 = vmatpush1.msra.mxu0 0.0
        %3846 = vmatprep.subr.mxu0 0.0
        %3847 = vmatpush1.msra.mxu0 0.0
        %3848 = vmatprep.subr.mxu0 0.0
        %3849 = vmatpush1.msra.mxu0 0.0
        %3850 = vmatprep.subr.mxu0 0.0
        %3851 = vmatpush1.msra.mxu0 0.0
        %3852 = vmatprep.subr.mxu0 0.0
        %3853 = vmatpush1.msra.mxu0 0.0
        %3854 = vmatprep.subr.mxu0 0.0
        %3855 = vmatpush1.msra.mxu0 0.0
        %3856 = vmatprep.subr.mxu0 0.0
        %3857 = vmatpush1.msra.mxu0 0.0
        %3858 = vmatprep.subr.mxu0 0.0
        %3859 = vmatpush1.msra.mxu0 %v3819
        %3860 = vmatprep.subr.mxu0 0.0
        %3861 = vmatpush1.msra.mxu0 %v3818
        %3862 = vmatprep.subr.mxu0 0.0
        %3863 = vmatpush1.msra.mxu0 %v3817
        %3864 = vmatprep.subr.mxu0 0.0
        %3865 = vmatpush1.msra.mxu0 %v3816
        %3866 = vmatprep.subr.mxu0 0.0
        %3867 = vmatpush2.msra.mxu0 0.0
        %3868 = vmatprep.subr.mxu0 0.0
        %3869 = vmatpush2.msra.mxu0 0.0
        %3870 = vmatprep.subr.mxu0 0.0
        %3871 = vmatpush2.msra.mxu0 0.0
        %3872 = vmatprep.subr.mxu0 0.0
        %3873 = vmatpush2.msra.mxu0 0.0
        %3874 = vmatprep.subr.mxu0 0.0
        %3875 = vmatpush2.msra.mxu0 0.0
        %3876 = vmatprep.subr.mxu0 0.0
        %3877 = vmatpush2.msra.mxu0 0.0
        %3878 = vmatprep.subr.mxu0 0.0
        %3879 = vmatpush2.msra.mxu0 0.0
        %3880 = vmatprep.subr.mxu0 0.0
        %3881 = vmatpush2.msra.mxu0 0.0
        %3882 = vmatprep.subr.mxu0 0.0
        %3883 = vmatpush2.msra.mxu0 0.0
        %3884 = vmatprep.subr.mxu0 0.0
        %3885 = vmatpush2.msra.mxu0 0.0
        %3886 = vmatprep.subr.mxu0 0.0
        %3887 = vmatpush2.msra.mxu0 0.0
        %3888 = vmatprep.subr.mxu0 0.0
        %3889 = vmatpush2.msra.mxu0 0.0
        %3890 = vmatprep.subr.mxu0 0.0
        %3891 = vmatpush2.msra.mxu0 0.0
        %3892 = vmatprep.subr.mxu0 0.0
        %3893 = vmatpush2.msra.mxu0 0.0
        %3894 = vmatprep.subr.mxu0 0.0
        %3895 = vmatpush2.msra.mxu0 0.0
        %3896 = vmatprep.subr.mxu0 0.0
        %3897 = vmatpush2.msra.mxu0 0.0
        %3898 = vmatprep.mubr.f32.mxu0 0.0
        %3899 = vmatmul.mubr.f32.gmra.mxu0 %v3829
        %v3900 = vpop.f32.mrf.mxu0
        %v3901 = vadd.f32 %v3826, %v3900
        %v3902 = vpop.f32.mrf.mxu0
        %3903 = vmatprep.mubr.f32.mxu0 0.0
        %3904 = vmatmul.mubr.f32.gmra.mxu0 %v3832
        %v3905 = vpop.f32.mrf.mxu0
        %v3906 = vadd.f32 %v3826, %v3905
        %v3907 = vpop.f32.mrf.mxu0
        %3908 = vdwg.mxu0
        %v3909 = vmax.f32 %v3901, 0.0
        %v3910 = vmax.f32 %v3906, 0.0
        %s3911 = scalar_lea.vmem %s17, 128
        %v3912 = vld [vmem:[%s3911] sm:$0xff]
        %v3913 = vld [vmem:[%s3911 + $0x8] sm:$0xff]
        %v3914 = vld [vmem:[%s3911 + $0x10] sm:$0xff]
        %v3915 = vld [vmem:[%s3911 + $0x18] sm:$0xff]
        %v3916 = vld [vmem:[%s3911 + $0x20] sm:$0xff]
        %v3917 = vld [vmem:[%s3911 + $0x28] sm:$0xff]
        %v3918 = vld [vmem:[%s3911 + $0x30] sm:$0xff]
        %v3919 = vld [vmem:[%s3911 + $0x38] sm:$0xff]
        %v3920 = vld [vmem:[%s3911 + $0x40] sm:$0xff]
        %v3921 = vld [vmem:[%s3911 + $0x48] sm:$0xff]
        %v3922 = vld [vmem:[%s3911 + $0x50] sm:$0xff]
        %v3923 = vld [vmem:[%s3911 + $0x58] sm:$0xff]
        %v3924 = vld [vmem:[%s3911 + $0x60] sm:$0xff]
        %v3925 = vld [vmem:[%s3911 + $0x68] sm:$0xff]
        %v3926 = vld [vmem:[%s3911 + $0x70] sm:$0xff]
        %v3927 = vld [vmem:[%s3911 + $0x78] sm:$0xff]
        %s3928 = scalar_lea.vmem %s18, 1
        %v3929 = vld [vmem:[%s3928] sm:$0x1]
        %v3931 = vlaneseq
        %v3932 = vshrl.u32 %v3931, 7
        %v3933 = vsub.s32 0, %v3932
        %v3934 = vrot.slane %v3929, %v3933
        %3936 = vmatprep.subr.mxu0 0.0
        %3937 = vmatpush1.msra.mxu0 %v3927
        %3938 = vmatprep.subr.mxu0 0.0
        %3939 = vmatpush1.msra.mxu0 %v3926
        %3940 = vmatprep.subr.mxu0 0.0
        %3941 = vmatpush1.msra.mxu0 %v3925
        %3942 = vmatprep.subr.mxu0 0.0
        %3943 = vmatpush1.msra.mxu0 %v3924
        %3944 = vmatprep.subr.mxu0 0.0
        %3945 = vmatpush1.msra.mxu0 %v3923
        %3946 = vmatprep.subr.mxu0 0.0
        %3947 = vmatpush1.msra.mxu0 %v3922
        %3948 = vmatprep.subr.mxu0 0.0
        %3949 = vmatpush1.msra.mxu0 %v3921
        %3950 = vmatprep.subr.mxu0 0.0
        %3951 = vmatpush1.msra.mxu0 %v3920
        %3952 = vmatprep.subr.mxu0 0.0
        %3953 = vmatpush1.msra.mxu0 %v3919
        %3954 = vmatprep.subr.mxu0 0.0
        %3955 = vmatpush1.msra.mxu0 %v3918
        %3956 = vmatprep.subr.mxu0 0.0
        %3957 = vmatpush1.msra.mxu0 %v3917
        %3958 = vmatprep.subr.mxu0 0.0
        %3959 = vmatpush1.msra.mxu0 %v3916
        %3960 = vmatprep.subr.mxu0 0.0
        %3961 = vmatpush1.msra.mxu0 %v3915
        %3962 = vmatprep.subr.mxu0 0.0
        %3963 = vmatpush1.msra.mxu0 %v3914
        %3964 = vmatprep.subr.mxu0 0.0
        %3965 = vmatpush1.msra.mxu0 %v3913
        %3966 = vmatprep.subr.mxu0 0.0
        %3967 = vmatpush1.msra.mxu0 %v3912
        %3968 = vmatprep.subr.mxu0 0.0
        %3969 = vmatpush2.msra.mxu0 0.0
        %3970 = vmatprep.subr.mxu0 0.0
        %3971 = vmatpush2.msra.mxu0 0.0
        %3972 = vmatprep.subr.mxu0 0.0
        %3973 = vmatpush2.msra.mxu0 0.0
        %3974 = vmatprep.subr.mxu0 0.0
        %3975 = vmatpush2.msra.mxu0 0.0
        %3976 = vmatprep.subr.mxu0 0.0
        %3977 = vmatpush2.msra.mxu0 0.0
        %3978 = vmatprep.subr.mxu0 0.0
        %3979 = vmatpush2.msra.mxu0 0.0
        %3980 = vmatprep.subr.mxu0 0.0
        %3981 = vmatpush2.msra.mxu0 0.0
        %3982 = vmatprep.subr.mxu0 0.0
        %3983 = vmatpush2.msra.mxu0 0.0
        %3984 = vmatprep.subr.mxu0 0.0
        %3985 = vmatpush2.msra.mxu0 0.0
        %3986 = vmatprep.subr.mxu0 0.0
        %3987 = vmatpush2.msra.mxu0 0.0
        %3988 = vmatprep.subr.mxu0 0.0
        %3989 = vmatpush2.msra.mxu0 0.0
        %3990 = vmatprep.subr.mxu0 0.0
        %3991 = vmatpush2.msra.mxu0 0.0
        %3992 = vmatprep.subr.mxu0 0.0
        %3993 = vmatpush2.msra.mxu0 0.0
        %3994 = vmatprep.subr.mxu0 0.0
        %3995 = vmatpush2.msra.mxu0 0.0
        %3996 = vmatprep.subr.mxu0 0.0
        %3997 = vmatpush2.msra.mxu0 0.0
        %3998 = vmatprep.subr.mxu0 0.0
        %3999 = vmatpush2.msra.mxu0 0.0
        %4000 = vmatprep.mubr.f32.mxu0 0.0
        %4001 = vmatmul.mubr.f32.gmra.mxu0 %v3909
        %v4002 = vpop.f32.mrf.mxu0
        %v4003 = vpop.f32.mrf.mxu0
        %4004 = vmatprep.mubr.f32.mxu0 0.0
        %4005 = vmatmul.mubr.f32.gmra.mxu0 %v3910
        %v4006 = vpop.f32.mrf.mxu0
        %v4007 = vadd.f32 %v3934, %v4006
        %v4008 = vpop.f32.mrf.mxu0
        %4009 = vdwg.mxu0
        %v4010 = vadd.f32 %v3768, %v4007
        %v4011 = vld [vmem:[%s21] sm:$0x1]
        %v4012 = vld [vmem:[%s22] sm:$0x1]
        %v4013 = vsel %vm970, %v4010, 0.0
        %4014 = vadd.xlane.f32.xlu0 %v4013
        %v4015 = vpop.xlane.xlu0 %4014
        %v4016 = vmul.f32 %v4015, %v977
        %v4017 = vsub.f32 %v4010, %v4016
        %v4018 = vmul.f32 %v4017, %v4017
        %v4019 = vsel %vm970, %v4018, 0.0
        %4020 = vadd.xlane.f32.xlu0 %v4019
        %v4021 = vpop.xlane.xlu0 %4020
        %v4022 = vmul.f32 %v4021, %v977
        %v4023 = vadd.f32 %v4022, 1e-05
        %v4024 = vrsqrt.pop %v4023
        %v4025 = vmul.f32 %v4017, %v4024
        %v4027 = vlaneseq
        %v4028 = vshrl.u32 %v4027, 7
        %v4029 = vsub.s32 0, %v4028
        %v4030 = vrot.slane %v4011, %v4029
        %v4032 = vmul.f32 %v4025, %v4030
        %v4034 = vlaneseq
        %v4035 = vshrl.u32 %v4034, 7
        %v4036 = vsub.s32 0, %v4035
        %v4037 = vrot.slane %v4012, %v4036
        %v4039 = vadd.f32 %v4032, %v4037
        %v4040 = vld [vmem:[%s23] sm:$0xff]
        %v4041 = vld [vmem:[%s23 + $0x8] sm:$0xff]
        %v4042 = vld [vmem:[%s23 + $0x10] sm:$0xff]
        %v4043 = vld [vmem:[%s23 + $0x18] sm:$0xff]
        %v4044 = vld [vmem:[%s24] sm:$0x1]
        %v4046 = vlaneseq
        %v4047 = vshrl.u32 %v4046, 7
        %v4048 = vsub.s32 0, %v4047
        %v4049 = vrot.slane %v4044, %v4048
        %v4052 = vsel %vm970, %v4039, 0
        %4054 = vmatprep.subr.mxu0 0.0
        %4055 = vmatpush1.msra.mxu0 0.0
        %4056 = vmatprep.subr.mxu0 0.0
        %4057 = vmatpush1.msra.mxu0 0.0
        %4058 = vmatprep.subr.mxu0 0.0
        %4059 = vmatpush1.msra.mxu0 0.0
        %4060 = vmatprep.subr.mxu0 0.0
        %4061 = vmatpush1.msra.mxu0 0.0
        %4062 = vmatprep.subr.mxu0 0.0
        %4063 = vmatpush1.msra.mxu0 0.0
        %4064 = vmatprep.subr.mxu0 0.0
        %4065 = vmatpush1.msra.mxu0 0.0
        %4066 = vmatprep.subr.mxu0 0.0
        %4067 = vmatpush1.msra.mxu0 0.0
        %4068 = vmatprep.subr.mxu0 0.0
        %4069 = vmatpush1.msra.mxu0 0.0
        %4070 = vmatprep.subr.mxu0 0.0
        %4071 = vmatpush1.msra.mxu0 0.0
        %4072 = vmatprep.subr.mxu0 0.0
        %4073 = vmatpush1.msra.mxu0 0.0
        %4074 = vmatprep.subr.mxu0 0.0
        %4075 = vmatpush1.msra.mxu0 0.0
        %4076 = vmatprep.subr.mxu0 0.0
        %4077 = vmatpush1.msra.mxu0 0.0
        %4078 = vmatprep.subr.mxu0 0.0
        %4079 = vmatpush1.msra.mxu0 %v4043
        %4080 = vmatprep.subr.mxu0 0.0
        %4081 = vmatpush1.msra.mxu0 %v4042
        %4082 = vmatprep.subr.mxu0 0.0
        %4083 = vmatpush1.msra.mxu0 %v4041
        %4084 = vmatprep.subr.mxu0 0.0
        %4085 = vmatpush1.msra.mxu0 %v4040
        %4086 = vmatprep.subr.mxu0 0.0
        %4087 = vmatpush2.msra.mxu0 0.0
        %4088 = vmatprep.subr.mxu0 0.0
        %4089 = vmatpush2.msra.mxu0 0.0
        %4090 = vmatprep.subr.mxu0 0.0
        %4091 = vmatpush2.msra.mxu0 0.0
        %4092 = vmatprep.subr.mxu0 0.0
        %4093 = vmatpush2.msra.mxu0 0.0
        %4094 = vmatprep.subr.mxu0 0.0
        %4095 = vmatpush2.msra.mxu0 0.0
        %4096 = vmatprep.subr.mxu0 0.0
        %4097 = vmatpush2.msra.mxu0 0.0
        %4098 = vmatprep.subr.mxu0 0.0
        %4099 = vmatpush2.msra.mxu0 0.0
        %4100 = vmatprep.subr.mxu0 0.0
        %4101 = vmatpush2.msra.mxu0 0.0
        %4102 = vmatprep.subr.mxu0 0.0
        %4103 = vmatpush2.msra.mxu0 0.0
        %4104 = vmatprep.subr.mxu0 0.0
        %4105 = vmatpush2.msra.mxu0 0.0
        %4106 = vmatprep.subr.mxu0 0.0
        %4107 = vmatpush2.msra.mxu0 0.0
        %4108 = vmatprep.subr.mxu0 0.0
        %4109 = vmatpush2.msra.mxu0 0.0
        %4110 = vmatprep.subr.mxu0 0.0
        %4111 = vmatpush2.msra.mxu0 0.0
        %4112 = vmatprep.subr.mxu0 0.0
        %4113 = vmatpush2.msra.mxu0 0.0
        %4114 = vmatprep.subr.mxu0 0.0
        %4115 = vmatpush2.msra.mxu0 0.0
        %4116 = vmatprep.subr.mxu0 0.0
        %4117 = vmatpush2.msra.mxu0 0.0
        %4118 = vmatprep.mubr.f32.mxu0 0.0
        %4119 = vmatmul.mubr.f32.gmra.mxu0 %v4052
        %v4120 = vpop.f32.mrf.mxu0
        %v4121 = vadd.f32 %v4049, %v4120
        %v4122 = vpop.f32.mrf.mxu0
        %4123 = vdwg.mxu0
        %4124 = vst.msk [vmem:[%s768] sm:$0xff] %vm873, %v4121
        %s4125 = sand.u32 %s582, 1
        %s4126 = scalar_lea.sflag [#allocation3], %s4125
        %s4127 = sand.u32 %s582, 1
        %s4128 = smul.addr %s4127, 8
        %s4129 = scalar_lea.vmem [#allocation2], %s4128
        // Predicated region
        $region121: #{translate_forward.1} parent=119 // pred_check
          %p4130 = pneg %p592
        $region122: #{translate_forward.1} parent=119 // pred_check_branch
          %4132 = sbr.rel (%p4130) target = $region124
        $region123: #{translate_forward.1} parent=119 // pred_region
          %s4134 = ssub.s32 128, 128
          %4135 = vsyncadd %s4126, %s4134
          %s4136 = smul.addr %s39, 128
          %s4137 = scalar_lea.hbm %s25, %s4136
          %s4139 = sshll.u32 %s4129, 4
          %s4140 = int_to_ptr.vmem [resolvable:$true] %s4139
          %4142 = dma.vmem_to_hbm [thread:$0]  %s4140, 128, %s4137, %s4126
        $region124: #{translate_forward.1} parent=119 // pred_fallthru
          _
      $region120: #{translate_forward.1} parent=5 // pred_fallthru
        _
      %p4143 = scmp.le.s32.totalorder 2, %s34
      // Predicated region
      $region125: #{translate_forward.1} parent=5 // pred_check
        %p4144 = pneg %p4143
      $region126: #{translate_forward.1} parent=5 // pred_check_branch
        %4146 = sbr.rel (%p4144) target = $region128
      $region127: #{translate_forward.1} parent=5 // pred_region
        %s4147 = ssub.s32 %s34, 2
        // Predicated region
        $region129: #{translate_forward.1} parent=127 // pred_check
          %p4148 = pneg %p598
        $region130: #{translate_forward.1} parent=127 // pred_check_branch
          %4150 = sbr.rel (%p4148) target = $region132
        $region131: #{translate_forward.1} parent=127 // pred_region
          %s4151 = sand.u32 %s583, 1
          %s4152 = scalar_lea.sflag [#allocation3], %s4151
          %s4153 = sand.u32 %s583, 1
          %s4154 = smul.addr %s4153, 8
          %s4155 = scalar_lea.vmem [#allocation2], %s4154
          %4156 = dma.done %s4152, 128
        $region132: #{translate_forward.1} parent=127 // pred_fallthru
          _
      $region128: #{translate_forward.1} parent=5 // pred_fallthru
        _
    $region6: #{translate_forward.1} parent=1 // loop_footer
      %s38 = sadd.s32 1, %s34
    $region7: #{translate_forward.1} parent=1 // loop_footer_branch
      %33 = sbr.rel target = $region3
    $region8: #{translate_forward.1} parent=1 // loop_exit
      _
    %4157 = vsyncpa [#allocation3], 1
    %s4158 = scalar_lea.sflag [#allocation3], 1
    %4159 = vsyncpa %s4158, 1

</llo_original>
